<compile_context>
chip_gen: v7x
topology: tpu7x:2x2x1
jax: 0.10.0
libtpu: 0.0.40
codegen_flags: <defaults>
</compile_context>

<pallas_src>
import math
import functools

import numpy as np
import jax
import jax.numpy as jnp
from jax.experimental import pallas as pl
from jax.experimental.pallas import tpu as pltpu

# ----------------------------- model config ---------------------------------
B_SZ = 2                       # batch
IMG_C = 3                      # image channels
IMG_H = IMG_W = 16
PATCH = 8
GRID_H, GRID_W = IMG_H // PATCH, IMG_W // PATCH
NUM_PATCHES = GRID_H * GRID_W              # 4
PATCH_DIM = IMG_C * PATCH * PATCH          # 192
WIDTH = 32                                 # transformer width
NUM_HEADS = 4
HEAD_DIM = WIDTH // NUM_HEADS              # 8
TXT_LEN = 8
EXTRACT_LAYER = [0, 1, 2]
NUM_LAYERS = max(EXTRACT_LAYER) + 1
CE_LOC = (1,)
CE_KEEP_RATE = 0.5
LN_EPS = 1e-5

# derived static layout constants
SEQ = 1 + NUM_PATCHES + TXT_LEN            # 13 real tokens per batch element
LP = 16                                    # padded per-batch sequence (sublane aligned)
BL = B_SZ * LP                             # 32 stacked token rows
NL = NUM_HEADS * BL                        # 128 score lanes: (head, batch, key)
SLAB_COLS = 128                            # lane-dense parameter slab width
NEG_BIG = -1e9


# ------------------------------ in-kernel helpers ----------------------------
def _layer_norm(x, g, b):
    mu = jnp.mean(x, axis=-1, keepdims=True)
    var = jnp.mean(jnp.square(x - mu), axis=-1, keepdims=True)
    return (x - mu) * jax.lax.rsqrt(var + LN_EPS) * g + b


# --------------------------- packed-parameter layout -------------------------
def _param_layout():
    """Static (offset, rows, cols) layout of every tensor in the 128-lane slab."""
    entries = [
        ('conv_w', PATCH_DIM, WIDTH),
        ('cls', 1, WIDTH),
        ('pos', 1 + NUM_PATCHES, WIDTH),
        ('ln_pre_g', 1, WIDTH),
        ('ln_pre_b', 1, WIDTH),
        ('attn_bias0', BL, NL),
        ('head_mask', NL, WIDTH),
        ('block_ones', NL, NL),
        ('row_sel', B_SZ, BL),
        ('head_avg', NL, BL),
        ('ce_col_bias', B_SZ, BL),
        ('col_idx', B_SZ, BL),
        ('src_mask', 1, BL),
    ]
    for l in range(NUM_LAYERS):
        entries += [
            (f'ln1_g_{l}', 1, WIDTH), (f'ln1_b_{l}', 1, WIDTH),
            (f'w_in_{l}', WIDTH, 3 * WIDTH), (f'b_in_{l}', 1, 3 * WIDTH),
            (f'w_out_{l}', WIDTH, WIDTH), (f'b_out_{l}', 1, WIDTH),
            (f'ln2_g_{l}', 1, WIDTH), (f'ln2_b_{l}', 1, WIDTH),
            (f'fc1_w_{l}', WIDTH, 4 * WIDTH), (f'fc1_b_{l}', 1, 4 * WIDTH),
            (f'fc2_w_{l}', 4 * WIDTH, WIDTH), (f'fc2_b_{l}', 1, WIDTH),
        ]
    layout, off = {}, 0
    for name, r, c in entries:
        assert c <= SLAB_COLS
        layout[name] = (off, r, c)
        off += -(-r // 8) * 8                      # 8-aligned sublane offsets
    total_rows = -(-off // 8) * 8
    return layout, total_rows


def _static_tensors():
    """Constant mask / selection matrices baked into the parameter slab."""
    lane = np.arange(NL)                       # j = head*BL + batch*LP + key
    head_of_lane = lane // BL
    flat_of_lane = lane % BL                   # batch*LP + key
    tok_of_lane = flat_of_lane % LP
    batch_of_lane = flat_of_lane // LP

    row = np.arange(BL)
    batch_of_row = row // LP

    col = np.arange(BL)
    tok_of_col = col % LP
    batch_of_col = col // LP
    is_src_col = (tok_of_col >= 1) & (tok_of_col <= NUM_PATCHES)

    # per-head block mask for replicated K / V rows: (NL, WIDTH)
    head_mask = (np.arange(WIDTH)[None, :] // HEAD_DIM
                 == head_of_lane[:, None]).astype(np.float32)

    # additive score bias: 0 for same-batch real keys, -1e9 otherwise: (BL, NL)
    same_batch = batch_of_row[:, None] == batch_of_lane[None, :]
    key_real = tok_of_lane[None, :] < SEQ
    attn_bias0 = np.where(same_batch & key_real, 0.0, NEG_BIG).astype(np.float32)

    # block-diagonal ones over (head, batch) groups of 16 lanes: (NL, NL)
    block_ones = (lane[:, None] // LP == lane[None, :] // LP).astype(np.float32)

    # mean over the 8 text-query rows of each batch element: (B, BL)
    row_sel = np.zeros((B_SZ, BL), np.float32)
    for b in range(B_SZ):
        row_sel[b, b * LP + 1 + NUM_PATCHES: b * LP + SEQ] = 1.0 / TXT_LEN

    # average the 4 head copies of each (batch, key) lane back to (B, BL)
    head_avg = ((col[None, :] == flat_of_lane[:, None]).astype(np.float32)
                / NUM_HEADS)

    # restrict the CE top-k of row b to its own source-token columns: (B, BL)
    ce_col_bias = np.where(
        (batch_of_col[None, :] == np.arange(B_SZ)[:, None]) & is_src_col[None, :],
        0.0, -1e30).astype(np.float32)

    col_idx = np.tile(col.astype(np.float32)[None, :], (B_SZ, 1))     # (B, BL)
    src_mask = is_src_col.astype(np.float32)[None, :]                 # (1, BL)

    return {
        'attn_bias0': attn_bias0, 'head_mask': head_mask, 'block_ones': block_ones,
        'row_sel': row_sel, 'head_avg': head_avg, 'ce_col_bias': ce_col_bias,
        'col_idx': col_idx, 'src_mask': src_mask,
    }


# ------------------------------ fused encoder kernel -------------------------
def _encoder_kernel(slab_ref, patches_ref, text_ref, o_ref, *,
                    layout, ce_keep_rate, ce_loc):
    f32 = jnp.float32

    def param(name):
        off, r, c = layout[name]
        return slab_ref[off:off + r, 0:c]          # static slice: no extra DMA

    conv_w = param('conv_w')                       # (192, 32)
    cls_emb = param('cls')                         # (1, 32)
    pos = param('pos')                             # (5, 32)
    lnp_g, lnp_b = param('ln_pre_g'), param('ln_pre_b')
    attn_bias = param('attn_bias0')                # (32, 128)
    head_mask = param('head_mask')                 # (128, 32)
    block_ones = param('block_ones')               # (128, 128)

    # ---- patch embedding (conv1 as matmul, both batch elements at once) ----
    tok = jnp.dot(patches_ref[...], conv_w, preferred_element_type=f32)  # (B*Np, 32)

    # ---- assemble the fixed (B*LP, WIDTH) = (32, 32) token slab -------------
    pad = jnp.zeros((LP - SEQ, WIDTH), f32)
    parts = []
    for b in range(B_SZ):
        img = jnp.concatenate(
            [cls_emb, tok[b * NUM_PATCHES:(b + 1) * NUM_PATCHES, :]], axis=0) + pos
        img = _layer_norm(img, lnp_g, lnp_b)       # ln_pre: image tokens only
        txt = text_ref[b * TXT_LEN:(b + 1) * TXT_LEN, :]
        parts += [img, txt, pad]
    x = jnp.concatenate(parts, axis=0)             # (32, 32)

    cur_src = NUM_PATCHES                          # surviving source tokens (static)

    for l in range(NUM_LAYERS):
        ln1_g, ln1_b = param(f'ln1_g_{l}'), param(f'ln1_b_{l}')
        w_in, b_in = param(f'w_in_{l}'), param(f'b_in_{l}')
        w_out, b_out = param(f'w_out_{l}'), param(f'b_out_{l}')
        ln2_g, ln2_b = param(f'ln2_g_{l}'), param(f'ln2_b_{l}')
        fc1_w, fc1_b = param(f'fc1_w_{l}'), param(f'fc1_b_{l}')
        fc2_w, fc2_b = param(f'fc2_w_{l}'), param(f'fc2_b_{l}')

        # ------- attention: all heads x both batch elements, 2 big matmuls ---
        h = _layer_norm(x, ln1_g, ln1_b)
        qkv = jnp.dot(h, w_in, preferred_element_type=f32) + b_in        # (32, 96)
        q = qkv[:, 0:WIDTH]                        # 1/sqrt(d) already folded in
        k = qkv[:, WIDTH:2 * WIDTH]
        v = qkv[:, 2 * WIDTH:3 * WIDTH]

        kr = jnp.concatenate([k] * NUM_HEADS, axis=0) * head_mask        # (128, 32)
        vr = jnp.concatenate([v] * NUM_HEADS, axis=0) * head_mask        # (128, 32)

        s = jax.lax.dot_general(q, kr, (((1,), (1,)), ((), ())),
                                preferred_element_type=f32)              # (32, 128)
        s = s + attn_bias                          # cross-batch / padding / CE mask
        # shared per-row max: softmax is shift invariant within each head block
        s = s - jnp.max(s, axis=-1, keepdims=True)
        e = jnp.exp(s)                             # masked entries underflow to 0
        denom = jnp.dot(e, block_ones, preferred_element_type=f32)       # per-block sums
        p = jnp.where(denom > 0.0, e / denom, 0.0)                       # exact softmax

        ao = jnp.dot(p, vr, preferred_element_type=f32)                  # (32, 32)
        x = x + jnp.dot(ao, w_out, preferred_element_type=f32) + b_out

        # ------- candidate elimination (mask form; identical cls output) -----
        if ce_keep_rate < 1.0 and l in ce_loc:
            keep_n = math.ceil(ce_keep_rate * cur_src)
            if keep_n < cur_src:
                row_sel = param('row_sel')          # (B, 32)
                head_avg = param('head_avg')        # (128, 32)
                ce_col_bias = param('ce_col_bias')  # (B, 32)
                col_idx = param('col_idx')          # (B, 32)
                src_mask = param('src_mask')        # (1, 32)

                # mean over text queries, then over heads -> (B, 32) CE scores
                tm = jnp.dot(row_sel, p, preferred_element_type=f32)     # (B, 128)
                sc = jnp.dot(tm, head_avg, preferred_element_type=f32) + ce_col_bias

                keep = jnp.zeros_like(sc)
                cur = sc
                for _ in range(keep_n):             # iterative top-k (lowest idx on ties)
                    m = jnp.max(cur, axis=-1, keepdims=True)
                    cand = jnp.where(cur >= m, col_idx, float(BL))
                    pick = jnp.min(cand, axis=-1, keepdims=True)
                    onehot = (col_idx == pick).astype(f32)
                    keep = keep + onehot
                    cur = jnp.where(onehot > 0.0, -jnp.inf, cur)

                keep_any = jnp.sum(keep, axis=0, keepdims=True)          # (1, 32)
                drop = src_mask * (1.0 - keep_any)                       # eliminated tokens
                delta = jnp.concatenate([drop * NEG_BIG] * NUM_HEADS, axis=1)  # (1, 128)
                attn_bias = attn_bias + delta       # mask them as keys from now on
                cur_src = keep_n

        # ------------------------------ MLP (QuickGELU) ----------------------
        h2 = _layer_norm(x, ln2_g, ln2_b)
        z = jnp.dot(h2, fc1_w, preferred_element_type=f32) + fc1_b       # (32, 128)
        z = z * jax.nn.sigmoid(1.702 * z)
        x = x + jnp.dot(z, fc2_w, preferred_element_type=f32) + fc2_b

    # cls token of each batch element -> (B, WIDTH)
    o_ref[...] = jnp.concatenate(
        [x[b * LP:b * LP + 1, :] for b in range(B_SZ)], axis=0)


# ------------------------------ forward wrapper -------------------------------
@functools.partial(jax.jit, static_argnums=(3, 4))
def encoder_forward(params, x_img, text_tensors, ce_keep_rate, ce_loc):
    assert x_img.shape == (B_SZ, IMG_C, IMG_H, IMG_W)
    assert text_tensors.shape == (B_SZ, TXT_LEN, WIDTH)

    # im2col (pure layout; conv kernel == stride == PATCH, no bias)
    patches = x_img.reshape(B_SZ, IMG_C, GRID_H, PATCH, GRID_W, PATCH)
    patches = patches.transpose(0, 2, 4, 1, 3, 5).reshape(
        B_SZ * NUM_PATCHES, PATCH_DIM)
    text = text_tensors.reshape(B_SZ * TXT_LEN, WIDTH)

    layout, total_rows = _param_layout()
    kern = functools.partial(_encoder_kernel, layout=layout,
                             ce_keep_rate=ce_keep_rate, ce_loc=tuple(ce_loc))

    out = pl.pallas_call(
        kern,
        out_shape=jax.ShapeDtypeStruct((B_SZ, WIDTH), jnp.float32),
        grid=(1,),
        in_specs=[
            pl.BlockSpec((total_rows, SLAB_COLS), lambda i: (0, 0)),   # packed params
            pl.BlockSpec((B_SZ * NUM_PATCHES, PATCH_DIM), lambda i: (0, 0)),
            pl.BlockSpec((B_SZ * TXT_LEN, WIDTH), lambda i: (0, 0)),
        ],
        out_specs=pl.BlockSpec((B_SZ, WIDTH), lambda i: (0, 0)),
        compiler_params=pltpu.CompilerParams(
            dimension_semantics=("arbitrary",)),
    )(params['slab'], patches, text)
    return out                                                          # (B, WIDTH)


# ------------------------------- parameters ----------------------------------
def build_params(key):
    layout, total_rows = _param_layout()
    ks = iter(jax.random.split(key, 32))

    def rnd(shape, scale=0.02):
        return jax.random.normal(next(ks), shape, jnp.float32) * scale

    qscale = 1.0 / math.sqrt(HEAD_DIM)
    tensors = {
        'conv_w': rnd((PATCH_DIM, WIDTH)),
        'cls': rnd((1, WIDTH)),
        'pos': rnd((1 + NUM_PATCHES, WIDTH)),
        'ln_pre_g': jnp.ones((1, WIDTH), jnp.float32),
        'ln_pre_b': jnp.zeros((1, WIDTH), jnp.float32),
    }
    for l in range(NUM_LAYERS):
        w_in = rnd((WIDTH, 3 * WIDTH))
        b_in = rnd((1, 3 * WIDTH), 0.01)
        # fold the attention scale into the Q projection (weights and bias)
        w_in = w_in.at[:, :WIDTH].multiply(qscale)
        b_in = b_in.at[:, :WIDTH].multiply(qscale)
        tensors.update({
            f'ln1_g_{l}': jnp.ones((1, WIDTH), jnp.float32),
            f'ln1_b_{l}': jnp.zeros((1, WIDTH), jnp.float32),
            f'w_in_{l}': w_in,
            f'b_in_{l}': b_in,
            f'w_out_{l}': rnd((WIDTH, WIDTH)),
            f'b_out_{l}': jnp.zeros((1, WIDTH), jnp.float32),
            f'ln2_g_{l}': jnp.ones((1, WIDTH), jnp.float32),
            f'ln2_b_{l}': jnp.zeros((1, WIDTH), jnp.float32),
            f'fc1_w_{l}': rnd((WIDTH, 4 * WIDTH)),
            f'fc1_b_{l}': jnp.zeros((1, 4 * WIDTH), jnp.float32),
            f'fc2_w_{l}': rnd((4 * WIDTH, WIDTH)),
            f'fc2_b_{l}': jnp.zeros((1, WIDTH), jnp.float32),
        })
    for name, arr in _static_tensors().items():
        tensors[name] = jnp.asarray(arr, jnp.float32)

    # pack everything into one lane-dense (rows, 128) slab -> a single DMA
    slab = jnp.zeros((total_rows, SLAB_COLS), jnp.float32)
    for name, (off, r, c) in layout.items():
        a = tensors[name]
        assert a.shape == (r, c), (name, a.shape, (r, c))
        slab = slab.at[off:off + r, 0:c].set(a.astype(jnp.float32))
    return {'slab': slab}


# ---------------------------------- main --------------------------------------
if __name__ == "__main__":
    key = jax.random.PRNGKey(0)
    k_param, k_img, k_txt = jax.random.split(key, 3)

    params = build_params(k_param)
    x_img = jax.random.normal(k_img, (B_SZ, IMG_C, IMG_H, IMG_W), jnp.float32)
    text_tensors = jax.random.normal(k_txt, (B_SZ, TXT_LEN, WIDTH), jnp.float32)

    cls_token = encoder_forward(params, x_img, text_tensors,
                                CE_KEEP_RATE, CE_LOC)
    cls_token = jax.block_until_ready(cls_token)

    assert cls_token.shape == (B_SZ, WIDTH), cls_token.shape
    assert bool(jnp.all(jnp.isfinite(cls_token)))
    print("KERNEL_OK")
</pallas_src>

<mosaic_0001>
module attributes {stable_mosaic.version = 11 : i64} {
  func.func @_encoder_kernel(%arg0: i32, %arg1: memref<1536x128xf32, #tpu.memory_space<vmem>>, %arg2: memref<8x192xf32, #tpu.memory_space<vmem>>, %arg3: memref<16x32xf32, #tpu.memory_space<vmem>>, %arg4: memref<2x32xf32, #tpu.memory_space<vmem>>) attributes {dimension_semantics = [#tpu.dimension_semantics<arbitrary>], iteration_bounds = array<i64: 1>, scalar_prefetch = 0 : i64, scratch_operands = 0 : i64, tpu.core_type = #tpu.core_type<tc>, window_params = [{pipeline_mode = #tpu.pipeline_mode<synchronous>, transform_indices = @transform_0, window_bounds = array<i64: 1536, 128>}, {pipeline_mode = #tpu.pipeline_mode<synchronous>, transform_indices = @transform_1, window_bounds = array<i64: 8, 192>}, {pipeline_mode = #tpu.pipeline_mode<synchronous>, transform_indices = @transform_2, window_bounds = array<i64: 16, 32>}, {pipeline_mode = #tpu.pipeline_mode<synchronous>, transform_indices = @transform_3, window_bounds = array<i64: 2, 32>}]} {
    %c0 = arith.constant 0 : index
    %c0_0 = arith.constant 0 : index
    %0 = vector.load %arg1[%c0, %c0_0] : memref<1536x128xf32, #tpu.memory_space<vmem>>, vector<192x32xf32>
    %c192 = arith.constant 192 : index
    %c0_1 = arith.constant 0 : index
    %1 = vector.load %arg1[%c192, %c0_1] : memref<1536x128xf32, #tpu.memory_space<vmem>>, vector<1x32xf32>
    %c200 = arith.constant 200 : index
    %c0_2 = arith.constant 0 : index
    %2 = vector.load %arg1[%c200, %c0_2] : memref<1536x128xf32, #tpu.memory_space<vmem>>, vector<5x32xf32>
    %c208 = arith.constant 208 : index
    %c0_3 = arith.constant 0 : index
    %3 = vector.load %arg1[%c208, %c0_3] : memref<1536x128xf32, #tpu.memory_space<vmem>>, vector<1x32xf32>
    %c216 = arith.constant 216 : index
    %c0_4 = arith.constant 0 : index
    %4 = vector.load %arg1[%c216, %c0_4] : memref<1536x128xf32, #tpu.memory_space<vmem>>, vector<1x32xf32>
    %c224 = arith.constant 224 : index
    %c0_5 = arith.constant 0 : index
    %5 = vector.load %arg1[%c224, %c0_5] : memref<1536x128xf32, #tpu.memory_space<vmem>>, vector<32x128xf32>
    %c256 = arith.constant 256 : index
    %c0_6 = arith.constant 0 : index
    %6 = vector.load %arg1[%c256, %c0_6] : memref<1536x128xf32, #tpu.memory_space<vmem>>, vector<128x32xf32>
    %c384 = arith.constant 384 : index
    %c0_7 = arith.constant 0 : index
    %7 = vector.load %arg1[%c384, %c0_7] : memref<1536x128xf32, #tpu.memory_space<vmem>>, vector<128x128xf32>
    %c0_8 = arith.constant 0 : index
    %c0_9 = arith.constant 0 : index
    %8 = vector.load %arg2[%c0_8, %c0_9] : memref<8x192xf32, #tpu.memory_space<vmem>>, vector<8x192xf32>
    %cst = arith.constant dense<0.000000e+00> : vector<8x32xf32>
    %9 = tpu.matmul %8, %0, %cst {dimension_numbers = #tpu.dot_dimension_numbers<[1], [0], [0], [1], [0, 0, 1, 1], [], []>} : vector<8x192xf32>, vector<192x32xf32>, vector<8x32xf32> -> vector<8x32xf32>
    %cst_10 = arith.constant 0.000000e+00 : f32
    %10 = vector.broadcast %cst_10 : f32 to vector<3x32xf32>
    %11 = vector.extract_strided_slice %9 {offsets = [0, 0], sizes = [4, 32], strides = [1, 1]} : vector<8x32xf32> to vector<4x32xf32>
    %12 = tpu.concatenate %1, %11 in 0 : vector<1x32xf32>, vector<4x32xf32> -> vector<5x32xf32>
    %13 = arith.addf %12, %2 : vector<5x32xf32>
    %cst_11 = arith.constant dense<0.000000e+00> : vector<5xf32>
    %14 = vector.multi_reduction <add>, %13, %cst_11 [1] : vector<5x32xf32> to vector<5xf32>
    %15 = vector.shape_cast %14 : vector<5xf32> to vector<5x1xf32>
    %cst_12 = arith.constant 3.200000e+01 : f32
    %16 = vector.broadcast %cst_12 : f32 to vector<5x1xf32>
    %17 = arith.divf %15, %16 : vector<5x1xf32>
    %18 = vector.broadcast %17 : vector<5x1xf32> to vector<5x32xf32>
    %19 = arith.subf %13, %18 : vector<5x32xf32>
    %20 = arith.mulf %19, %19 : vector<5x32xf32>
    %cst_13 = arith.constant dense<0.000000e+00> : vector<5xf32>
    %21 = vector.multi_reduction <add>, %20, %cst_13 [1] : vector<5x32xf32> to vector<5xf32>
    %22 = vector.shape_cast %21 : vector<5xf32> to vector<5x1xf32>
    %cst_14 = arith.constant 3.200000e+01 : f32
    %23 = vector.broadcast %cst_14 : f32 to vector<5x1xf32>
    %24 = arith.divf %22, %23 : vector<5x1xf32>
    %25 = vector.broadcast %17 : vector<5x1xf32> to vector<5x32xf32>
    %26 = arith.subf %13, %25 : vector<5x32xf32>
    %cst_15 = arith.constant 9.99999974E-6 : f32
    %27 = vector.broadcast %cst_15 : f32 to vector<5x1xf32>
    %28 = arith.addf %24, %27 : vector<5x1xf32>
    %29 = math.rsqrt %28 : vector<5x1xf32>
    %30 = vector.broadcast %29 : vector<5x1xf32> to vector<5x32xf32>
    %31 = arith.mulf %26, %30 : vector<5x32xf32>
    %32 = vector.broadcast %3 : vector<1x32xf32> to vector<5x32xf32>
    %33 = arith.mulf %31, %32 : vector<5x32xf32>
    %34 = vector.broadcast %4 : vector<1x32xf32> to vector<5x32xf32>
    %35 = arith.addf %33, %34 : vector<5x32xf32>
    %c0_16 = arith.constant 0 : index
    %c0_17 = arith.constant 0 : index
    %36 = vector.load %arg3[%c0_16, %c0_17] : memref<16x32xf32, #tpu.memory_space<vmem>>, vector<8x32xf32>
    %37 = vector.extract_strided_slice %9 {offsets = [4, 0], sizes = [4, 32], strides = [1, 1]} : vector<8x32xf32> to vector<4x32xf32>
    %38 = tpu.concatenate %1, %37 in 0 : vector<1x32xf32>, vector<4x32xf32> -> vector<5x32xf32>
    %39 = arith.addf %38, %2 : vector<5x32xf32>
    %cst_18 = arith.constant dense<0.000000e+00> : vector<5xf32>
    %40 = vector.multi_reduction <add>, %39, %cst_18 [1] : vector<5x32xf32> to vector<5xf32>
    %41 = vector.shape_cast %40 : vector<5xf32> to vector<5x1xf32>
    %cst_19 = arith.constant 3.200000e+01 : f32
    %42 = vector.broadcast %cst_19 : f32 to vector<5x1xf32>
    %43 = arith.divf %41, %42 : vector<5x1xf32>
    %44 = vector.broadcast %43 : vector<5x1xf32> to vector<5x32xf32>
    %45 = arith.subf %39, %44 : vector<5x32xf32>
    %46 = arith.mulf %45, %45 : vector<5x32xf32>
    %cst_20 = arith.constant dense<0.000000e+00> : vector<5xf32>
    %47 = vector.multi_reduction <add>, %46, %cst_20 [1] : vector<5x32xf32> to vector<5xf32>
    %48 = vector.shape_cast %47 : vector<5xf32> to vector<5x1xf32>
    %cst_21 = arith.constant 3.200000e+01 : f32
    %49 = vector.broadcast %cst_21 : f32 to vector<5x1xf32>
    %50 = arith.divf %48, %49 : vector<5x1xf32>
    %51 = vector.broadcast %43 : vector<5x1xf32> to vector<5x32xf32>
    %52 = arith.subf %39, %51 : vector<5x32xf32>
    %cst_22 = arith.constant 9.99999974E-6 : f32
    %53 = vector.broadcast %cst_22 : f32 to vector<5x1xf32>
    %54 = arith.addf %50, %53 : vector<5x1xf32>
    %55 = math.rsqrt %54 : vector<5x1xf32>
    %56 = vector.broadcast %55 : vector<5x1xf32> to vector<5x32xf32>
    %57 = arith.mulf %52, %56 : vector<5x32xf32>
    %58 = vector.broadcast %3 : vector<1x32xf32> to vector<5x32xf32>
    %59 = arith.mulf %57, %58 : vector<5x32xf32>
    %60 = vector.broadcast %4 : vector<1x32xf32> to vector<5x32xf32>
    %61 = arith.addf %59, %60 : vector<5x32xf32>
    %c8 = arith.constant 8 : index
    %c0_23 = arith.constant 0 : index
    %62 = vector.load %arg3[%c8, %c0_23] : memref<16x32xf32, #tpu.memory_space<vmem>>, vector<8x32xf32>
    %63 = tpu.concatenate %35, %36, %10, %61, %62, %10 in 0 : vector<5x32xf32>, vector<8x32xf32>, vector<3x32xf32>, vector<5x32xf32>, vector<8x32xf32>, vector<3x32xf32> -> vector<32x32xf32>
    %c672 = arith.constant 672 : index
    %c0_24 = arith.constant 0 : index
    %64 = vector.load %arg1[%c672, %c0_24] : memref<1536x128xf32, #tpu.memory_space<vmem>>, vector<1x32xf32>
    %c680 = arith.constant 680 : index
    %c0_25 = arith.constant 0 : index
    %65 = vector.load %arg1[%c680, %c0_25] : memref<1536x128xf32, #tpu.memory_space<vmem>>, vector<1x32xf32>
    %c688 = arith.constant 688 : index
    %c0_26 = arith.constant 0 : index
    %66 = vector.load %arg1[%c688, %c0_26] : memref<1536x128xf32, #tpu.memory_space<vmem>>, vector<32x96xf32>
    %c720 = arith.constant 720 : index
    %c0_27 = arith.constant 0 : index
    %67 = vector.load %arg1[%c720, %c0_27] : memref<1536x128xf32, #tpu.memory_space<vmem>>, vector<1x96xf32>
    %c728 = arith.constant 728 : index
    %c0_28 = arith.constant 0 : index
    %68 = vector.load %arg1[%c728, %c0_28] : memref<1536x128xf32, #tpu.memory_space<vmem>>, vector<32x32xf32>
    %c760 = arith.constant 760 : index
    %c0_29 = arith.constant 0 : index
    %69 = vector.load %arg1[%c760, %c0_29] : memref<1536x128xf32, #tpu.memory_space<vmem>>, vector<1x32xf32>
    %c768 = arith.constant 768 : index
    %c0_30 = arith.constant 0 : index
    %70 = vector.load %arg1[%c768, %c0_30] : memref<1536x128xf32, #tpu.memory_space<vmem>>, vector<1x32xf32>
    %c776 = arith.constant 776 : index
    %c0_31 = arith.constant 0 : index
    %71 = vector.load %arg1[%c776, %c0_31] : memref<1536x128xf32, #tpu.memory_space<vmem>>, vector<1x32xf32>
    %c784 = arith.constant 784 : index
    %c0_32 = arith.constant 0 : index
    %72 = vector.load %arg1[%c784, %c0_32] : memref<1536x128xf32, #tpu.memory_space<vmem>>, vector<32x128xf32>
    %c816 = arith.constant 816 : index
    %c0_33 = arith.constant 0 : index
    %73 = vector.load %arg1[%c816, %c0_33] : memref<1536x128xf32, #tpu.memory_space<vmem>>, vector<1x128xf32>
    %c824 = arith.constant 824 : index
    %c0_34 = arith.constant 0 : index
    %74 = vector.load %arg1[%c824, %c0_34] : memref<1536x128xf32, #tpu.memory_space<vmem>>, vector<128x32xf32>
    %c952 = arith.constant 952 : index
    %c0_35 = arith.constant 0 : index
    %75 = vector.load %arg1[%c952, %c0_35] : memref<1536x128xf32, #tpu.memory_space<vmem>>, vector<1x32xf32>
    %cst_36 = arith.constant dense<0.000000e+00> : vector<32xf32>
    %76 = vector.multi_reduction <add>, %63, %cst_36 [1] : vector<32x32xf32> to vector<32xf32>
    %77 = vector.shape_cast %76 : vector<32xf32> to vector<32x1xf32>
    %cst_37 = arith.constant 3.200000e+01 : f32
    %78 = vector.broadcast %cst_37 : f32 to vector<32x1xf32>
    %79 = arith.divf %77, %78 : vector<32x1xf32>
    %80 = vector.broadcast %79 : vector<32x1xf32> to vector<32x32xf32>
    %81 = arith.subf %63, %80 : vector<32x32xf32>
    %82 = arith.mulf %81, %81 : vector<32x32xf32>
    %cst_38 = arith.constant dense<0.000000e+00> : vector<32xf32>
    %83 = vector.multi_reduction <add>, %82, %cst_38 [1] : vector<32x32xf32> to vector<32xf32>
    %84 = vector.shape_cast %83 : vector<32xf32> to vector<32x1xf32>
    %cst_39 = arith.constant 3.200000e+01 : f32
    %85 = vector.broadcast %cst_39 : f32 to vector<32x1xf32>
    %86 = arith.divf %84, %85 : vector<32x1xf32>
    %87 = vector.broadcast %79 : vector<32x1xf32> to vector<32x32xf32>
    %88 = arith.subf %63, %87 : vector<32x32xf32>
    %cst_40 = arith.constant 9.99999974E-6 : f32
    %89 = vector.broadcast %cst_40 : f32 to vector<32x1xf32>
    %90 = arith.addf %86, %89 : vector<32x1xf32>
    %91 = math.rsqrt %90 : vector<32x1xf32>
    %92 = vector.broadcast %91 : vector<32x1xf32> to vector<32x32xf32>
    %93 = arith.mulf %88, %92 : vector<32x32xf32>
    %94 = vector.broadcast %64 : vector<1x32xf32> to vector<32x32xf32>
    %95 = arith.mulf %93, %94 : vector<32x32xf32>
    %96 = vector.broadcast %65 : vector<1x32xf32> to vector<32x32xf32>
    %97 = arith.addf %95, %96 : vector<32x32xf32>
    %cst_41 = arith.constant dense<0.000000e+00> : vector<32x96xf32>
    %98 = tpu.matmul %97, %66, %cst_41 {dimension_numbers = #tpu.dot_dimension_numbers<[1], [0], [0], [1], [0, 0, 1, 1], [], []>} : vector<32x32xf32>, vector<32x96xf32>, vector<32x96xf32> -> vector<32x96xf32>
    %99 = vector.broadcast %67 : vector<1x96xf32> to vector<32x96xf32>
    %100 = arith.addf %98, %99 : vector<32x96xf32>
    %101 = vector.extract_strided_slice %100 {offsets = [0, 0], sizes = [32, 32], strides = [1, 1]} : vector<32x96xf32> to vector<32x32xf32>
    %102 = vector.extract_strided_slice %100 {offsets = [0, 32], sizes = [32, 32], strides = [1, 1]} : vector<32x96xf32> to vector<32x32xf32>
    %103 = vector.extract_strided_slice %100 {offsets = [0, 64], sizes = [32, 32], strides = [1, 1]} : vector<32x96xf32> to vector<32x32xf32>
    %104 = tpu.concatenate %102, %102, %102, %102 in 0 : vector<32x32xf32>, vector<32x32xf32>, vector<32x32xf32>, vector<32x32xf32> -> vector<128x32xf32>
    %105 = arith.mulf %104, %6 : vector<128x32xf32>
    %106 = tpu.concatenate %103, %103, %103, %103 in 0 : vector<32x32xf32>, vector<32x32xf32>, vector<32x32xf32>, vector<32x32xf32> -> vector<128x32xf32>
    %107 = arith.mulf %106, %6 : vector<128x32xf32>
    %cst_42 = arith.constant dense<0.000000e+00> : vector<32x128xf32>
    %108 = tpu.matmul %101, %105, %cst_42 {dimension_numbers = #tpu.dot_dimension_numbers<[1], [1], [0], [0], [0, 0, 1, 0], [], []>} : vector<32x32xf32>, vector<128x32xf32>, vector<32x128xf32> -> vector<32x128xf32>
    %109 = arith.addf %108, %5 : vector<32x128xf32>
    %cst_43 = arith.constant dense<0xFF800000> : vector<32xf32>
    %110 = vector.multi_reduction <maximumf>, %109, %cst_43 [1] : vector<32x128xf32> to vector<32xf32>
    %111 = vector.shape_cast %110 : vector<32xf32> to vector<32x1xf32>
    %112 = vector.broadcast %111 : vector<32x1xf32> to vector<32x128xf32>
    %113 = arith.subf %109, %112 : vector<32x128xf32>
    %114 = math.exp %113 : vector<32x128xf32>
    %cst_44 = arith.constant dense<0.000000e+00> : vector<32x128xf32>
    %115 = tpu.matmul %114, %7, %cst_44 {dimension_numbers = #tpu.dot_dimension_numbers<[1], [0], [0], [1], [0, 0, 1, 1], [], []>} : vector<32x128xf32>, vector<128x128xf32>, vector<32x128xf32> -> vector<32x128xf32>
    %cst_45 = arith.constant 0.000000e+00 : f32
    %116 = vector.broadcast %cst_45 : f32 to vector<32x128xf32>
    %117 = arith.cmpf ogt, %115, %116 : vector<32x128xf32>
    %118 = arith.divf %114, %115 : vector<32x128xf32>
    %cst_46 = arith.constant 0.000000e+00 : f32
    %119 = vector.broadcast %cst_46 : f32 to vector<32x128xf32>
    %120 = arith.select %117, %118, %119 : vector<32x128xi1>, vector<32x128xf32>
    %cst_47 = arith.constant dense<0.000000e+00> : vector<32x32xf32>
    %121 = tpu.matmul %120, %107, %cst_47 {dimension_numbers = #tpu.dot_dimension_numbers<[1], [0], [0], [1], [0, 0, 1, 1], [], []>} : vector<32x128xf32>, vector<128x32xf32>, vector<32x32xf32> -> vector<32x32xf32>
    %cst_48 = arith.constant dense<0.000000e+00> : vector<32x32xf32>
    %122 = tpu.matmul %121, %68, %cst_48 {dimension_numbers = #tpu.dot_dimension_numbers<[1], [0], [0], [1], [0, 0, 1, 1], [], []>} : vector<32x32xf32>, vector<32x32xf32>, vector<32x32xf32> -> vector<32x32xf32>
    %123 = arith.addf %63, %122 : vector<32x32xf32>
    %124 = vector.broadcast %69 : vector<1x32xf32> to vector<32x32xf32>
    %125 = arith.addf %123, %124 : vector<32x32xf32>
    %cst_49 = arith.constant dense<0.000000e+00> : vector<32xf32>
    %126 = vector.multi_reduction <add>, %125, %cst_49 [1] : vector<32x32xf32> to vector<32xf32>
    %127 = vector.shape_cast %126 : vector<32xf32> to vector<32x1xf32>
    %cst_50 = arith.constant 3.200000e+01 : f32
    %128 = vector.broadcast %cst_50 : f32 to vector<32x1xf32>
    %129 = arith.divf %127, %128 : vector<32x1xf32>
    %130 = vector.broadcast %129 : vector<32x1xf32> to vector<32x32xf32>
    %131 = arith.subf %125, %130 : vector<32x32xf32>
    %132 = arith.mulf %131, %131 : vector<32x32xf32>
    %cst_51 = arith.constant dense<0.000000e+00> : vector<32xf32>
    %133 = vector.multi_reduction <add>, %132, %cst_51 [1] : vector<32x32xf32> to vector<32xf32>
    %134 = vector.shape_cast %133 : vector<32xf32> to vector<32x1xf32>
    %cst_52 = arith.constant 3.200000e+01 : f32
    %135 = vector.broadcast %cst_52 : f32 to vector<32x1xf32>
    %136 = arith.divf %134, %135 : vector<32x1xf32>
    %137 = vector.broadcast %129 : vector<32x1xf32> to vector<32x32xf32>
    %138 = arith.subf %125, %137 : vector<32x32xf32>
    %cst_53 = arith.constant 9.99999974E-6 : f32
    %139 = vector.broadcast %cst_53 : f32 to vector<32x1xf32>
    %140 = arith.addf %136, %139 : vector<32x1xf32>
    %141 = math.rsqrt %140 : vector<32x1xf32>
    %142 = vector.broadcast %141 : vector<32x1xf32> to vector<32x32xf32>
    %143 = arith.mulf %138, %142 : vector<32x32xf32>
    %144 = vector.broadcast %70 : vector<1x32xf32> to vector<32x32xf32>
    %145 = arith.mulf %143, %144 : vector<32x32xf32>
    %146 = vector.broadcast %71 : vector<1x32xf32> to vector<32x32xf32>
    %147 = arith.addf %145, %146 : vector<32x32xf32>
    %cst_54 = arith.constant dense<0.000000e+00> : vector<32x128xf32>
    %148 = tpu.matmul %147, %72, %cst_54 {dimension_numbers = #tpu.dot_dimension_numbers<[1], [0], [0], [1], [0, 0, 1, 1], [], []>} : vector<32x32xf32>, vector<32x128xf32>, vector<32x128xf32> -> vector<32x128xf32>
    %149 = vector.broadcast %73 : vector<1x128xf32> to vector<32x128xf32>
    %150 = arith.addf %148, %149 : vector<32x128xf32>
    %cst_55 = arith.constant 1.702000e+00 : f32
    %151 = vector.broadcast %cst_55 : f32 to vector<32x128xf32>
    %152 = arith.mulf %151, %150 : vector<32x128xf32>
    %153 = arith.negf %152 : vector<32x128xf32>
    %154 = math.exp %153 : vector<32x128xf32>
    %cst_56 = arith.constant 1.000000e+00 : f32
    %155 = vector.broadcast %cst_56 : f32 to vector<32x128xf32>
    %156 = arith.addf %155, %154 : vector<32x128xf32>
    %157 = arith.divf %155, %156 : vector<32x128xf32>
    %158 = arith.mulf %150, %157 : vector<32x128xf32>
    %cst_57 = arith.constant dense<0.000000e+00> : vector<32x32xf32>
    %159 = tpu.matmul %158, %74, %cst_57 {dimension_numbers = #tpu.dot_dimension_numbers<[1], [0], [0], [1], [0, 0, 1, 1], [], []>} : vector<32x128xf32>, vector<128x32xf32>, vector<32x32xf32> -> vector<32x32xf32>
    %160 = arith.addf %125, %159 : vector<32x32xf32>
    %161 = vector.broadcast %75 : vector<1x32xf32> to vector<32x32xf32>
    %162 = arith.addf %160, %161 : vector<32x32xf32>
    %c960 = arith.constant 960 : index
    %c0_58 = arith.constant 0 : index
    %163 = vector.load %arg1[%c960, %c0_58] : memref<1536x128xf32, #tpu.memory_space<vmem>>, vector<1x32xf32>
    %c968 = arith.constant 968 : index
    %c0_59 = arith.constant 0 : index
    %164 = vector.load %arg1[%c968, %c0_59] : memref<1536x128xf32, #tpu.memory_space<vmem>>, vector<1x32xf32>
    %c976 = arith.constant 976 : index
    %c0_60 = arith.constant 0 : index
    %165 = vector.load %arg1[%c976, %c0_60] : memref<1536x128xf32, #tpu.memory_space<vmem>>, vector<32x96xf32>
    %c1008 = arith.constant 1008 : index
    %c0_61 = arith.constant 0 : index
    %166 = vector.load %arg1[%c1008, %c0_61] : memref<1536x128xf32, #tpu.memory_space<vmem>>, vector<1x96xf32>
    %c1016 = arith.constant 1016 : index
    %c0_62 = arith.constant 0 : index
    %167 = vector.load %arg1[%c1016, %c0_62] : memref<1536x128xf32, #tpu.memory_space<vmem>>, vector<32x32xf32>
    %c1048 = arith.constant 1048 : index
    %c0_63 = arith.constant 0 : index
    %168 = vector.load %arg1[%c1048, %c0_63] : memref<1536x128xf32, #tpu.memory_space<vmem>>, vector<1x32xf32>
    %c1056 = arith.constant 1056 : index
    %c0_64 = arith.constant 0 : index
    %169 = vector.load %arg1[%c1056, %c0_64] : memref<1536x128xf32, #tpu.memory_space<vmem>>, vector<1x32xf32>
    %c1064 = arith.constant 1064 : index
    %c0_65 = arith.constant 0 : index
    %170 = vector.load %arg1[%c1064, %c0_65] : memref<1536x128xf32, #tpu.memory_space<vmem>>, vector<1x32xf32>
    %c1072 = arith.constant 1072 : index
    %c0_66 = arith.constant 0 : index
    %171 = vector.load %arg1[%c1072, %c0_66] : memref<1536x128xf32, #tpu.memory_space<vmem>>, vector<32x128xf32>
    %c1104 = arith.constant 1104 : index
    %c0_67 = arith.constant 0 : index
    %172 = vector.load %arg1[%c1104, %c0_67] : memref<1536x128xf32, #tpu.memory_space<vmem>>, vector<1x128xf32>
    %c1112 = arith.constant 1112 : index
    %c0_68 = arith.constant 0 : index
    %173 = vector.load %arg1[%c1112, %c0_68] : memref<1536x128xf32, #tpu.memory_space<vmem>>, vector<128x32xf32>
    %c1240 = arith.constant 1240 : index
    %c0_69 = arith.constant 0 : index
    %174 = vector.load %arg1[%c1240, %c0_69] : memref<1536x128xf32, #tpu.memory_space<vmem>>, vector<1x32xf32>
    %cst_70 = arith.constant dense<0.000000e+00> : vector<32xf32>
    %175 = vector.multi_reduction <add>, %162, %cst_70 [1] : vector<32x32xf32> to vector<32xf32>
    %176 = vector.shape_cast %175 : vector<32xf32> to vector<32x1xf32>
    %cst_71 = arith.constant 3.200000e+01 : f32
    %177 = vector.broadcast %cst_71 : f32 to vector<32x1xf32>
    %178 = arith.divf %176, %177 : vector<32x1xf32>
    %179 = vector.broadcast %178 : vector<32x1xf32> to vector<32x32xf32>
    %180 = arith.subf %162, %179 : vector<32x32xf32>
    %181 = arith.mulf %180, %180 : vector<32x32xf32>
    %cst_72 = arith.constant dense<0.000000e+00> : vector<32xf32>
    %182 = vector.multi_reduction <add>, %181, %cst_72 [1] : vector<32x32xf32> to vector<32xf32>
    %183 = vector.shape_cast %182 : vector<32xf32> to vector<32x1xf32>
    %cst_73 = arith.constant 3.200000e+01 : f32
    %184 = vector.broadcast %cst_73 : f32 to vector<32x1xf32>
    %185 = arith.divf %183, %184 : vector<32x1xf32>
    %186 = vector.broadcast %178 : vector<32x1xf32> to vector<32x32xf32>
    %187 = arith.subf %162, %186 : vector<32x32xf32>
    %cst_74 = arith.constant 9.99999974E-6 : f32
    %188 = vector.broadcast %cst_74 : f32 to vector<32x1xf32>
    %189 = arith.addf %185, %188 : vector<32x1xf32>
    %190 = math.rsqrt %189 : vector<32x1xf32>
    %191 = vector.broadcast %190 : vector<32x1xf32> to vector<32x32xf32>
    %192 = arith.mulf %187, %191 : vector<32x32xf32>
    %193 = vector.broadcast %163 : vector<1x32xf32> to vector<32x32xf32>
    %194 = arith.mulf %192, %193 : vector<32x32xf32>
    %195 = vector.broadcast %164 : vector<1x32xf32> to vector<32x32xf32>
    %196 = arith.addf %194, %195 : vector<32x32xf32>
    %cst_75 = arith.constant dense<0.000000e+00> : vector<32x96xf32>
    %197 = tpu.matmul %196, %165, %cst_75 {dimension_numbers = #tpu.dot_dimension_numbers<[1], [0], [0], [1], [0, 0, 1, 1], [], []>} : vector<32x32xf32>, vector<32x96xf32>, vector<32x96xf32> -> vector<32x96xf32>
    %198 = vector.broadcast %166 : vector<1x96xf32> to vector<32x96xf32>
    %199 = arith.addf %197, %198 : vector<32x96xf32>
    %200 = vector.extract_strided_slice %199 {offsets = [0, 0], sizes = [32, 32], strides = [1, 1]} : vector<32x96xf32> to vector<32x32xf32>
    %201 = vector.extract_strided_slice %199 {offsets = [0, 32], sizes = [32, 32], strides = [1, 1]} : vector<32x96xf32> to vector<32x32xf32>
    %202 = vector.extract_strided_slice %199 {offsets = [0, 64], sizes = [32, 32], strides = [1, 1]} : vector<32x96xf32> to vector<32x32xf32>
    %203 = tpu.concatenate %201, %201, %201, %201 in 0 : vector<32x32xf32>, vector<32x32xf32>, vector<32x32xf32>, vector<32x32xf32> -> vector<128x32xf32>
    %204 = arith.mulf %203, %6 : vector<128x32xf32>
    %205 = tpu.concatenate %202, %202, %202, %202 in 0 : vector<32x32xf32>, vector<32x32xf32>, vector<32x32xf32>, vector<32x32xf32> -> vector<128x32xf32>
    %206 = arith.mulf %205, %6 : vector<128x32xf32>
    %cst_76 = arith.constant dense<0.000000e+00> : vector<32x128xf32>
    %207 = tpu.matmul %200, %204, %cst_76 {dimension_numbers = #tpu.dot_dimension_numbers<[1], [1], [0], [0], [0, 0, 1, 0], [], []>} : vector<32x32xf32>, vector<128x32xf32>, vector<32x128xf32> -> vector<32x128xf32>
    %208 = arith.addf %207, %5 : vector<32x128xf32>
    %cst_77 = arith.constant dense<0xFF800000> : vector<32xf32>
    %209 = vector.multi_reduction <maximumf>, %208, %cst_77 [1] : vector<32x128xf32> to vector<32xf32>
    %210 = vector.shape_cast %209 : vector<32xf32> to vector<32x1xf32>
    %211 = vector.broadcast %210 : vector<32x1xf32> to vector<32x128xf32>
    %212 = arith.subf %208, %211 : vector<32x128xf32>
    %213 = math.exp %212 : vector<32x128xf32>
    %cst_78 = arith.constant dense<0.000000e+00> : vector<32x128xf32>
    %214 = tpu.matmul %213, %7, %cst_78 {dimension_numbers = #tpu.dot_dimension_numbers<[1], [0], [0], [1], [0, 0, 1, 1], [], []>} : vector<32x128xf32>, vector<128x128xf32>, vector<32x128xf32> -> vector<32x128xf32>
    %cst_79 = arith.constant 0.000000e+00 : f32
    %215 = vector.broadcast %cst_79 : f32 to vector<32x128xf32>
    %216 = arith.cmpf ogt, %214, %215 : vector<32x128xf32>
    %217 = arith.divf %213, %214 : vector<32x128xf32>
    %cst_80 = arith.constant 0.000000e+00 : f32
    %218 = vector.broadcast %cst_80 : f32 to vector<32x128xf32>
    %219 = arith.select %216, %217, %218 : vector<32x128xi1>, vector<32x128xf32>
    %cst_81 = arith.constant dense<0.000000e+00> : vector<32x32xf32>
    %220 = tpu.matmul %219, %206, %cst_81 {dimension_numbers = #tpu.dot_dimension_numbers<[1], [0], [0], [1], [0, 0, 1, 1], [], []>} : vector<32x128xf32>, vector<128x32xf32>, vector<32x32xf32> -> vector<32x32xf32>
    %cst_82 = arith.constant dense<0.000000e+00> : vector<32x32xf32>
    %221 = tpu.matmul %220, %167, %cst_82 {dimension_numbers = #tpu.dot_dimension_numbers<[1], [0], [0], [1], [0, 0, 1, 1], [], []>} : vector<32x32xf32>, vector<32x32xf32>, vector<32x32xf32> -> vector<32x32xf32>
    %222 = arith.addf %162, %221 : vector<32x32xf32>
    %223 = vector.broadcast %168 : vector<1x32xf32> to vector<32x32xf32>
    %224 = arith.addf %222, %223 : vector<32x32xf32>
    %c512 = arith.constant 512 : index
    %c0_83 = arith.constant 0 : index
    %225 = vector.load %arg1[%c512, %c0_83] : memref<1536x128xf32, #tpu.memory_space<vmem>>, vector<2x32xf32>
    %c520 = arith.constant 520 : index
    %c0_84 = arith.constant 0 : index
    %226 = vector.load %arg1[%c520, %c0_84] : memref<1536x128xf32, #tpu.memory_space<vmem>>, vector<128x32xf32>
    %c648 = arith.constant 648 : index
    %c0_85 = arith.constant 0 : index
    %227 = vector.load %arg1[%c648, %c0_85] : memref<1536x128xf32, #tpu.memory_space<vmem>>, vector<2x32xf32>
    %c656 = arith.constant 656 : index
    %c0_86 = arith.constant 0 : index
    %228 = vector.load %arg1[%c656, %c0_86] : memref<1536x128xf32, #tpu.memory_space<vmem>>, vector<2x32xf32>
    %c664 = arith.constant 664 : index
    %c0_87 = arith.constant 0 : index
    %229 = vector.load %arg1[%c664, %c0_87] : memref<1536x128xf32, #tpu.memory_space<vmem>>, vector<1x32xf32>
    %cst_88 = arith.constant dense<0.000000e+00> : vector<2x128xf32>
    %230 = tpu.matmul %225, %219, %cst_88 {dimension_numbers = #tpu.dot_dimension_numbers<[1], [0], [0], [1], [0, 0, 1, 1], [], []>} : vector<2x32xf32>, vector<32x128xf32>, vector<2x128xf32> -> vector<2x128xf32>
    %cst_89 = arith.constant dense<0.000000e+00> : vector<2x32xf32>
    %231 = tpu.matmul %230, %226, %cst_89 {dimension_numbers = #tpu.dot_dimension_numbers<[1], [0], [0], [1], [0, 0, 1, 1], [], []>} : vector<2x128xf32>, vector<128x32xf32>, vector<2x32xf32> -> vector<2x32xf32>
    %232 = arith.addf %231, %227 : vector<2x32xf32>
    %cst_90 = arith.constant 0.000000e+00 : f32
    %233 = vector.broadcast %cst_90 : f32 to vector<2x32xf32>
    %cst_91 = arith.constant dense<0xFF800000> : vector<2xf32>
    %234 = vector.multi_reduction <maximumf>, %232, %cst_91 [1] : vector<2x32xf32> to vector<2xf32>
    %235 = vector.shape_cast %234 : vector<2xf32> to vector<2x1xf32>
    %236 = vector.broadcast %235 : vector<2x1xf32> to vector<2x32xf32>
    %237 = arith.cmpf oge, %232, %236 : vector<2x32xf32>
    %cst_92 = arith.constant 3.200000e+01 : f32
    %238 = vector.broadcast %cst_92 : f32 to vector<2x32xf32>
    %239 = arith.select %237, %228, %238 : vector<2x32xi1>, vector<2x32xf32>
    %cst_93 = arith.constant dense<0x7F800000> : vector<2xf32>
    %240 = vector.multi_reduction <minimumf>, %239, %cst_93 [1] : vector<2x32xf32> to vector<2xf32>
    %241 = vector.shape_cast %240 : vector<2xf32> to vector<2x1xf32>
    %242 = vector.broadcast %241 : vector<2x1xf32> to vector<2x32xf32>
    %243 = arith.cmpf oeq, %228, %242 : vector<2x32xf32>
    %244 = arith.extui %243 : vector<2x32xi1> to vector<2x32xi32>
    %245 = arith.sitofp %244 : vector<2x32xi32> to vector<2x32xf32>
    %246 = arith.addf %233, %245 : vector<2x32xf32>
    %cst_94 = arith.constant 0.000000e+00 : f32
    %247 = vector.broadcast %cst_94 : f32 to vector<2x32xf32>
    %248 = arith.cmpf ogt, %245, %247 : vector<2x32xf32>
    %cst_95 = arith.constant 0xFF800000 : f32
    %249 = vector.broadcast %cst_95 : f32 to vector<2x32xf32>
    %250 = arith.select %248, %249, %232 : vector<2x32xi1>, vector<2x32xf32>
    %cst_96 = arith.constant dense<0xFF800000> : vector<2xf32>
    %251 = vector.multi_reduction <maximumf>, %250, %cst_96 [1] : vector<2x32xf32> to vector<2xf32>
    %252 = vector.shape_cast %251 : vector<2xf32> to vector<2x1xf32>
    %253 = vector.broadcast %252 : vector<2x1xf32> to vector<2x32xf32>
    %254 = arith.cmpf oge, %250, %253 : vector<2x32xf32>
    %cst_97 = arith.constant 3.200000e+01 : f32
    %255 = vector.broadcast %cst_97 : f32 to vector<2x32xf32>
    %256 = arith.select %254, %228, %255 : vector<2x32xi1>, vector<2x32xf32>
    %cst_98 = arith.constant dense<0x7F800000> : vector<2xf32>
    %257 = vector.multi_reduction <minimumf>, %256, %cst_98 [1] : vector<2x32xf32> to vector<2xf32>
    %258 = vector.shape_cast %257 : vector<2xf32> to vector<2x1xf32>
    %259 = vector.broadcast %258 : vector<2x1xf32> to vector<2x32xf32>
    %260 = arith.cmpf oeq, %228, %259 : vector<2x32xf32>
    %261 = arith.extui %260 : vector<2x32xi1> to vector<2x32xi32>
    %262 = arith.sitofp %261 : vector<2x32xi32> to vector<2x32xf32>
    %263 = arith.addf %246, %262 : vector<2x32xf32>
    %cst_99 = arith.constant dense<0.000000e+00> : vector<32xf32>
    %264 = vector.multi_reduction <add>, %263, %cst_99 [0] : vector<2x32xf32> to vector<32xf32>
    %265 = vector.shape_cast %264 : vector<32xf32> to vector<1x32xf32>
    %cst_100 = arith.constant 1.000000e+00 : f32
    %266 = vector.broadcast %cst_100 : f32 to vector<1x32xf32>
    %267 = arith.subf %266, %265 : vector<1x32xf32>
    %268 = arith.mulf %229, %267 : vector<1x32xf32>
    %cst_101 = arith.constant -1.000000e+09 : f32
    %269 = vector.broadcast %cst_101 : f32 to vector<1x32xf32>
    %270 = arith.mulf %268, %269 : vector<1x32xf32>
    %271 = tpu.concatenate %270, %270, %270, %270 in 1 : vector<1x32xf32>, vector<1x32xf32>, vector<1x32xf32>, vector<1x32xf32> -> vector<1x128xf32>
    %272 = vector.broadcast %271 : vector<1x128xf32> to vector<32x128xf32>
    %273 = arith.addf %5, %272 : vector<32x128xf32>
    %cst_102 = arith.constant dense<0.000000e+00> : vector<32xf32>
    %274 = vector.multi_reduction <add>, %224, %cst_102 [1] : vector<32x32xf32> to vector<32xf32>
    %275 = vector.shape_cast %274 : vector<32xf32> to vector<32x1xf32>
    %cst_103 = arith.constant 3.200000e+01 : f32
    %276 = vector.broadcast %cst_103 : f32 to vector<32x1xf32>
    %277 = arith.divf %275, %276 : vector<32x1xf32>
    %278 = vector.broadcast %277 : vector<32x1xf32> to vector<32x32xf32>
    %279 = arith.subf %224, %278 : vector<32x32xf32>
    %280 = arith.mulf %279, %279 : vector<32x32xf32>
    %cst_104 = arith.constant dense<0.000000e+00> : vector<32xf32>
    %281 = vector.multi_reduction <add>, %280, %cst_104 [1] : vector<32x32xf32> to vector<32xf32>
    %282 = vector.shape_cast %281 : vector<32xf32> to vector<32x1xf32>
    %cst_105 = arith.constant 3.200000e+01 : f32
    %283 = vector.broadcast %cst_105 : f32 to vector<32x1xf32>
    %284 = arith.divf %282, %283 : vector<32x1xf32>
    %285 = vector.broadcast %277 : vector<32x1xf32> to vector<32x32xf32>
    %286 = arith.subf %224, %285 : vector<32x32xf32>
    %cst_106 = arith.constant 9.99999974E-6 : f32
    %287 = vector.broadcast %cst_106 : f32 to vector<32x1xf32>
    %288 = arith.addf %284, %287 : vector<32x1xf32>
    %289 = math.rsqrt %288 : vector<32x1xf32>
    %290 = vector.broadcast %289 : vector<32x1xf32> to vector<32x32xf32>
    %291 = arith.mulf %286, %290 : vector<32x32xf32>
    %292 = vector.broadcast %169 : vector<1x32xf32> to vector<32x32xf32>
    %293 = arith.mulf %291, %292 : vector<32x32xf32>
    %294 = vector.broadcast %170 : vector<1x32xf32> to vector<32x32xf32>
    %295 = arith.addf %293, %294 : vector<32x32xf32>
    %cst_107 = arith.constant dense<0.000000e+00> : vector<32x128xf32>
    %296 = tpu.matmul %295, %171, %cst_107 {dimension_numbers = #tpu.dot_dimension_numbers<[1], [0], [0], [1], [0, 0, 1, 1], [], []>} : vector<32x32xf32>, vector<32x128xf32>, vector<32x128xf32> -> vector<32x128xf32>
    %297 = vector.broadcast %172 : vector<1x128xf32> to vector<32x128xf32>
    %298 = arith.addf %296, %297 : vector<32x128xf32>
    %cst_108 = arith.constant 1.702000e+00 : f32
    %299 = vector.broadcast %cst_108 : f32 to vector<32x128xf32>
    %300 = arith.mulf %299, %298 : vector<32x128xf32>
    %301 = arith.negf %300 : vector<32x128xf32>
    %302 = math.exp %301 : vector<32x128xf32>
    %cst_109 = arith.constant 1.000000e+00 : f32
    %303 = vector.broadcast %cst_109 : f32 to vector<32x128xf32>
    %304 = arith.addf %303, %302 : vector<32x128xf32>
    %305 = arith.divf %303, %304 : vector<32x128xf32>
    %306 = arith.mulf %298, %305 : vector<32x128xf32>
    %cst_110 = arith.constant dense<0.000000e+00> : vector<32x32xf32>
    %307 = tpu.matmul %306, %173, %cst_110 {dimension_numbers = #tpu.dot_dimension_numbers<[1], [0], [0], [1], [0, 0, 1, 1], [], []>} : vector<32x128xf32>, vector<128x32xf32>, vector<32x32xf32> -> vector<32x32xf32>
    %308 = arith.addf %224, %307 : vector<32x32xf32>
    %309 = vector.broadcast %174 : vector<1x32xf32> to vector<32x32xf32>
    %310 = arith.addf %308, %309 : vector<32x32xf32>
    %c1248 = arith.constant 1248 : index
    %c0_111 = arith.constant 0 : index
    %311 = vector.load %arg1[%c1248, %c0_111] : memref<1536x128xf32, #tpu.memory_space<vmem>>, vector<1x32xf32>
    %c1256 = arith.constant 1256 : index
    %c0_112 = arith.constant 0 : index
    %312 = vector.load %arg1[%c1256, %c0_112] : memref<1536x128xf32, #tpu.memory_space<vmem>>, vector<1x32xf32>
    %c1264 = arith.constant 1264 : index
    %c0_113 = arith.constant 0 : index
    %313 = vector.load %arg1[%c1264, %c0_113] : memref<1536x128xf32, #tpu.memory_space<vmem>>, vector<32x96xf32>
    %c1296 = arith.constant 1296 : index
    %c0_114 = arith.constant 0 : index
    %314 = vector.load %arg1[%c1296, %c0_114] : memref<1536x128xf32, #tpu.memory_space<vmem>>, vector<1x96xf32>
    %c1304 = arith.constant 1304 : index
    %c0_115 = arith.constant 0 : index
    %315 = vector.load %arg1[%c1304, %c0_115] : memref<1536x128xf32, #tpu.memory_space<vmem>>, vector<32x32xf32>
    %c1336 = arith.constant 1336 : index
    %c0_116 = arith.constant 0 : index
    %316 = vector.load %arg1[%c1336, %c0_116] : memref<1536x128xf32, #tpu.memory_space<vmem>>, vector<1x32xf32>
    %c1344 = arith.constant 1344 : index
    %c0_117 = arith.constant 0 : index
    %317 = vector.load %arg1[%c1344, %c0_117] : memref<1536x128xf32, #tpu.memory_space<vmem>>, vector<1x32xf32>
    %c1352 = arith.constant 1352 : index
    %c0_118 = arith.constant 0 : index
    %318 = vector.load %arg1[%c1352, %c0_118] : memref<1536x128xf32, #tpu.memory_space<vmem>>, vector<1x32xf32>
    %c1360 = arith.constant 1360 : index
    %c0_119 = arith.constant 0 : index
    %319 = vector.load %arg1[%c1360, %c0_119] : memref<1536x128xf32, #tpu.memory_space<vmem>>, vector<32x128xf32>
    %c1392 = arith.constant 1392 : index
    %c0_120 = arith.constant 0 : index
    %320 = vector.load %arg1[%c1392, %c0_120] : memref<1536x128xf32, #tpu.memory_space<vmem>>, vector<1x128xf32>
    %c1400 = arith.constant 1400 : index
    %c0_121 = arith.constant 0 : index
    %321 = vector.load %arg1[%c1400, %c0_121] : memref<1536x128xf32, #tpu.memory_space<vmem>>, vector<128x32xf32>
    %c1528 = arith.constant 1528 : index
    %c0_122 = arith.constant 0 : index
    %322 = vector.load %arg1[%c1528, %c0_122] : memref<1536x128xf32, #tpu.memory_space<vmem>>, vector<1x32xf32>
    %cst_123 = arith.constant dense<0.000000e+00> : vector<32xf32>
    %323 = vector.multi_reduction <add>, %310, %cst_123 [1] : vector<32x32xf32> to vector<32xf32>
    %324 = vector.shape_cast %323 : vector<32xf32> to vector<32x1xf32>
    %cst_124 = arith.constant 3.200000e+01 : f32
    %325 = vector.broadcast %cst_124 : f32 to vector<32x1xf32>
    %326 = arith.divf %324, %325 : vector<32x1xf32>
    %327 = vector.broadcast %326 : vector<32x1xf32> to vector<32x32xf32>
    %328 = arith.subf %310, %327 : vector<32x32xf32>
    %329 = arith.mulf %328, %328 : vector<32x32xf32>
    %cst_125 = arith.constant dense<0.000000e+00> : vector<32xf32>
    %330 = vector.multi_reduction <add>, %329, %cst_125 [1] : vector<32x32xf32> to vector<32xf32>
    %331 = vector.shape_cast %330 : vector<32xf32> to vector<32x1xf32>
    %cst_126 = arith.constant 3.200000e+01 : f32
    %332 = vector.broadcast %cst_126 : f32 to vector<32x1xf32>
    %333 = arith.divf %331, %332 : vector<32x1xf32>
    %334 = vector.broadcast %326 : vector<32x1xf32> to vector<32x32xf32>
    %335 = arith.subf %310, %334 : vector<32x32xf32>
    %cst_127 = arith.constant 9.99999974E-6 : f32
    %336 = vector.broadcast %cst_127 : f32 to vector<32x1xf32>
    %337 = arith.addf %333, %336 : vector<32x1xf32>
    %338 = math.rsqrt %337 : vector<32x1xf32>
    %339 = vector.broadcast %338 : vector<32x1xf32> to vector<32x32xf32>
    %340 = arith.mulf %335, %339 : vector<32x32xf32>
    %341 = vector.broadcast %311 : vector<1x32xf32> to vector<32x32xf32>
    %342 = arith.mulf %340, %341 : vector<32x32xf32>
    %343 = vector.broadcast %312 : vector<1x32xf32> to vector<32x32xf32>
    %344 = arith.addf %342, %343 : vector<32x32xf32>
    %cst_128 = arith.constant dense<0.000000e+00> : vector<32x96xf32>
    %345 = tpu.matmul %344, %313, %cst_128 {dimension_numbers = #tpu.dot_dimension_numbers<[1], [0], [0], [1], [0, 0, 1, 1], [], []>} : vector<32x32xf32>, vector<32x96xf32>, vector<32x96xf32> -> vector<32x96xf32>
    %346 = vector.broadcast %314 : vector<1x96xf32> to vector<32x96xf32>
    %347 = arith.addf %345, %346 : vector<32x96xf32>
    %348 = vector.extract_strided_slice %347 {offsets = [0, 0], sizes = [32, 32], strides = [1, 1]} : vector<32x96xf32> to vector<32x32xf32>
    %349 = vector.extract_strided_slice %347 {offsets = [0, 32], sizes = [32, 32], strides = [1, 1]} : vector<32x96xf32> to vector<32x32xf32>
    %350 = vector.extract_strided_slice %347 {offsets = [0, 64], sizes = [32, 32], strides = [1, 1]} : vector<32x96xf32> to vector<32x32xf32>
    %351 = tpu.concatenate %349, %349, %349, %349 in 0 : vector<32x32xf32>, vector<32x32xf32>, vector<32x32xf32>, vector<32x32xf32> -> vector<128x32xf32>
    %352 = arith.mulf %351, %6 : vector<128x32xf32>
    %353 = tpu.concatenate %350, %350, %350, %350 in 0 : vector<32x32xf32>, vector<32x32xf32>, vector<32x32xf32>, vector<32x32xf32> -> vector<128x32xf32>
    %354 = arith.mulf %353, %6 : vector<128x32xf32>
    %cst_129 = arith.constant dense<0.000000e+00> : vector<32x128xf32>
    %355 = tpu.matmul %348, %352, %cst_129 {dimension_numbers = #tpu.dot_dimension_numbers<[1], [1], [0], [0], [0, 0, 1, 0], [], []>} : vector<32x32xf32>, vector<128x32xf32>, vector<32x128xf32> -> vector<32x128xf32>
    %356 = arith.addf %355, %273 : vector<32x128xf32>
    %cst_130 = arith.constant dense<0xFF800000> : vector<32xf32>
    %357 = vector.multi_reduction <maximumf>, %356, %cst_130 [1] : vector<32x128xf32> to vector<32xf32>
    %358 = vector.shape_cast %357 : vector<32xf32> to vector<32x1xf32>
    %359 = vector.broadcast %358 : vector<32x1xf32> to vector<32x128xf32>
    %360 = arith.subf %356, %359 : vector<32x128xf32>
    %361 = math.exp %360 : vector<32x128xf32>
    %cst_131 = arith.constant dense<0.000000e+00> : vector<32x128xf32>
    %362 = tpu.matmul %361, %7, %cst_131 {dimension_numbers = #tpu.dot_dimension_numbers<[1], [0], [0], [1], [0, 0, 1, 1], [], []>} : vector<32x128xf32>, vector<128x128xf32>, vector<32x128xf32> -> vector<32x128xf32>
    %cst_132 = arith.constant 0.000000e+00 : f32
    %363 = vector.broadcast %cst_132 : f32 to vector<32x128xf32>
    %364 = arith.cmpf ogt, %362, %363 : vector<32x128xf32>
    %365 = arith.divf %361, %362 : vector<32x128xf32>
    %cst_133 = arith.constant 0.000000e+00 : f32
    %366 = vector.broadcast %cst_133 : f32 to vector<32x128xf32>
    %367 = arith.select %364, %365, %366 : vector<32x128xi1>, vector<32x128xf32>
    %cst_134 = arith.constant dense<0.000000e+00> : vector<32x32xf32>
    %368 = tpu.matmul %367, %354, %cst_134 {dimension_numbers = #tpu.dot_dimension_numbers<[1], [0], [0], [1], [0, 0, 1, 1], [], []>} : vector<32x128xf32>, vector<128x32xf32>, vector<32x32xf32> -> vector<32x32xf32>
    %cst_135 = arith.constant dense<0.000000e+00> : vector<32x32xf32>
    %369 = tpu.matmul %368, %315, %cst_135 {dimension_numbers = #tpu.dot_dimension_numbers<[1], [0], [0], [1], [0, 0, 1, 1], [], []>} : vector<32x32xf32>, vector<32x32xf32>, vector<32x32xf32> -> vector<32x32xf32>
    %370 = arith.addf %310, %369 : vector<32x32xf32>
    %371 = vector.broadcast %316 : vector<1x32xf32> to vector<32x32xf32>
    %372 = arith.addf %370, %371 : vector<32x32xf32>
    %cst_136 = arith.constant dense<0.000000e+00> : vector<32xf32>
    %373 = vector.multi_reduction <add>, %372, %cst_136 [1] : vector<32x32xf32> to vector<32xf32>
    %374 = vector.shape_cast %373 : vector<32xf32> to vector<32x1xf32>
    %cst_137 = arith.constant 3.200000e+01 : f32
    %375 = vector.broadcast %cst_137 : f32 to vector<32x1xf32>
    %376 = arith.divf %374, %375 : vector<32x1xf32>
    %377 = vector.broadcast %376 : vector<32x1xf32> to vector<32x32xf32>
    %378 = arith.subf %372, %377 : vector<32x32xf32>
    %379 = arith.mulf %378, %378 : vector<32x32xf32>
    %cst_138 = arith.constant dense<0.000000e+00> : vector<32xf32>
    %380 = vector.multi_reduction <add>, %379, %cst_138 [1] : vector<32x32xf32> to vector<32xf32>
    %381 = vector.shape_cast %380 : vector<32xf32> to vector<32x1xf32>
    %cst_139 = arith.constant 3.200000e+01 : f32
    %382 = vector.broadcast %cst_139 : f32 to vector<32x1xf32>
    %383 = arith.divf %381, %382 : vector<32x1xf32>
    %384 = vector.broadcast %376 : vector<32x1xf32> to vector<32x32xf32>
    %385 = arith.subf %372, %384 : vector<32x32xf32>
    %cst_140 = arith.constant 9.99999974E-6 : f32
    %386 = vector.broadcast %cst_140 : f32 to vector<32x1xf32>
    %387 = arith.addf %383, %386 : vector<32x1xf32>
    %388 = math.rsqrt %387 : vector<32x1xf32>
    %389 = vector.broadcast %388 : vector<32x1xf32> to vector<32x32xf32>
    %390 = arith.mulf %385, %389 : vector<32x32xf32>
    %391 = vector.broadcast %317 : vector<1x32xf32> to vector<32x32xf32>
    %392 = arith.mulf %390, %391 : vector<32x32xf32>
    %393 = vector.broadcast %318 : vector<1x32xf32> to vector<32x32xf32>
    %394 = arith.addf %392, %393 : vector<32x32xf32>
    %cst_141 = arith.constant dense<0.000000e+00> : vector<32x128xf32>
    %395 = tpu.matmul %394, %319, %cst_141 {dimension_numbers = #tpu.dot_dimension_numbers<[1], [0], [0], [1], [0, 0, 1, 1], [], []>} : vector<32x32xf32>, vector<32x128xf32>, vector<32x128xf32> -> vector<32x128xf32>
    %396 = vector.broadcast %320 : vector<1x128xf32> to vector<32x128xf32>
    %397 = arith.addf %395, %396 : vector<32x128xf32>
    %cst_142 = arith.constant 1.702000e+00 : f32
    %398 = vector.broadcast %cst_142 : f32 to vector<32x128xf32>
    %399 = arith.mulf %398, %397 : vector<32x128xf32>
    %400 = arith.negf %399 : vector<32x128xf32>
    %401 = math.exp %400 : vector<32x128xf32>
    %cst_143 = arith.constant 1.000000e+00 : f32
    %402 = vector.broadcast %cst_143 : f32 to vector<32x128xf32>
    %403 = arith.addf %402, %401 : vector<32x128xf32>
    %404 = arith.divf %402, %403 : vector<32x128xf32>
    %405 = arith.mulf %397, %404 : vector<32x128xf32>
    %cst_144 = arith.constant dense<0.000000e+00> : vector<32x32xf32>
    %406 = tpu.matmul %405, %321, %cst_144 {dimension_numbers = #tpu.dot_dimension_numbers<[1], [0], [0], [1], [0, 0, 1, 1], [], []>} : vector<32x128xf32>, vector<128x32xf32>, vector<32x32xf32> -> vector<32x32xf32>
    %407 = arith.addf %372, %406 : vector<32x32xf32>
    %408 = vector.broadcast %322 : vector<1x32xf32> to vector<32x32xf32>
    %409 = arith.addf %407, %408 : vector<32x32xf32>
    %410 = vector.extract_strided_slice %409 {offsets = [0, 0], sizes = [1, 32], strides = [1, 1]} : vector<32x32xf32> to vector<1x32xf32>
    %411 = vector.extract_strided_slice %409 {offsets = [16, 0], sizes = [1, 32], strides = [1, 1]} : vector<32x32xf32> to vector<1x32xf32>
    %412 = tpu.concatenate %410, %411 in 0 : vector<1x32xf32>, vector<1x32xf32> -> vector<2x32xf32>
    %c0_145 = arith.constant 0 : index
    %c0_146 = arith.constant 0 : index
    %413 = vector.load %arg4[%c0_145, %c0_146] : memref<2x32xf32, #tpu.memory_space<vmem>>, vector<2x32xf32>
    tpu.vector_store %arg4[%c0_145, %c0_146], %412 {strides = array<i32>} : memref<2x32xf32, #tpu.memory_space<vmem>>, vector<2x32xf32>,
    return
  }
  func.func @transform_0(%arg0: i32) -> (i32, i32) {
    %c0_i32 = arith.constant 0 : i32
    %c0_i32_0 = arith.constant 0 : i32
    %c0_i32_1 = arith.constant 0 : i32
    return %c0_i32, %c0_i32_0 : i32, i32
  }
  func.func @transform_1(%arg0: i32) -> (i32, i32) {
    %c0_i32 = arith.constant 0 : i32
    %c0_i32_0 = arith.constant 0 : i32
    %c0_i32_1 = arith.constant 0 : i32
    return %c0_i32, %c0_i32_0 : i32, i32
  }
  func.func @transform_2(%arg0: i32) -> (i32, i32) {
    %c0_i32 = arith.constant 0 : i32
    %c0_i32_0 = arith.constant 0 : i32
    %c0_i32_1 = arith.constant 0 : i32
    return %c0_i32, %c0_i32_0 : i32, i32
  }
  func.func @transform_3(%arg0: i32) -> (i32, i32) {
    %c0_i32 = arith.constant 0 : i32
    %c0_i32_0 = arith.constant 0 : i32
    %c0_i32_1 = arith.constant 0 : i32
    return %c0_i32, %c0_i32_0 : i32, i32
  }
}

</mosaic_0001>

<llo_original>
// kernel: encoder_forward.1
$region0: #{encoder_forward.1}
  #allocation0 [shape = 'u32[]', space=smem, size = 0x4, offset = 0x4, fixed_abs, tag = 'smem constant byte address 0x4 - core index']
  #allocation1 [shape = 'u32[144,128]{1,0:T(1,128)}', space=vmem, size = 0x12000, scoped, tag = 'internal scratch']
  %s0 = inlined_call_operand.hbm [shape: f32[1536,128], index: 0, kind: input, shape index: {}]
  %s1 = inlined_call_operand.vmem [shape: f32[8,192], index: 1, kind: input, shape index: {}]
  %s2 = inlined_call_operand.vmem [shape: f32[16,32], index: 2, kind: input, shape index: {}]
  %s3 = inlined_call_operand.hbm [shape: f32[2,32], index: 3, kind: output, shape index: {}]
  %s4 = sld [smem:[#allocation0]]
  $region26: #{encoder_forward.1} parent=0
    _
  %s6 = ssub.s32 1, %s4
  %s7 = scalar_select 0, %s6, %s4
  $region1: #{encoder_forward.1} parent=0
    #allocation2 [shape = 'u8[786432]{0}', space=vmem, size = 0xc0000, scoped, tag = 'input window, operand 0, single buffered']
    #allocation3 [shape = 's32[1]{0}', space=sflag, size = 0x4, scoped, tag = 'scoped memory for encoder_forward.1']
    #allocation4 [shape = 's32[1]{0}', space=sflag, size = 0x4, scoped, tag = 'scoped memory for encoder_forward.1']
    #allocation5 [shape = 'u8[1024]{0}', space=vmem, size = 0x400, scoped, tag = 'output window, operand 0, single buffered']
    %8 = vsyncpa [#allocation3], 0
    %9 = vsyncpa [#allocation4], 0
    // Predicated region
    $region2: #{encoder_forward.1} parent=1 // pred_check
      _
    $region3: #{encoder_forward.1} parent=1 // pred_check_branch
      %11 = sbr.rel (0) target = $region5
    $region4: #{encoder_forward.1} parent=1 // pred_region
      %s13 = ssub.s32 24576, 24576
      %14 = vsyncadd [#allocation3], %s13
      %s15 = sshll.u32 [#allocation2], 4
      %s16 = int_to_ptr.vmem [resolvable:$true] %s15
      %21 = dma.hbm_to_vmem [thread:$0]  %s0, 24576, %s16, [#allocation3], 128, 128, 8
    $region5: #{encoder_forward.1} parent=1 // pred_fallthru
      _
    // Predicated region
    $region6: #{encoder_forward.1} parent=1 // pred_check
      _
    $region7: #{encoder_forward.1} parent=1 // pred_check_branch
      %23 = sbr.rel (0) target = $region9
    $region8: #{encoder_forward.1} parent=1 // pred_region
      _
    $region9: #{encoder_forward.1} parent=1 // pred_fallthru
      _
    // Predicated region
    $region10: #{encoder_forward.1} parent=1 // pred_check
      _
    $region11: #{encoder_forward.1} parent=1 // pred_check_branch
      %25 = sbr.rel (0) target = $region13
    $region12: #{encoder_forward.1} parent=1 // pred_region
      _
    $region13: #{encoder_forward.1} parent=1 // pred_fallthru
      _
    // Predicated region
    $region14: #{encoder_forward.1} parent=1 // pred_check
      _
    $region15: #{encoder_forward.1} parent=1 // pred_check_branch
      %27 = sbr.rel (0) target = $region17
    $region16: #{encoder_forward.1} parent=1 // pred_region
      %28 = dma.done [#allocation3], 24576
    $region17: #{encoder_forward.1} parent=1 // pred_fallthru
      _
    %v29 = vld [vmem:[#allocation2] sm:$0xff]
    %v30 = vld [vmem:[#allocation2 + $0x8] sm:$0xff]
    %v31 = vld [vmem:[#allocation2 + $0x10] sm:$0xff]
    %v32 = vld [vmem:[#allocation2 + $0x18] sm:$0xff]
    %v33 = vld [vmem:[#allocation2 + $0x20] sm:$0xff]
    %v34 = vld [vmem:[#allocation2 + $0x28] sm:$0xff]
    %v35 = vld [vmem:[#allocation2 + $0x30] sm:$0xff]
    %v36 = vld [vmem:[#allocation2 + $0x38] sm:$0xff]
    %v37 = vld [vmem:[#allocation2 + $0x40] sm:$0xff]
    %v38 = vld [vmem:[#allocation2 + $0x48] sm:$0xff]
    %v39 = vld [vmem:[#allocation2 + $0x50] sm:$0xff]
    %v40 = vld [vmem:[#allocation2 + $0x58] sm:$0xff]
    %v41 = vld [vmem:[#allocation2 + $0x60] sm:$0xff]
    %v42 = vld [vmem:[#allocation2 + $0x68] sm:$0xff]
    %v43 = vld [vmem:[#allocation2 + $0x70] sm:$0xff]
    %v44 = vld [vmem:[#allocation2 + $0x78] sm:$0xff]
    %v45 = vld [vmem:[#allocation2 + $0x80] sm:$0xff]
    %v46 = vld [vmem:[#allocation2 + $0x88] sm:$0xff]
    %v47 = vld [vmem:[#allocation2 + $0x90] sm:$0xff]
    %v48 = vld [vmem:[#allocation2 + $0x98] sm:$0xff]
    %v49 = vld [vmem:[#allocation2 + $0xa0] sm:$0xff]
    %v50 = vld [vmem:[#allocation2 + $0xa8] sm:$0xff]
    %v51 = vld [vmem:[#allocation2 + $0xb0] sm:$0xff]
    %v52 = vld [vmem:[#allocation2 + $0xb8] sm:$0xff]
    %v53 = vld [vmem:[#allocation2 + $0xc0] sm:$0x1]
    %v54 = vld [vmem:[#allocation2 + $0xc8] sm:$0x1f]
    %v55 = vld [vmem:[#allocation2 + $0xd0] sm:$0x1]
    %v56 = vld [vmem:[#allocation2 + $0xd8] sm:$0x1]
    %v57 = vld [vmem:[#allocation2 + $0xe0] sm:$0xff]
    %v58 = vld [vmem:[#allocation2 + $0xe8] sm:$0xff]
    %v59 = vld [vmem:[#allocation2 + $0xf0] sm:$0xff]
    %v60 = vld [vmem:[#allocation2 + $0xf8] sm:$0xff]
    %v61 = vld [vmem:[#allocation2 + $0x100] sm:$0xff]
    %v62 = vld [vmem:[#allocation2 + $0x108] sm:$0xff]
    %v63 = vld [vmem:[#allocation2 + $0x110] sm:$0xff]
    %v64 = vld [vmem:[#allocation2 + $0x118] sm:$0xff]
    %v65 = vld [vmem:[#allocation2 + $0x120] sm:$0xff]
    %v66 = vld [vmem:[#allocation2 + $0x128] sm:$0xff]
    %v67 = vld [vmem:[#allocation2 + $0x130] sm:$0xff]
    %v68 = vld [vmem:[#allocation2 + $0x138] sm:$0xff]
    %v69 = vld [vmem:[#allocation2 + $0x140] sm:$0xff]
    %v70 = vld [vmem:[#allocation2 + $0x148] sm:$0xff]
    %v71 = vld [vmem:[#allocation2 + $0x150] sm:$0xff]
    %v72 = vld [vmem:[#allocation2 + $0x158] sm:$0xff]
    %v73 = vld [vmem:[#allocation2 + $0x160] sm:$0xff]
    %v74 = vld [vmem:[#allocation2 + $0x168] sm:$0xff]
    %v75 = vld [vmem:[#allocation2 + $0x170] sm:$0xff]
    %v76 = vld [vmem:[#allocation2 + $0x178] sm:$0xff]
    %v77 = vld [vmem:[#allocation2 + $0x180] sm:$0xff]
    %v78 = vld [vmem:[#allocation2 + $0x188] sm:$0xff]
    %v79 = vld [vmem:[#allocation2 + $0x190] sm:$0xff]
    %v80 = vld [vmem:[#allocation2 + $0x198] sm:$0xff]
    %v81 = vld [vmem:[#allocation2 + $0x1a0] sm:$0xff]
    %v82 = vld [vmem:[#allocation2 + $0x1a8] sm:$0xff]
    %v83 = vld [vmem:[#allocation2 + $0x1b0] sm:$0xff]
    %v84 = vld [vmem:[#allocation2 + $0x1b8] sm:$0xff]
    %v85 = vld [vmem:[#allocation2 + $0x1c0] sm:$0xff]
    %v86 = vld [vmem:[#allocation2 + $0x1c8] sm:$0xff]
    %v87 = vld [vmem:[#allocation2 + $0x1d0] sm:$0xff]
    %v88 = vld [vmem:[#allocation2 + $0x1d8] sm:$0xff]
    %v89 = vld [vmem:[#allocation2 + $0x1e0] sm:$0xff]
    %v90 = vld [vmem:[#allocation2 + $0x1e8] sm:$0xff]
    %v91 = vld [vmem:[#allocation2 + $0x1f0] sm:$0xff]
    %v92 = vld [vmem:[#allocation2 + $0x1f8] sm:$0xff]
    %v93 = vld [vmem:[%s1] sm:$0xff]
    %v94 = vld [vmem:[%s1 + $0x8] sm:$0xff]
    %vm95 = vcmask 523264
    %v97 = vsel %vm95, %v94, 0
    %99 = vmatprep.subr.mxu0 0.0
    %100 = vmatpush1.msra.mxu0 %v29
    %101 = vmatprep.subr.mxu0 0.0
    %102 = vmatpush1.msra.mxu0 %v30
    %103 = vmatprep.subr.mxu0 0.0
    %104 = vmatpush1.msra.mxu0 %v31
    %105 = vmatprep.subr.mxu0 0.0
    %106 = vmatpush1.msra.mxu0 %v32
    %107 = vmatprep.subr.mxu0 0.0
    %108 = vmatpush1.msra.mxu0 %v33
    %109 = vmatprep.subr.mxu0 0.0
    %110 = vmatpush1.msra.mxu0 %v34
    %111 = vmatprep.subr.mxu0 0.0
    %112 = vmatpush1.msra.mxu0 %v35
    %113 = vmatprep.subr.mxu0 0.0
    %114 = vmatpush1.msra.mxu0 %v36
    %115 = vmatprep.subr.mxu0 0.0
    %116 = vmatpush1.msra.mxu0 %v37
    %117 = vmatprep.subr.mxu0 0.0
    %118 = vmatpush1.msra.mxu0 %v38
    %119 = vmatprep.subr.mxu0 0.0
    %120 = vmatpush1.msra.mxu0 %v39
    %121 = vmatprep.subr.mxu0 0.0
    %122 = vmatpush1.msra.mxu0 %v40
    %123 = vmatprep.subr.mxu0 0.0
    %124 = vmatpush1.msra.mxu0 %v41
    %125 = vmatprep.subr.mxu0 0.0
    %126 = vmatpush1.msra.mxu0 %v42
    %127 = vmatprep.subr.mxu0 0.0
    %128 = vmatpush1.msra.mxu0 %v43
    %129 = vmatprep.subr.mxu0 0.0
    %130 = vmatpush1.msra.mxu0 %v44
    %131 = vmatprep.subr.mxu0 0.0
    %132 = vmatpush1.msra.mxu0 %v45
    %133 = vmatprep.subr.mxu0 0.0
    %134 = vmatpush1.msra.mxu0 %v46
    %135 = vmatprep.subr.mxu0 0.0
    %136 = vmatpush1.msra.mxu0 %v47
    %137 = vmatprep.subr.mxu0 0.0
    %138 = vmatpush1.msra.mxu0 %v48
    %139 = vmatprep.subr.mxu0 0.0
    %140 = vmatpush1.msra.mxu0 %v49
    %141 = vmatprep.subr.mxu0 0.0
    %142 = vmatpush1.msra.mxu0 %v50
    %143 = vmatprep.subr.mxu0 0.0
    %144 = vmatpush1.msra.mxu0 %v51
    %145 = vmatprep.subr.mxu0 0.0
    %146 = vmatpush1.msra.mxu0 %v52
    %147 = vmatprep.subr.mxu0 0.0
    %148 = vmatpush1.msra.mxu0 0.0
    %149 = vmatprep.subr.mxu0 0.0
    %150 = vmatpush1.msra.mxu0 0.0
    %151 = vmatprep.subr.mxu0 0.0
    %152 = vmatpush1.msra.mxu0 0.0
    %153 = vmatprep.subr.mxu0 0.0
    %154 = vmatpush1.msra.mxu0 0.0
    %155 = vmatprep.subr.mxu0 0.0
    %156 = vmatpush1.msra.mxu0 0.0
    %157 = vmatprep.subr.mxu0 0.0
    %158 = vmatpush1.msra.mxu0 0.0
    %159 = vmatprep.subr.mxu0 0.0
    %160 = vmatpush1.msra.mxu0 0.0
    %161 = vmatprep.subr.mxu0 0.0
    %162 = vmatpush1.msra.mxu0 0.0
    %163 = vmatprep.mubr.f32.mxu0 %v97
    %164 = vmatmul.mubr.f32.gmra.mrb[0].mxu0 %v93
    %v165 = vpop.f32.mrb[0].mxu0
    %v166 = vadd.f32 0.0, %v165
    %v167 = vpop.f32.mrb[0].mxu0
    %168 = vdwg.mxu0
    %v170 = vrot.slane %v166, 7
    %vm172 = vcmask 1040384
    %v173 = vsel %vm172, %v53, %v170
    %v174 = vadd.f32 %v173, %v54
    %vm175 = vcmask 258048
    %v176 = vsel %vm175, %v174, 0.0
    %177 = vadd.xlane.f32.xlu0 %v176
    %v178 = vpop.xlane.xlu0 %177
    %v179 = vrcp.pop 32.0
    %v180 = vmul.f32 %v178, %v179
    %v181 = vsub.f32 %v174, %v180
    %v182 = vmul.f32 %v181, %v181
    %v183 = vsel %vm175, %v182, 0.0
    %184 = vadd.xlane.f32.xlu0 %v183
    %v185 = vpop.xlane.xlu0 %184
    %v186 = vmul.f32 %v185, %v179
    %v187 = vadd.f32 %v186, 1e-05
    %v188 = vrsqrt.pop %v187
    %v189 = vmul.f32 %v181, %v188
    %v190 = vlaneseq
    %v191 = vshrl.u32 %v190, 7
    %v192 = vsub.s32 0, %v191
    %v193 = vrot.slane %v55, %v192
    %v194 = vmul.f32 %v189, %v193
    %v195 = vlaneseq
    %v196 = vshrl.u32 %v195, 7
    %v197 = vsub.s32 0, %v196
    %v198 = vrot.slane %v56, %v197
    %v199 = vadd.f32 %v194, %v198
    %v200 = vld [vmem:[%s2] sm:$0xff]
    %v201 = vrot.slane %v166, 3
    %v203 = vsel %vm172, %v53, %v201
    %v204 = vadd.f32 %v203, %v54
    %v205 = vsel %vm175, %v204, 0.0
    %206 = vadd.xlane.f32.xlu0 %v205
    %v207 = vpop.xlane.xlu0 %206
    %v208 = vmul.f32 %v207, %v179
    %v209 = vsub.f32 %v204, %v208
    %v210 = vmul.f32 %v209, %v209
    %v211 = vsel %vm175, %v210, 0.0
    %212 = vadd.xlane.f32.xlu0 %v211
    %v213 = vpop.xlane.xlu0 %212
    %v214 = vmul.f32 %v213, %v179
    %v215 = vadd.f32 %v214, 1e-05
    %v216 = vrsqrt.pop %v215
    %v217 = vmul.f32 %v209, %v216
    %v218 = vmul.f32 %v217, %v193
    %v219 = vadd.f32 %v218, %v198
    %v220 = vld [vmem:[%s2 + $0x8] sm:$0xff]
    %v222 = vrot.slane %v200, 3
    %v225 = vrot.slane %v220, 3
    %vm227 = vcmask 1044480
    %v228 = vsel %vm227, %v199, %v222
    %v229 = vsel %vm227, %v222, 0.0
    %v230 = vsel %vm227, %v219, %v225
    %v231 = vsel %vm227, %v225, 0.0
    %v232 = vld [vmem:[#allocation2 + $0x2a0] sm:$0x1]
    %v233 = vld [vmem:[#allocation2 + $0x2a8] sm:$0x1]
    %v234 = vld [vmem:[#allocation2 + $0x2b0] sm:$0xff]
    %v235 = vld [vmem:[#allocation2 + $0x2b8] sm:$0xff]
    %v236 = vld [vmem:[#allocation2 + $0x2c0] sm:$0xff]
    %v237 = vld [vmem:[#allocation2 + $0x2c8] sm:$0xff]
    %v238 = vld [vmem:[#allocation2 + $0x2d0] sm:$0x1]
    %v239 = vld [vmem:[#allocation2 + $0x2d8] sm:$0xff]
    %v240 = vld [vmem:[#allocation2 + $0x2e0] sm:$0xff]
    %v241 = vld [vmem:[#allocation2 + $0x2e8] sm:$0xff]
    %v242 = vld [vmem:[#allocation2 + $0x2f0] sm:$0xff]
    %v243 = vld [vmem:[#allocation2 + $0x2f8] sm:$0x1]
    %v244 = vld [vmem:[#allocation2 + $0x300] sm:$0x1]
    %v245 = vld [vmem:[#allocation2 + $0x308] sm:$0x1]
    %v246 = vld [vmem:[#allocation2 + $0x310] sm:$0xff]
    %v247 = vld [vmem:[#allocation2 + $0x318] sm:$0xff]
    %v248 = vld [vmem:[#allocation2 + $0x320] sm:$0xff]
    %v249 = vld [vmem:[#allocation2 + $0x328] sm:$0xff]
    %v250 = vld [vmem:[#allocation2 + $0x330] sm:$0x1]
    %v251 = vld [vmem:[#allocation2 + $0x338] sm:$0xff]
    %v252 = vld [vmem:[#allocation2 + $0x340] sm:$0xff]
    %v253 = vld [vmem:[#allocation2 + $0x348] sm:$0xff]
    %v254 = vld [vmem:[#allocation2 + $0x350] sm:$0xff]
    %v255 = vld [vmem:[#allocation2 + $0x358] sm:$0xff]
    %v256 = vld [vmem:[#allocation2 + $0x360] sm:$0xff]
    %v257 = vld [vmem:[#allocation2 + $0x368] sm:$0xff]
    %v258 = vld [vmem:[#allocation2 + $0x370] sm:$0xff]
    %v259 = vld [vmem:[#allocation2 + $0x378] sm:$0xff]
    %v260 = vld [vmem:[#allocation2 + $0x380] sm:$0xff]
    %v261 = vld [vmem:[#allocation2 + $0x388] sm:$0xff]
    %v262 = vld [vmem:[#allocation2 + $0x390] sm:$0xff]
    %v263 = vld [vmem:[#allocation2 + $0x398] sm:$0xff]
    %v264 = vld [vmem:[#allocation2 + $0x3a0] sm:$0xff]
    %v265 = vld [vmem:[#allocation2 + $0x3a8] sm:$0xff]
    %v266 = vld [vmem:[#allocation2 + $0x3b0] sm:$0xff]
    %v267 = vld [vmem:[#allocation2 + $0x3b8] sm:$0x1]
    %vm268 = vcmask 261120
    %v269 = vsel %vm268, %v228, 0.0
    %270 = vadd.xlane.f32.xlu0 %v269
    %v271 = vpop.xlane.xlu0 %270
    %v272 = vsel %vm268, %v229, 0.0
    %273 = vadd.xlane.f32.xlu0 %v272
    %v274 = vpop.xlane.xlu0 %273
    %v275 = vsel %vm268, %v230, 0.0
    %276 = vadd.xlane.f32.xlu0 %v275
    %v277 = vpop.xlane.xlu0 %276
    %v278 = vsel %vm268, %v231, 0.0
    %279 = vadd.xlane.f32.xlu0 %v278
    %v280 = vpop.xlane.xlu0 %279
    %v281 = vmul.f32 %v271, %v179
    %v282 = vmul.f32 %v274, %v179
    %v283 = vmul.f32 %v277, %v179
    %v284 = vmul.f32 %v280, %v179
    %v285 = vsub.f32 %v228, %v281
    %v286 = vsub.f32 %v229, %v282
    %v287 = vsub.f32 %v230, %v283
    %v288 = vsub.f32 %v231, %v284
    %v289 = vmul.f32 %v285, %v285
    %v290 = vmul.f32 %v286, %v286
    %v291 = vmul.f32 %v287, %v287
    %v292 = vmul.f32 %v288, %v288
    %v293 = vsel %vm268, %v289, 0.0
    %294 = vadd.xlane.f32.xlu0 %v293
    %v295 = vpop.xlane.xlu0 %294
    %v296 = vsel %vm268, %v290, 0.0
    %297 = vadd.xlane.f32.xlu0 %v296
    %v298 = vpop.xlane.xlu0 %297
    %v299 = vsel %vm268, %v291, 0.0
    %300 = vadd.xlane.f32.xlu0 %v299
    %v301 = vpop.xlane.xlu0 %300
    %v302 = vsel %vm268, %v292, 0.0
    %303 = vadd.xlane.f32.xlu0 %v302
    %v304 = vpop.xlane.xlu0 %303
    %v305 = vmul.f32 %v295, %v179
    %v306 = vmul.f32 %v298, %v179
    %v307 = vmul.f32 %v301, %v179
    %v308 = vmul.f32 %v304, %v179
    %v309 = vadd.f32 %v305, 1e-05
    %v310 = vadd.f32 %v306, 1e-05
    %v311 = vadd.f32 %v307, 1e-05
    %v312 = vadd.f32 %v308, 1e-05
    %v313 = vrsqrt.pop %v309
    %v314 = vrsqrt.pop %v310
    %v315 = vrsqrt.pop %v311
    %v316 = vrsqrt.pop %v312
    %v317 = vmul.f32 %v285, %v313
    %v318 = vmul.f32 %v286, %v314
    %v319 = vmul.f32 %v287, %v315
    %v320 = vmul.f32 %v288, %v316
    %v321 = vlaneseq
    %v322 = vshrl.u32 %v321, 7
    %v323 = vsub.s32 0, %v322
    %v324 = vrot.slane %v232, %v323
    %v325 = vmul.f32 %v317, %v324
    %v326 = vmul.f32 %v318, %v324
    %v327 = vmul.f32 %v319, %v324
    %v328 = vmul.f32 %v320, %v324
    %v329 = vlaneseq
    %v330 = vshrl.u32 %v329, 7
    %v331 = vsub.s32 0, %v330
    %v332 = vrot.slane %v233, %v331
    %v333 = vadd.f32 %v325, %v332
    %v334 = vadd.f32 %v326, %v332
    %v335 = vadd.f32 %v327, %v332
    %v336 = vadd.f32 %v328, %v332
    %v337 = vlaneseq
    %v338 = vshrl.u32 %v337, 7
    %v339 = vsub.s32 0, %v338
    %v340 = vrot.slane %v238, %v339
    %v342 = vsel %vm268, %v333, 0
    %v345 = vsel %vm268, %v334, 0
    %v348 = vsel %vm268, %v335, 0
    %v351 = vsel %vm268, %v336, 0
    %353 = vmatprep.subr.mxu0 0.0
    %354 = vmatpush1.msra.mxu0 %v234
    %355 = vmatprep.subr.mxu0 0.0
    %356 = vmatpush1.msra.mxu0 %v235
    %357 = vmatprep.subr.mxu0 0.0
    %358 = vmatpush1.msra.mxu0 %v236
    %359 = vmatprep.subr.mxu0 0.0
    %360 = vmatpush1.msra.mxu0 %v237
    %361 = vmatprep.subr.mxu0 0.0
    %362 = vmatpush1.msra.mxu0 0.0
    %363 = vmatprep.subr.mxu0 0.0
    %364 = vmatpush1.msra.mxu0 0.0
    %365 = vmatprep.subr.mxu0 0.0
    %366 = vmatpush1.msra.mxu0 0.0
    %367 = vmatprep.subr.mxu0 0.0
    %368 = vmatpush1.msra.mxu0 0.0
    %369 = vmatprep.subr.mxu0 0.0
    %370 = vmatpush1.msra.mxu0 0.0
    %371 = vmatprep.subr.mxu0 0.0
    %372 = vmatpush1.msra.mxu0 0.0
    %373 = vmatprep.subr.mxu0 0.0
    %374 = vmatpush1.msra.mxu0 0.0
    %375 = vmatprep.subr.mxu0 0.0
    %376 = vmatpush1.msra.mxu0 0.0
    %377 = vmatprep.subr.mxu0 0.0
    %378 = vmatpush1.msra.mxu0 0.0
    %379 = vmatprep.subr.mxu0 0.0
    %380 = vmatpush1.msra.mxu0 0.0
    %381 = vmatprep.subr.mxu0 0.0
    %382 = vmatpush1.msra.mxu0 0.0
    %383 = vmatprep.subr.mxu0 0.0
    %384 = vmatpush1.msra.mxu0 0.0
    %385 = vmatprep.subr.mxu0 0.0
    %386 = vmatpush1.msra.mxu0 0.0
    %387 = vmatprep.subr.mxu0 0.0
    %388 = vmatpush1.msra.mxu0 0.0
    %389 = vmatprep.subr.mxu0 0.0
    %390 = vmatpush1.msra.mxu0 0.0
    %391 = vmatprep.subr.mxu0 0.0
    %392 = vmatpush1.msra.mxu0 0.0
    %393 = vmatprep.subr.mxu0 0.0
    %394 = vmatpush1.msra.mxu0 0.0
    %395 = vmatprep.subr.mxu0 0.0
    %396 = vmatpush1.msra.mxu0 0.0
    %397 = vmatprep.subr.mxu0 0.0
    %398 = vmatpush1.msra.mxu0 0.0
    %399 = vmatprep.subr.mxu0 0.0
    %400 = vmatpush1.msra.mxu0 0.0
    %401 = vmatprep.subr.mxu0 0.0
    %402 = vmatpush1.msra.mxu0 0.0
    %403 = vmatprep.subr.mxu0 0.0
    %404 = vmatpush1.msra.mxu0 0.0
    %405 = vmatprep.subr.mxu0 0.0
    %406 = vmatpush1.msra.mxu0 0.0
    %407 = vmatprep.subr.mxu0 0.0
    %408 = vmatpush1.msra.mxu0 0.0
    %409 = vmatprep.subr.mxu0 0.0
    %410 = vmatpush1.msra.mxu0 0.0
    %411 = vmatprep.subr.mxu0 0.0
    %412 = vmatpush1.msra.mxu0 0.0
    %413 = vmatprep.subr.mxu0 0.0
    %414 = vmatpush1.msra.mxu0 0.0
    %415 = vmatprep.subr.mxu0 0.0
    %416 = vmatpush1.msra.mxu0 0.0
    %417 = vmatprep.mubr.f32.mxu0 0.0
    %418 = vmatmul.mubr.f32.gmra.mrb[0].mxu0 %v342
    %v419 = vpop.f32.mrb[0].mxu0
    %v420 = vadd.f32 %v340, %v419
    %v421 = vpop.f32.mrb[0].mxu0
    %422 = vmatprep.mubr.f32.mxu0 0.0
    %423 = vmatmul.mubr.f32.gmra.mrb[0].mxu0 %v345
    %v424 = vpop.f32.mrb[0].mxu0
    %v425 = vadd.f32 %v340, %v424
    %v426 = vpop.f32.mrb[0].mxu0
    %427 = vmatprep.mubr.f32.mxu0 0.0
    %428 = vmatmul.mubr.f32.gmra.mrb[0].mxu0 %v348
    %v429 = vpop.f32.mrb[0].mxu0
    %v430 = vadd.f32 %v340, %v429
    %v431 = vpop.f32.mrb[0].mxu0
    %432 = vmatprep.mubr.f32.mxu0 0.0
    %433 = vmatmul.mubr.f32.gmra.mrb[0].mxu0 %v351
    %v434 = vpop.f32.mrb[0].mxu0
    %v435 = vadd.f32 %v340, %v434
    %v436 = vpop.f32.mrb[0].mxu0
    %437 = vdwg.mxu0
    %454 = vrot.lane.b32.xlu0 %v61, 32
    %v455 = vpop.permute.xlu0 %454
    %456 = vrot.lane.b32.xlu0 %v62, 32
    %v457 = vpop.permute.xlu0 %456
    %458 = vrot.lane.b32.xlu0 %v63, 32
    %v459 = vpop.permute.xlu0 %458
    %460 = vrot.lane.b32.xlu0 %v64, 32
    %v461 = vpop.permute.xlu0 %460
    %462 = vrot.lane.b32.xlu0 %v65, 32
    %v463 = vpop.permute.xlu0 %462
    %464 = vrot.lane.b32.xlu0 %v66, 32
    %v465 = vpop.permute.xlu0 %464
    %466 = vrot.lane.b32.xlu0 %v67, 32
    %v467 = vpop.permute.xlu0 %466
    %468 = vrot.lane.b32.xlu0 %v68, 32
    %v469 = vpop.permute.xlu0 %468
    %470 = vrot.lane.b32.xlu0 %v69, 32
    %v471 = vpop.permute.xlu0 %470
    %472 = vrot.lane.b32.xlu0 %v70, 32
    %v473 = vpop.permute.xlu0 %472
    %474 = vrot.lane.b32.xlu0 %v71, 32
    %v475 = vpop.permute.xlu0 %474
    %476 = vrot.lane.b32.xlu0 %v72, 32
    %v477 = vpop.permute.xlu0 %476
    %478 = vrot.lane.b32.xlu0 %v73, 32
    %v479 = vpop.permute.xlu0 %478
    %480 = vrot.lane.b32.xlu0 %v74, 32
    %v481 = vpop.permute.xlu0 %480
    %482 = vrot.lane.b32.xlu0 %v75, 32
    %v483 = vpop.permute.xlu0 %482
    %484 = vrot.lane.b32.xlu0 %v76, 32
    %v485 = vpop.permute.xlu0 %484
    %v502 = vmul.f32 %v420, %v455
    %v503 = vmul.f32 %v425, %v457
    %v504 = vmul.f32 %v430, %v459
    %v505 = vmul.f32 %v435, %v461
    %v506 = vmul.f32 %v420, %v463
    %v507 = vmul.f32 %v425, %v465
    %v508 = vmul.f32 %v430, %v467
    %v509 = vmul.f32 %v435, %v469
    %v510 = vmul.f32 %v420, %v471
    %v511 = vmul.f32 %v425, %v473
    %v512 = vmul.f32 %v430, %v475
    %v513 = vmul.f32 %v435, %v477
    %v514 = vmul.f32 %v420, %v479
    %v515 = vmul.f32 %v425, %v481
    %v516 = vmul.f32 %v430, %v483
    %v517 = vmul.f32 %v435, %v485
    %518 = vrot.lane.b32.xlu0 %v61, 64
    %v519 = vpop.permute.xlu0 %518
    %520 = vrot.lane.b32.xlu0 %v62, 64
    %v521 = vpop.permute.xlu0 %520
    %522 = vrot.lane.b32.xlu0 %v63, 64
    %v523 = vpop.permute.xlu0 %522
    %524 = vrot.lane.b32.xlu0 %v64, 64
    %v525 = vpop.permute.xlu0 %524
    %526 = vrot.lane.b32.xlu0 %v65, 64
    %v527 = vpop.permute.xlu0 %526
    %528 = vrot.lane.b32.xlu0 %v66, 64
    %v529 = vpop.permute.xlu0 %528
    %530 = vrot.lane.b32.xlu0 %v67, 64
    %v531 = vpop.permute.xlu0 %530
    %532 = vrot.lane.b32.xlu0 %v68, 64
    %v533 = vpop.permute.xlu0 %532
    %534 = vrot.lane.b32.xlu0 %v69, 64
    %v535 = vpop.permute.xlu0 %534
    %536 = vrot.lane.b32.xlu0 %v70, 64
    %v537 = vpop.permute.xlu0 %536
    %538 = vrot.lane.b32.xlu0 %v71, 64
    %v539 = vpop.permute.xlu0 %538
    %540 = vrot.lane.b32.xlu0 %v72, 64
    %v541 = vpop.permute.xlu0 %540
    %542 = vrot.lane.b32.xlu0 %v73, 64
    %v543 = vpop.permute.xlu0 %542
    %544 = vrot.lane.b32.xlu0 %v74, 64
    %v545 = vpop.permute.xlu0 %544
    %546 = vrot.lane.b32.xlu0 %v75, 64
    %v547 = vpop.permute.xlu0 %546
    %548 = vrot.lane.b32.xlu0 %v76, 64
    %v549 = vpop.permute.xlu0 %548
    %v566 = vmul.f32 %v420, %v519
    %v567 = vmul.f32 %v425, %v521
    %v568 = vmul.f32 %v430, %v523
    %v569 = vmul.f32 %v435, %v525
    %v570 = vmul.f32 %v420, %v527
    %v571 = vmul.f32 %v425, %v529
    %v572 = vmul.f32 %v430, %v531
    %v573 = vmul.f32 %v435, %v533
    %v574 = vmul.f32 %v420, %v535
    %v575 = vmul.f32 %v425, %v537
    %v576 = vmul.f32 %v430, %v539
    %v577 = vmul.f32 %v435, %v541
    %v578 = vmul.f32 %v420, %v543
    %v579 = vmul.f32 %v425, %v545
    %v580 = vmul.f32 %v430, %v547
    %v581 = vmul.f32 %v435, %v549
    %598 = vrot.lane.b32.xlu0 %v502, 96
    %v599 = vpop.permute.xlu0 %598
    %600 = vrot.lane.b32.xlu0 %v503, 96
    %v601 = vpop.permute.xlu0 %600
    %602 = vrot.lane.b32.xlu0 %v504, 96
    %v603 = vpop.permute.xlu0 %602
    %604 = vrot.lane.b32.xlu0 %v505, 96
    %v605 = vpop.permute.xlu0 %604
    %606 = vrot.lane.b32.xlu0 %v506, 96
    %v607 = vpop.permute.xlu0 %606
    %608 = vrot.lane.b32.xlu0 %v507, 96
    %v609 = vpop.permute.xlu0 %608
    %610 = vrot.lane.b32.xlu0 %v508, 96
    %v611 = vpop.permute.xlu0 %610
    %612 = vrot.lane.b32.xlu0 %v509, 96
    %v613 = vpop.permute.xlu0 %612
    %614 = vrot.lane.b32.xlu0 %v510, 96
    %v615 = vpop.permute.xlu0 %614
    %616 = vrot.lane.b32.xlu0 %v511, 96
    %v617 = vpop.permute.xlu0 %616
    %618 = vrot.lane.b32.xlu0 %v512, 96
    %v619 = vpop.permute.xlu0 %618
    %620 = vrot.lane.b32.xlu0 %v513, 96
    %v621 = vpop.permute.xlu0 %620
    %622 = vrot.lane.b32.xlu0 %v514, 96
    %v623 = vpop.permute.xlu0 %622
    %624 = vrot.lane.b32.xlu0 %v515, 96
    %v625 = vpop.permute.xlu0 %624
    %626 = vrot.lane.b32.xlu0 %v516, 96
    %v627 = vpop.permute.xlu0 %626
    %628 = vrot.lane.b32.xlu0 %v517, 96
    %v629 = vpop.permute.xlu0 %628
    %v631 = vsel %vm268, %v420, 0
    %v634 = vsel %vm268, %v425, 0
    %v637 = vsel %vm268, %v430, 0
    %v640 = vsel %vm268, %v435, 0
    %v642 = vsel %vm268, %v599, 0
    %v644 = vsel %vm268, %v601, 0
    %v646 = vsel %vm268, %v603, 0
    %v648 = vsel %vm268, %v605, 0
    %v650 = vsel %vm268, %v607, 0
    %v652 = vsel %vm268, %v609, 0
    %v654 = vsel %vm268, %v611, 0
    %v656 = vsel %vm268, %v613, 0
    %v658 = vsel %vm268, %v615, 0
    %v660 = vsel %vm268, %v617, 0
    %v662 = vsel %vm268, %v619, 0
    %v664 = vsel %vm268, %v621, 0
    %v666 = vsel %vm268, %v623, 0
    %v668 = vsel %vm268, %v625, 0
    %v670 = vsel %vm268, %v627, 0
    %v672 = vsel %vm268, %v629, 0
    %674 = vmatprep.subr.mxu0 0.0
    %675 = vmatpush1.xpose.msra.mxu0 %v642
    %676 = vmatprep.subr.mxu0 0.0
    %677 = vmatpush1.xpose.msra.mxu0 %v644
    %678 = vmatprep.subr.mxu0 0.0
    %679 = vmatpush1.xpose.msra.mxu0 %v646
    %680 = vmatprep.subr.mxu0 0.0
    %681 = vmatpush1.xpose.msra.mxu0 %v648
    %682 = vmatprep.subr.mxu0 0.0
    %683 = vmatpush1.xpose.msra.mxu0 %v650
    %684 = vmatprep.subr.mxu0 0.0
    %685 = vmatpush1.xpose.msra.mxu0 %v652
    %686 = vmatprep.subr.mxu0 0.0
    %687 = vmatpush1.xpose.msra.mxu0 %v654
    %688 = vmatprep.subr.mxu0 0.0
    %689 = vmatpush1.xpose.msra.mxu0 %v656
    %690 = vmatprep.subr.mxu0 0.0
    %691 = vmatpush1.xpose.msra.mxu0 %v658
    %692 = vmatprep.subr.mxu0 0.0
    %693 = vmatpush1.xpose.msra.mxu0 %v660
    %694 = vmatprep.subr.mxu0 0.0
    %695 = vmatpush1.xpose.msra.mxu0 %v662
    %696 = vmatprep.subr.mxu0 0.0
    %697 = vmatpush1.xpose.msra.mxu0 %v664
    %698 = vmatprep.subr.mxu0 0.0
    %699 = vmatpush1.xpose.msra.mxu0 %v666
    %700 = vmatprep.subr.mxu0 0.0
    %701 = vmatpush1.xpose.msra.mxu0 %v668
    %702 = vmatprep.subr.mxu0 0.0
    %703 = vmatpush1.xpose.msra.mxu0 %v670
    %704 = vmatprep.subr.mxu0 0.0
    %705 = vmatpush1.xpose.msra.mxu0 %v672
    %706 = vmatprep.subr.mxu0 0.0
    %707 = vmatpush1.xpose.msra.mxu0 0.0
    %708 = vmatprep.subr.mxu0 0.0
    %709 = vmatpush1.xpose.msra.mxu0 0.0
    %710 = vmatprep.subr.mxu0 0.0
    %711 = vmatpush1.xpose.msra.mxu0 0.0
    %712 = vmatprep.subr.mxu0 0.0
    %713 = vmatpush1.xpose.msra.mxu0 0.0
    %714 = vmatprep.subr.mxu0 0.0
    %715 = vmatpush1.xpose.msra.mxu0 0.0
    %716 = vmatprep.subr.mxu0 0.0
    %717 = vmatpush1.xpose.msra.mxu0 0.0
    %718 = vmatprep.subr.mxu0 0.0
    %719 = vmatpush1.xpose.msra.mxu0 0.0
    %720 = vmatprep.subr.mxu0 0.0
    %721 = vmatpush1.xpose.msra.mxu0 0.0
    %722 = vmatprep.subr.mxu0 0.0
    %723 = vmatpush1.xpose.msra.mxu0 0.0
    %724 = vmatprep.subr.mxu0 0.0
    %725 = vmatpush1.xpose.msra.mxu0 0.0
    %726 = vmatprep.subr.mxu0 0.0
    %727 = vmatpush1.xpose.msra.mxu0 0.0
    %728 = vmatprep.subr.mxu0 0.0
    %729 = vmatpush1.xpose.msra.mxu0 0.0
    %730 = vmatprep.subr.mxu0 0.0
    %731 = vmatpush1.xpose.msra.mxu0 0.0
    %732 = vmatprep.subr.mxu0 0.0
    %733 = vmatpush1.xpose.msra.mxu0 0.0
    %734 = vmatprep.subr.mxu0 0.0
    %735 = vmatpush1.xpose.msra.mxu0 0.0
    %736 = vmatprep.subr.mxu0 0.0
    %737 = vmatpush1.xpose.msra.mxu0 0.0
    %738 = vmatprep.mubr.f32.mxu0 0.0
    %739 = vmatmul.mubr.f32.gmra.mrb[0].mxu0 %v631
    %v740 = vpop.f32.mrb[0].mxu0
    %v741 = vadd.f32 %v57, %v740
    %v742 = vpop.f32.mrb[0].mxu0
    %743 = vmatprep.mubr.f32.mxu0 0.0
    %744 = vmatmul.mubr.f32.gmra.mrb[0].mxu0 %v634
    %v745 = vpop.f32.mrb[0].mxu0
    %v746 = vadd.f32 %v58, %v745
    %v747 = vpop.f32.mrb[0].mxu0
    %748 = vmatprep.mubr.f32.mxu0 0.0
    %749 = vmatmul.mubr.f32.gmra.mrb[0].mxu0 %v637
    %v750 = vpop.f32.mrb[0].mxu0
    %v751 = vadd.f32 %v59, %v750
    %v752 = vpop.f32.mrb[0].mxu0
    %753 = vmatprep.mubr.f32.mxu0 0.0
    %754 = vmatmul.mubr.f32.gmra.mrb[0].mxu0 %v640
    %v755 = vpop.f32.mrb[0].mxu0
    %v756 = vadd.f32 %v60, %v755
    %v757 = vpop.f32.mrb[0].mxu0
    %758 = vdwg.mxu0
    %759 = vmax.xlane.f32.xlu0 %v741
    %v760 = vpop.xlane.xlu0 %759
    %761 = vmax.xlane.f32.xlu0 %v746
    %v762 = vpop.xlane.xlu0 %761
    %763 = vmax.xlane.f32.xlu0 %v751
    %v764 = vpop.xlane.xlu0 %763
    %765 = vmax.xlane.f32.xlu0 %v756
    %v766 = vpop.xlane.xlu0 %765
    %v767 = vsub.f32 %v741, %v760
    %v768 = vsub.f32 %v746, %v762
    %v769 = vsub.f32 %v751, %v764
    %v770 = vsub.f32 %v756, %v766
    %v771 = vmul.f32 %v767, 1.442695
    %v772 = vpow.pop %v771
    %v773 = vmul.f32 %v768, 1.442695
    %v774 = vpow.pop %v773
    %v775 = vmul.f32 %v769, 1.442695
    %v776 = vpow.pop %v775
    %v777 = vmul.f32 %v770, 1.442695
    %v778 = vpow.pop %v777
    %779 = vmatprep.subr.mxu0 0.0
    %780 = vmatpush1.msra.mxu0 %v77
    %781 = vmatprep.subr.mxu0 0.0
    %782 = vmatpush1.msra.mxu0 %v78
    %783 = vmatprep.subr.mxu0 0.0
    %784 = vmatpush1.msra.mxu0 %v79
    %785 = vmatprep.subr.mxu0 0.0
    %786 = vmatpush1.msra.mxu0 %v80
    %787 = vmatprep.subr.mxu0 0.0
    %788 = vmatpush1.msra.mxu0 %v81
    %789 = vmatprep.subr.mxu0 0.0
    %790 = vmatpush1.msra.mxu0 %v82
    %791 = vmatprep.subr.mxu0 0.0
    %792 = vmatpush1.msra.mxu0 %v83
    %793 = vmatprep.subr.mxu0 0.0
    %794 = vmatpush1.msra.mxu0 %v84
    %795 = vmatprep.subr.mxu0 0.0
    %796 = vmatpush1.msra.mxu0 %v85
    %797 = vmatprep.subr.mxu0 0.0
    %798 = vmatpush1.msra.mxu0 %v86
    %799 = vmatprep.subr.mxu0 0.0
    %800 = vmatpush1.msra.mxu0 %v87
    %801 = vmatprep.subr.mxu0 0.0
    %802 = vmatpush1.msra.mxu0 %v88
    %803 = vmatprep.subr.mxu0 0.0
    %804 = vmatpush1.msra.mxu0 %v89
    %805 = vmatprep.subr.mxu0 0.0
    %806 = vmatpush1.msra.mxu0 %v90
    %807 = vmatprep.subr.mxu0 0.0
    %808 = vmatpush1.msra.mxu0 %v91
    %809 = vmatprep.subr.mxu0 0.0
    %810 = vmatpush1.msra.mxu0 %v92
    %811 = vmatprep.subr.mxu0 0.0
    %812 = vmatpush1.msra.mxu0 0.0
    %813 = vmatprep.subr.mxu0 0.0
    %814 = vmatpush1.msra.mxu0 0.0
    %815 = vmatprep.subr.mxu0 0.0
    %816 = vmatpush1.msra.mxu0 0.0
    %817 = vmatprep.subr.mxu0 0.0
    %818 = vmatpush1.msra.mxu0 0.0
    %819 = vmatprep.subr.mxu0 0.0
    %820 = vmatpush1.msra.mxu0 0.0
    %821 = vmatprep.subr.mxu0 0.0
    %822 = vmatpush1.msra.mxu0 0.0
    %823 = vmatprep.subr.mxu0 0.0
    %824 = vmatpush1.msra.mxu0 0.0
    %825 = vmatprep.subr.mxu0 0.0
    %826 = vmatpush1.msra.mxu0 0.0
    %827 = vmatprep.subr.mxu0 0.0
    %828 = vmatpush1.msra.mxu0 0.0
    %829 = vmatprep.subr.mxu0 0.0
    %830 = vmatpush1.msra.mxu0 0.0
    %831 = vmatprep.subr.mxu0 0.0
    %832 = vmatpush1.msra.mxu0 0.0
    %833 = vmatprep.subr.mxu0 0.0
    %834 = vmatpush1.msra.mxu0 0.0
    %835 = vmatprep.subr.mxu0 0.0
    %836 = vmatpush1.msra.mxu0 0.0
    %837 = vmatprep.subr.mxu0 0.0
    %838 = vmatpush1.msra.mxu0 0.0
    %839 = vmatprep.subr.mxu0 0.0
    %840 = vmatpush1.msra.mxu0 0.0
    %841 = vmatprep.subr.mxu0 0.0
    %842 = vmatpush1.msra.mxu0 0.0
    %843 = vmatprep.mubr.f32.mxu0 0.0
    %844 = vmatmul.mubr.f32.gmra.mrb[0].mxu0 %v772
    %v845 = vpop.f32.mrb[0].mxu0
    %v846 = vadd.f32 0.0, %v845
    %v847 = vpop.f32.mrb[0].mxu0
    %848 = vmatprep.mubr.f32.mxu0 0.0
    %849 = vmatmul.mubr.f32.gmra.mrb[0].mxu0 %v774
    %v850 = vpop.f32.mrb[0].mxu0
    %v851 = vadd.f32 0.0, %v850
    %v852 = vpop.f32.mrb[0].mxu0
    %853 = vmatprep.mubr.f32.mxu0 0.0
    %854 = vmatmul.mubr.f32.gmra.mrb[0].mxu0 %v776
    %v855 = vpop.f32.mrb[0].mxu0
    %v856 = vadd.f32 0.0, %v855
    %v857 = vpop.f32.mrb[0].mxu0
    %858 = vmatprep.mubr.f32.mxu0 0.0
    %859 = vmatmul.mubr.f32.gmra.mrb[0].mxu0 %v778
    %v860 = vpop.f32.mrb[0].mxu0
    %v861 = vadd.f32 0.0, %v860
    %v862 = vpop.f32.mrb[0].mxu0
    %863 = vdwg.mxu0
    %vm864 = vcmp.gt.f32.partialorder %v846, 0.0
    %vm865 = vcmp.gt.f32.partialorder %v851, 0.0
    %vm866 = vcmp.gt.f32.partialorder %v856, 0.0
    %vm867 = vcmp.gt.f32.partialorder %v861, 0.0
    %v868 = vrcp.pop %v846
    %v869 = vmul.f32 %v772, %v868
    %v870 = vrcp.pop %v851
    %v871 = vmul.f32 %v774, %v870
    %v872 = vrcp.pop %v856
    %v873 = vmul.f32 %v776, %v872
    %v874 = vrcp.pop %v861
    %v875 = vmul.f32 %v778, %v874
    %v876 = vsel %vm864, %v869, 0.0
    %v877 = vsel %vm865, %v871, 0.0
    %v878 = vsel %vm866, %v873, 0.0
    %v879 = vsel %vm867, %v875, 0.0
    %896 = vrot.lane.b32.xlu0 %v566, 64
    %v897 = vpop.permute.xlu0 %896
    %898 = vrot.lane.b32.xlu0 %v567, 64
    %v899 = vpop.permute.xlu0 %898
    %900 = vrot.lane.b32.xlu0 %v568, 64
    %v901 = vpop.permute.xlu0 %900
    %902 = vrot.lane.b32.xlu0 %v569, 64
    %v903 = vpop.permute.xlu0 %902
    %904 = vrot.lane.b32.xlu0 %v570, 64
    %v905 = vpop.permute.xlu0 %904
    %906 = vrot.lane.b32.xlu0 %v571, 64
    %v907 = vpop.permute.xlu0 %906
    %908 = vrot.lane.b32.xlu0 %v572, 64
    %v909 = vpop.permute.xlu0 %908
    %910 = vrot.lane.b32.xlu0 %v573, 64
    %v911 = vpop.permute.xlu0 %910
    %912 = vrot.lane.b32.xlu0 %v574, 64
    %v913 = vpop.permute.xlu0 %912
    %914 = vrot.lane.b32.xlu0 %v575, 64
    %v915 = vpop.permute.xlu0 %914
    %916 = vrot.lane.b32.xlu0 %v576, 64
    %v917 = vpop.permute.xlu0 %916
    %918 = vrot.lane.b32.xlu0 %v577, 64
    %v919 = vpop.permute.xlu0 %918
    %920 = vrot.lane.b32.xlu0 %v578, 64
    %v921 = vpop.permute.xlu0 %920
    %922 = vrot.lane.b32.xlu0 %v579, 64
    %v923 = vpop.permute.xlu0 %922
    %924 = vrot.lane.b32.xlu0 %v580, 64
    %v925 = vpop.permute.xlu0 %924
    %926 = vrot.lane.b32.xlu0 %v581, 64
    %v927 = vpop.permute.xlu0 %926
    %944 = vmatprep.subr.mxu0 0.0
    %945 = vmatpush1.msra.mxu0 %v897
    %946 = vmatprep.subr.mxu0 0.0
    %947 = vmatpush1.msra.mxu0 %v899
    %948 = vmatprep.subr.mxu0 0.0
    %949 = vmatpush1.msra.mxu0 %v901
    %950 = vmatprep.subr.mxu0 0.0
    %951 = vmatpush1.msra.mxu0 %v903
    %952 = vmatprep.subr.mxu0 0.0
    %953 = vmatpush1.msra.mxu0 %v905
    %954 = vmatprep.subr.mxu0 0.0
    %955 = vmatpush1.msra.mxu0 %v907
    %956 = vmatprep.subr.mxu0 0.0
    %957 = vmatpush1.msra.mxu0 %v909
    %958 = vmatprep.subr.mxu0 0.0
    %959 = vmatpush1.msra.mxu0 %v911
    %960 = vmatprep.subr.mxu0 0.0
    %961 = vmatpush1.msra.mxu0 %v913
    %962 = vmatprep.subr.mxu0 0.0
    %963 = vmatpush1.msra.mxu0 %v915
    %964 = vmatprep.subr.mxu0 0.0
    %965 = vmatpush1.msra.mxu0 %v917
    %966 = vmatprep.subr.mxu0 0.0
    %967 = vmatpush1.msra.mxu0 %v919
    %968 = vmatprep.subr.mxu0 0.0
    %969 = vmatpush1.msra.mxu0 %v921
    %970 = vmatprep.subr.mxu0 0.0
    %971 = vmatpush1.msra.mxu0 %v923
    %972 = vmatprep.subr.mxu0 0.0
    %973 = vmatpush1.msra.mxu0 %v925
    %974 = vmatprep.subr.mxu0 0.0
    %975 = vmatpush1.msra.mxu0 %v927
    %976 = vmatprep.subr.mxu0 0.0
    %977 = vmatpush1.msra.mxu0 0.0
    %978 = vmatprep.subr.mxu0 0.0
    %979 = vmatpush1.msra.mxu0 0.0
    %980 = vmatprep.subr.mxu0 0.0
    %981 = vmatpush1.msra.mxu0 0.0
    %982 = vmatprep.subr.mxu0 0.0
    %983 = vmatpush1.msra.mxu0 0.0
    %984 = vmatprep.subr.mxu0 0.0
    %985 = vmatpush1.msra.mxu0 0.0
    %986 = vmatprep.subr.mxu0 0.0
    %987 = vmatpush1.msra.mxu0 0.0
    %988 = vmatprep.subr.mxu0 0.0
    %989 = vmatpush1.msra.mxu0 0.0
    %990 = vmatprep.subr.mxu0 0.0
    %991 = vmatpush1.msra.mxu0 0.0
    %992 = vmatprep.subr.mxu0 0.0
    %993 = vmatpush1.msra.mxu0 0.0
    %994 = vmatprep.subr.mxu0 0.0
    %995 = vmatpush1.msra.mxu0 0.0
    %996 = vmatprep.subr.mxu0 0.0
    %997 = vmatpush1.msra.mxu0 0.0
    %998 = vmatprep.subr.mxu0 0.0
    %999 = vmatpush1.msra.mxu0 0.0
    %1000 = vmatprep.subr.mxu0 0.0
    %1001 = vmatpush1.msra.mxu0 0.0
    %1002 = vmatprep.subr.mxu0 0.0
    %1003 = vmatpush1.msra.mxu0 0.0
    %1004 = vmatprep.subr.mxu0 0.0
    %1005 = vmatpush1.msra.mxu0 0.0
    %1006 = vmatprep.subr.mxu0 0.0
    %1007 = vmatpush1.msra.mxu0 0.0
    %1008 = vmatprep.mubr.f32.mxu0 0.0
    %1009 = vmatmul.mubr.f32.gmra.mrb[0].mxu0 %v876
    %v1010 = vpop.f32.mrb[0].mxu0
    %v1011 = vadd.f32 0.0, %v1010
    %v1012 = vpop.f32.mrb[0].mxu0
    %1013 = vmatprep.mubr.f32.mxu0 0.0
    %1014 = vmatmul.mubr.f32.gmra.mrb[0].mxu0 %v877
    %v1015 = vpop.f32.mrb[0].mxu0
    %v1016 = vadd.f32 0.0, %v1015
    %v1017 = vpop.f32.mrb[0].mxu0
    %1018 = vmatprep.mubr.f32.mxu0 0.0
    %1019 = vmatmul.mubr.f32.gmra.mrb[0].mxu0 %v878
    %v1020 = vpop.f32.mrb[0].mxu0
    %v1021 = vadd.f32 0.0, %v1020
    %v1022 = vpop.f32.mrb[0].mxu0
    %1023 = vmatprep.mubr.f32.mxu0 0.0
    %1024 = vmatmul.mubr.f32.gmra.mrb[0].mxu0 %v879
    %v1025 = vpop.f32.mrb[0].mxu0
    %v1026 = vadd.f32 0.0, %v1025
    %v1027 = vpop.f32.mrb[0].mxu0
    %1028 = vdwg.mxu0
    %v1030 = vsel %vm268, %v1011, 0
    %v1033 = vsel %vm268, %v1016, 0
    %v1036 = vsel %vm268, %v1021, 0
    %v1039 = vsel %vm268, %v1026, 0
    %1041 = vmatprep.subr.mxu0 0.0
    %1042 = vmatpush1.msra.mxu0 %v239
    %1043 = vmatprep.subr.mxu0 0.0
    %1044 = vmatpush1.msra.mxu0 %v240
    %1045 = vmatprep.subr.mxu0 0.0
    %1046 = vmatpush1.msra.mxu0 %v241
    %1047 = vmatprep.subr.mxu0 0.0
    %1048 = vmatpush1.msra.mxu0 %v242
    %1049 = vmatprep.subr.mxu0 0.0
    %1050 = vmatpush1.msra.mxu0 0.0
    %1051 = vmatprep.subr.mxu0 0.0
    %1052 = vmatpush1.msra.mxu0 0.0
    %1053 = vmatprep.subr.mxu0 0.0
    %1054 = vmatpush1.msra.mxu0 0.0
    %1055 = vmatprep.subr.mxu0 0.0
    %1056 = vmatpush1.msra.mxu0 0.0
    %1057 = vmatprep.subr.mxu0 0.0
    %1058 = vmatpush1.msra.mxu0 0.0
    %1059 = vmatprep.subr.mxu0 0.0
    %1060 = vmatpush1.msra.mxu0 0.0
    %1061 = vmatprep.subr.mxu0 0.0
    %1062 = vmatpush1.msra.mxu0 0.0
    %1063 = vmatprep.subr.mxu0 0.0
    %1064 = vmatpush1.msra.mxu0 0.0
    %1065 = vmatprep.subr.mxu0 0.0
    %1066 = vmatpush1.msra.mxu0 0.0
    %1067 = vmatprep.subr.mxu0 0.0
    %1068 = vmatpush1.msra.mxu0 0.0
    %1069 = vmatprep.subr.mxu0 0.0
    %1070 = vmatpush1.msra.mxu0 0.0
    %1071 = vmatprep.subr.mxu0 0.0
    %1072 = vmatpush1.msra.mxu0 0.0
    %1073 = vmatprep.subr.mxu0 0.0
    %1074 = vmatpush1.msra.mxu0 0.0
    %1075 = vmatprep.subr.mxu0 0.0
    %1076 = vmatpush1.msra.mxu0 0.0
    %1077 = vmatprep.subr.mxu0 0.0
    %1078 = vmatpush1.msra.mxu0 0.0
    %1079 = vmatprep.subr.mxu0 0.0
    %1080 = vmatpush1.msra.mxu0 0.0
    %1081 = vmatprep.subr.mxu0 0.0
    %1082 = vmatpush1.msra.mxu0 0.0
    %1083 = vmatprep.subr.mxu0 0.0
    %1084 = vmatpush1.msra.mxu0 0.0
    %1085 = vmatprep.subr.mxu0 0.0
    %1086 = vmatpush1.msra.mxu0 0.0
    %1087 = vmatprep.subr.mxu0 0.0
    %1088 = vmatpush1.msra.mxu0 0.0
    %1089 = vmatprep.subr.mxu0 0.0
    %1090 = vmatpush1.msra.mxu0 0.0
    %1091 = vmatprep.subr.mxu0 0.0
    %1092 = vmatpush1.msra.mxu0 0.0
    %1093 = vmatprep.subr.mxu0 0.0
    %1094 = vmatpush1.msra.mxu0 0.0
    %1095 = vmatprep.subr.mxu0 0.0
    %1096 = vmatpush1.msra.mxu0 0.0
    %1097 = vmatprep.subr.mxu0 0.0
    %1098 = vmatpush1.msra.mxu0 0.0
    %1099 = vmatprep.subr.mxu0 0.0
    %1100 = vmatpush1.msra.mxu0 0.0
    %1101 = vmatprep.subr.mxu0 0.0
    %1102 = vmatpush1.msra.mxu0 0.0
    %1103 = vmatprep.subr.mxu0 0.0
    %1104 = vmatpush1.msra.mxu0 0.0
    %1105 = vmatprep.mubr.f32.mxu0 0.0
    %1106 = vmatmul.mubr.f32.gmra.mrb[0].mxu0 %v1030
    %v1107 = vpop.f32.mrb[0].mxu0
    %v1108 = vadd.f32 0.0, %v1107
    %v1109 = vpop.f32.mrb[0].mxu0
    %1110 = vmatprep.mubr.f32.mxu0 0.0
    %1111 = vmatmul.mubr.f32.gmra.mrb[0].mxu0 %v1033
    %v1112 = vpop.f32.mrb[0].mxu0
    %v1113 = vadd.f32 0.0, %v1112
    %v1114 = vpop.f32.mrb[0].mxu0
    %1115 = vmatprep.mubr.f32.mxu0 0.0
    %1116 = vmatmul.mubr.f32.gmra.mrb[0].mxu0 %v1036
    %v1117 = vpop.f32.mrb[0].mxu0
    %v1118 = vadd.f32 0.0, %v1117
    %v1119 = vpop.f32.mrb[0].mxu0
    %1120 = vmatprep.mubr.f32.mxu0 0.0
    %1121 = vmatmul.mubr.f32.gmra.mrb[0].mxu0 %v1039
    %v1122 = vpop.f32.mrb[0].mxu0
    %v1123 = vadd.f32 0.0, %v1122
    %v1124 = vpop.f32.mrb[0].mxu0
    %1125 = vdwg.mxu0
    %v1126 = vadd.f32 %v228, %v1108
    %v1127 = vadd.f32 %v229, %v1113
    %v1128 = vadd.f32 %v230, %v1118
    %v1129 = vadd.f32 %v231, %v1123
    %v1130 = vlaneseq
    %v1131 = vshrl.u32 %v1130, 7
    %v1132 = vsub.s32 0, %v1131
    %v1133 = vrot.slane %v243, %v1132
    %v1134 = vadd.f32 %v1126, %v1133
    %v1135 = vadd.f32 %v1127, %v1133
    %v1136 = vadd.f32 %v1128, %v1133
    %v1137 = vadd.f32 %v1129, %v1133
    %v1138 = vsel %vm268, %v1134, 0.0
    %1139 = vadd.xlane.f32.xlu0 %v1138
    %v1140 = vpop.xlane.xlu0 %1139
    %v1141 = vsel %vm268, %v1135, 0.0
    %1142 = vadd.xlane.f32.xlu0 %v1141
    %v1143 = vpop.xlane.xlu0 %1142
    %v1144 = vsel %vm268, %v1136, 0.0
    %1145 = vadd.xlane.f32.xlu0 %v1144
    %v1146 = vpop.xlane.xlu0 %1145
    %v1147 = vsel %vm268, %v1137, 0.0
    %1148 = vadd.xlane.f32.xlu0 %v1147
    %v1149 = vpop.xlane.xlu0 %1148
    %v1150 = vmul.f32 %v1140, %v179
    %v1151 = vmul.f32 %v1143, %v179
    %v1152 = vmul.f32 %v1146, %v179
    %v1153 = vmul.f32 %v1149, %v179
    %v1154 = vsub.f32 %v1134, %v1150
    %v1155 = vsub.f32 %v1135, %v1151
    %v1156 = vsub.f32 %v1136, %v1152
    %v1157 = vsub.f32 %v1137, %v1153
    %v1158 = vmul.f32 %v1154, %v1154
    %v1159 = vmul.f32 %v1155, %v1155
    %v1160 = vmul.f32 %v1156, %v1156
    %v1161 = vmul.f32 %v1157, %v1157
    %v1162 = vsel %vm268, %v1158, 0.0
    %1163 = vadd.xlane.f32.xlu0 %v1162
    %v1164 = vpop.xlane.xlu0 %1163
    %v1165 = vsel %vm268, %v1159, 0.0
    %1166 = vadd.xlane.f32.xlu0 %v1165
    %v1167 = vpop.xlane.xlu0 %1166
    %v1168 = vsel %vm268, %v1160, 0.0
    %1169 = vadd.xlane.f32.xlu0 %v1168
    %v1170 = vpop.xlane.xlu0 %1169
    %v1171 = vsel %vm268, %v1161, 0.0
    %1172 = vadd.xlane.f32.xlu0 %v1171
    %v1173 = vpop.xlane.xlu0 %1172
    %v1174 = vmul.f32 %v1164, %v179
    %v1175 = vmul.f32 %v1167, %v179
    %v1176 = vmul.f32 %v1170, %v179
    %v1177 = vmul.f32 %v1173, %v179
    %v1178 = vadd.f32 %v1174, 1e-05
    %v1179 = vadd.f32 %v1175, 1e-05
    %v1180 = vadd.f32 %v1176, 1e-05
    %v1181 = vadd.f32 %v1177, 1e-05
    %v1182 = vrsqrt.pop %v1178
    %v1183 = vrsqrt.pop %v1179
    %v1184 = vrsqrt.pop %v1180
    %v1185 = vrsqrt.pop %v1181
    %v1186 = vmul.f32 %v1154, %v1182
    %v1187 = vmul.f32 %v1155, %v1183
    %v1188 = vmul.f32 %v1156, %v1184
    %v1189 = vmul.f32 %v1157, %v1185
    %v1190 = vlaneseq
    %v1191 = vshrl.u32 %v1190, 7
    %v1192 = vsub.s32 0, %v1191
    %v1193 = vrot.slane %v244, %v1192
    %v1194 = vmul.f32 %v1186, %v1193
    %v1195 = vmul.f32 %v1187, %v1193
    %v1196 = vmul.f32 %v1188, %v1193
    %v1197 = vmul.f32 %v1189, %v1193
    %v1198 = vlaneseq
    %v1199 = vshrl.u32 %v1198, 7
    %v1200 = vsub.s32 0, %v1199
    %v1201 = vrot.slane %v245, %v1200
    %v1202 = vadd.f32 %v1194, %v1201
    %v1203 = vadd.f32 %v1195, %v1201
    %v1204 = vadd.f32 %v1196, %v1201
    %v1205 = vadd.f32 %v1197, %v1201
    %v1206 = vlaneseq
    %v1207 = vshrl.u32 %v1206, 7
    %v1208 = vsub.s32 0, %v1207
    %v1209 = vrot.slane %v250, %v1208
    %v1211 = vsel %vm268, %v1202, 0
    %v1214 = vsel %vm268, %v1203, 0
    %v1217 = vsel %vm268, %v1204, 0
    %v1220 = vsel %vm268, %v1205, 0
    %1222 = vmatprep.subr.mxu0 0.0
    %1223 = vmatpush1.msra.mxu0 %v246
    %1224 = vmatprep.subr.mxu0 0.0
    %1225 = vmatpush1.msra.mxu0 %v247
    %1226 = vmatprep.subr.mxu0 0.0
    %1227 = vmatpush1.msra.mxu0 %v248
    %1228 = vmatprep.subr.mxu0 0.0
    %1229 = vmatpush1.msra.mxu0 %v249
    %1230 = vmatprep.subr.mxu0 0.0
    %1231 = vmatpush1.msra.mxu0 0.0
    %1232 = vmatprep.subr.mxu0 0.0
    %1233 = vmatpush1.msra.mxu0 0.0
    %1234 = vmatprep.subr.mxu0 0.0
    %1235 = vmatpush1.msra.mxu0 0.0
    %1236 = vmatprep.subr.mxu0 0.0
    %1237 = vmatpush1.msra.mxu0 0.0
    %1238 = vmatprep.subr.mxu0 0.0
    %1239 = vmatpush1.msra.mxu0 0.0
    %1240 = vmatprep.subr.mxu0 0.0
    %1241 = vmatpush1.msra.mxu0 0.0
    %1242 = vmatprep.subr.mxu0 0.0
    %1243 = vmatpush1.msra.mxu0 0.0
    %1244 = vmatprep.subr.mxu0 0.0
    %1245 = vmatpush1.msra.mxu0 0.0
    %1246 = vmatprep.subr.mxu0 0.0
    %1247 = vmatpush1.msra.mxu0 0.0
    %1248 = vmatprep.subr.mxu0 0.0
    %1249 = vmatpush1.msra.mxu0 0.0
    %1250 = vmatprep.subr.mxu0 0.0
    %1251 = vmatpush1.msra.mxu0 0.0
    %1252 = vmatprep.subr.mxu0 0.0
    %1253 = vmatpush1.msra.mxu0 0.0
    %1254 = vmatprep.subr.mxu0 0.0
    %1255 = vmatpush1.msra.mxu0 0.0
    %1256 = vmatprep.subr.mxu0 0.0
    %1257 = vmatpush1.msra.mxu0 0.0
    %1258 = vmatprep.subr.mxu0 0.0
    %1259 = vmatpush1.msra.mxu0 0.0
    %1260 = vmatprep.subr.mxu0 0.0
    %1261 = vmatpush1.msra.mxu0 0.0
    %1262 = vmatprep.subr.mxu0 0.0
    %1263 = vmatpush1.msra.mxu0 0.0
    %1264 = vmatprep.subr.mxu0 0.0
    %1265 = vmatpush1.msra.mxu0 0.0
    %1266 = vmatprep.subr.mxu0 0.0
    %1267 = vmatpush1.msra.mxu0 0.0
    %1268 = vmatprep.subr.mxu0 0.0
    %1269 = vmatpush1.msra.mxu0 0.0
    %1270 = vmatprep.subr.mxu0 0.0
    %1271 = vmatpush1.msra.mxu0 0.0
    %1272 = vmatprep.subr.mxu0 0.0
    %1273 = vmatpush1.msra.mxu0 0.0
    %1274 = vmatprep.subr.mxu0 0.0
    %1275 = vmatpush1.msra.mxu0 0.0
    %1276 = vmatprep.subr.mxu0 0.0
    %1277 = vmatpush1.msra.mxu0 0.0
    %1278 = vmatprep.subr.mxu0 0.0
    %1279 = vmatpush1.msra.mxu0 0.0
    %1280 = vmatprep.subr.mxu0 0.0
    %1281 = vmatpush1.msra.mxu0 0.0
    %1282 = vmatprep.subr.mxu0 0.0
    %1283 = vmatpush1.msra.mxu0 0.0
    %1284 = vmatprep.subr.mxu0 0.0
    %1285 = vmatpush1.msra.mxu0 0.0
    %1286 = vmatprep.mubr.f32.mxu0 0.0
    %1287 = vmatmul.mubr.f32.gmra.mrb[0].mxu0 %v1211
    %v1288 = vpop.f32.mrb[0].mxu0
    %v1289 = vadd.f32 %v1209, %v1288
    %v1290 = vpop.f32.mrb[0].mxu0
    %1291 = vmatprep.mubr.f32.mxu0 0.0
    %1292 = vmatmul.mubr.f32.gmra.mrb[0].mxu0 %v1214
    %v1293 = vpop.f32.mrb[0].mxu0
    %v1294 = vadd.f32 %v1209, %v1293
    %v1295 = vpop.f32.mrb[0].mxu0
    %1296 = vmatprep.mubr.f32.mxu0 0.0
    %1297 = vmatmul.mubr.f32.gmra.mrb[0].mxu0 %v1217
    %v1298 = vpop.f32.mrb[0].mxu0
    %v1299 = vadd.f32 %v1209, %v1298
    %v1300 = vpop.f32.mrb[0].mxu0
    %1301 = vmatprep.mubr.f32.mxu0 0.0
    %1302 = vmatmul.mubr.f32.gmra.mrb[0].mxu0 %v1220
    %v1303 = vpop.f32.mrb[0].mxu0
    %v1304 = vadd.f32 %v1209, %v1303
    %v1305 = vpop.f32.mrb[0].mxu0
    %1306 = vdwg.mxu0
    %v1307 = vmul.f32 %v1289, 1.702
    %v1308 = vmul.f32 %v1294, 1.702
    %v1309 = vmul.f32 %v1299, 1.702
    %v1310 = vmul.f32 %v1304, 1.702
    %v1311 = vxor.u32 %v1307, 2147483648
    %v1312 = vxor.u32 %v1308, 2147483648
    %v1313 = vxor.u32 %v1309, 2147483648
    %v1314 = vxor.u32 %v1310, 2147483648
    %v1315 = vmul.f32 %v1311, 1.442695
    %v1316 = vpow.pop %v1315
    %v1317 = vmul.f32 %v1312, 1.442695
    %v1318 = vpow.pop %v1317
    %v1319 = vmul.f32 %v1313, 1.442695
    %v1320 = vpow.pop %v1319
    %v1321 = vmul.f32 %v1314, 1.442695
    %v1322 = vpow.pop %v1321
    %v1323 = vadd.f32 %v1316, 1.0
    %v1324 = vadd.f32 %v1318, 1.0
    %v1325 = vadd.f32 %v1320, 1.0
    %v1326 = vadd.f32 %v1322, 1.0
    %v1327 = vrcp.pop %v1323
    %v1328 = vmul.f32 1.0, %v1327
    %v1329 = vrcp.pop %v1324
    %v1330 = vmul.f32 1.0, %v1329
    %v1331 = vrcp.pop %v1325
    %v1332 = vmul.f32 1.0, %v1331
    %v1333 = vrcp.pop %v1326
    %v1334 = vmul.f32 1.0, %v1333
    %v1335 = vmul.f32 %v1289, %v1328
    %v1336 = vmul.f32 %v1294, %v1330
    %v1337 = vmul.f32 %v1299, %v1332
    %v1338 = vmul.f32 %v1304, %v1334
    %1339 = vmatprep.subr.mxu0 0.0
    %1340 = vmatpush1.msra.mxu0 %v251
    %1341 = vmatprep.subr.mxu0 0.0
    %1342 = vmatpush1.msra.mxu0 %v252
    %1343 = vmatprep.subr.mxu0 0.0
    %1344 = vmatpush1.msra.mxu0 %v253
    %1345 = vmatprep.subr.mxu0 0.0
    %1346 = vmatpush1.msra.mxu0 %v254
    %1347 = vmatprep.subr.mxu0 0.0
    %1348 = vmatpush1.msra.mxu0 %v255
    %1349 = vmatprep.subr.mxu0 0.0
    %1350 = vmatpush1.msra.mxu0 %v256
    %1351 = vmatprep.subr.mxu0 0.0
    %1352 = vmatpush1.msra.mxu0 %v257
    %1353 = vmatprep.subr.mxu0 0.0
    %1354 = vmatpush1.msra.mxu0 %v258
    %1355 = vmatprep.subr.mxu0 0.0
    %1356 = vmatpush1.msra.mxu0 %v259
    %1357 = vmatprep.subr.mxu0 0.0
    %1358 = vmatpush1.msra.mxu0 %v260
    %1359 = vmatprep.subr.mxu0 0.0
    %1360 = vmatpush1.msra.mxu0 %v261
    %1361 = vmatprep.subr.mxu0 0.0
    %1362 = vmatpush1.msra.mxu0 %v262
    %1363 = vmatprep.subr.mxu0 0.0
    %1364 = vmatpush1.msra.mxu0 %v263
    %1365 = vmatprep.subr.mxu0 0.0
    %1366 = vmatpush1.msra.mxu0 %v264
    %1367 = vmatprep.subr.mxu0 0.0
    %1368 = vmatpush1.msra.mxu0 %v265
    %1369 = vmatprep.subr.mxu0 0.0
    %1370 = vmatpush1.msra.mxu0 %v266
    %1371 = vmatprep.subr.mxu0 0.0
    %1372 = vmatpush1.msra.mxu0 0.0
    %1373 = vmatprep.subr.mxu0 0.0
    %1374 = vmatpush1.msra.mxu0 0.0
    %1375 = vmatprep.subr.mxu0 0.0
    %1376 = vmatpush1.msra.mxu0 0.0
    %1377 = vmatprep.subr.mxu0 0.0
    %1378 = vmatpush1.msra.mxu0 0.0
    %1379 = vmatprep.subr.mxu0 0.0
    %1380 = vmatpush1.msra.mxu0 0.0
    %1381 = vmatprep.subr.mxu0 0.0
    %1382 = vmatpush1.msra.mxu0 0.0
    %1383 = vmatprep.subr.mxu0 0.0
    %1384 = vmatpush1.msra.mxu0 0.0
    %1385 = vmatprep.subr.mxu0 0.0
    %1386 = vmatpush1.msra.mxu0 0.0
    %1387 = vmatprep.subr.mxu0 0.0
    %1388 = vmatpush1.msra.mxu0 0.0
    %1389 = vmatprep.subr.mxu0 0.0
    %1390 = vmatpush1.msra.mxu0 0.0
    %1391 = vmatprep.subr.mxu0 0.0
    %1392 = vmatpush1.msra.mxu0 0.0
    %1393 = vmatprep.subr.mxu0 0.0
    %1394 = vmatpush1.msra.mxu0 0.0
    %1395 = vmatprep.subr.mxu0 0.0
    %1396 = vmatpush1.msra.mxu0 0.0
    %1397 = vmatprep.subr.mxu0 0.0
    %1398 = vmatpush1.msra.mxu0 0.0
    %1399 = vmatprep.subr.mxu0 0.0
    %1400 = vmatpush1.msra.mxu0 0.0
    %1401 = vmatprep.subr.mxu0 0.0
    %1402 = vmatpush1.msra.mxu0 0.0
    %1403 = vmatprep.mubr.f32.mxu0 0.0
    %1404 = vmatmul.mubr.f32.gmra.mrb[0].mxu0 %v1335
    %v1405 = vpop.f32.mrb[0].mxu0
    %v1406 = vadd.f32 0.0, %v1405
    %v1407 = vpop.f32.mrb[0].mxu0
    %1408 = vmatprep.mubr.f32.mxu0 0.0
    %1409 = vmatmul.mubr.f32.gmra.mrb[0].mxu0 %v1336
    %v1410 = vpop.f32.mrb[0].mxu0
    %v1411 = vadd.f32 0.0, %v1410
    %v1412 = vpop.f32.mrb[0].mxu0
    %1413 = vmatprep.mubr.f32.mxu0 0.0
    %1414 = vmatmul.mubr.f32.gmra.mrb[0].mxu0 %v1337
    %v1415 = vpop.f32.mrb[0].mxu0
    %v1416 = vadd.f32 0.0, %v1415
    %v1417 = vpop.f32.mrb[0].mxu0
    %1418 = vmatprep.mubr.f32.mxu0 0.0
    %1419 = vmatmul.mubr.f32.gmra.mrb[0].mxu0 %v1338
    %v1420 = vpop.f32.mrb[0].mxu0
    %v1421 = vadd.f32 0.0, %v1420
    %v1422 = vpop.f32.mrb[0].mxu0
    %1423 = vdwg.mxu0
    %v1424 = vadd.f32 %v1134, %v1406
    %v1425 = vadd.f32 %v1135, %v1411
    %v1426 = vadd.f32 %v1136, %v1416
    %v1427 = vadd.f32 %v1137, %v1421
    %v1428 = vlaneseq
    %v1429 = vshrl.u32 %v1428, 7
    %v1430 = vsub.s32 0, %v1429
    %v1431 = vrot.slane %v267, %v1430
    %v1432 = vadd.f32 %v1424, %v1431
    %v1433 = vadd.f32 %v1425, %v1431
    %v1434 = vadd.f32 %v1426, %v1431
    %v1435 = vadd.f32 %v1427, %v1431
    %v1436 = vld [vmem:[#allocation2 + $0x3c0] sm:$0x1]
    %v1437 = vld [vmem:[#allocation2 + $0x3c8] sm:$0x1]
    %v1438 = vld [vmem:[#allocation2 + $0x3d0] sm:$0xff]
    %v1439 = vld [vmem:[#allocation2 + $0x3d8] sm:$0xff]
    %v1440 = vld [vmem:[#allocation2 + $0x3e0] sm:$0xff]
    %v1441 = vld [vmem:[#allocation2 + $0x3e8] sm:$0xff]
    %v1442 = vld [vmem:[#allocation2 + $0x3f0] sm:$0x1]
    %v1443 = vld [vmem:[#allocation2 + $0x3f8] sm:$0xff]
    %v1444 = vld [vmem:[#allocation2 + $0x400] sm:$0xff]
    %v1445 = vld [vmem:[#allocation2 + $0x408] sm:$0xff]
    %v1446 = vld [vmem:[#allocation2 + $0x410] sm:$0xff]
    %v1447 = vld [vmem:[#allocation2 + $0x418] sm:$0x1]
    %v1448 = vld [vmem:[#allocation2 + $0x420] sm:$0x1]
    %v1449 = vld [vmem:[#allocation2 + $0x428] sm:$0x1]
    %v1450 = vld [vmem:[#allocation2 + $0x430] sm:$0xff]
    %v1451 = vld [vmem:[#allocation2 + $0x438] sm:$0xff]
    %v1452 = vld [vmem:[#allocation2 + $0x440] sm:$0xff]
    %v1453 = vld [vmem:[#allocation2 + $0x448] sm:$0xff]
    %v1454 = vld [vmem:[#allocation2 + $0x450] sm:$0x1]
    %v1455 = vld [vmem:[#allocation2 + $0x458] sm:$0xff]
    %v1456 = vld [vmem:[#allocation2 + $0x460] sm:$0xff]
    %v1457 = vld [vmem:[#allocation2 + $0x468] sm:$0xff]
    %v1458 = vld [vmem:[#allocation2 + $0x470] sm:$0xff]
    %v1459 = vld [vmem:[#allocation2 + $0x478] sm:$0xff]
    %v1460 = vld [vmem:[#allocation2 + $0x480] sm:$0xff]
    %v1461 = vld [vmem:[#allocation2 + $0x488] sm:$0xff]
    %v1462 = vld [vmem:[#allocation2 + $0x490] sm:$0xff]
    %v1463 = vld [vmem:[#allocation2 + $0x498] sm:$0xff]
    %v1464 = vld [vmem:[#allocation2 + $0x4a0] sm:$0xff]
    %v1465 = vld [vmem:[#allocation2 + $0x4a8] sm:$0xff]
    %v1466 = vld [vmem:[#allocation2 + $0x4b0] sm:$0xff]
    %v1467 = vld [vmem:[#allocation2 + $0x4b8] sm:$0xff]
    %v1468 = vld [vmem:[#allocation2 + $0x4c0] sm:$0xff]
    %v1469 = vld [vmem:[#allocation2 + $0x4c8] sm:$0xff]
    %v1470 = vld [vmem:[#allocation2 + $0x4d0] sm:$0xff]
    %v1471 = vld [vmem:[#allocation2 + $0x4d8] sm:$0x1]
    %v1472 = vsel %vm268, %v1432, 0.0
    %1473 = vadd.xlane.f32.xlu0 %v1472
    %v1474 = vpop.xlane.xlu0 %1473
    %v1475 = vsel %vm268, %v1433, 0.0
    %1476 = vadd.xlane.f32.xlu0 %v1475
    %v1477 = vpop.xlane.xlu0 %1476
    %v1478 = vsel %vm268, %v1434, 0.0
    %1479 = vadd.xlane.f32.xlu0 %v1478
    %v1480 = vpop.xlane.xlu0 %1479
    %v1481 = vsel %vm268, %v1435, 0.0
    %1482 = vadd.xlane.f32.xlu0 %v1481
    %v1483 = vpop.xlane.xlu0 %1482
    %v1484 = vmul.f32 %v1474, %v179
    %v1485 = vmul.f32 %v1477, %v179
    %v1486 = vmul.f32 %v1480, %v179
    %v1487 = vmul.f32 %v1483, %v179
    %v1488 = vsub.f32 %v1432, %v1484
    %v1489 = vsub.f32 %v1433, %v1485
    %v1490 = vsub.f32 %v1434, %v1486
    %v1491 = vsub.f32 %v1435, %v1487
    %v1492 = vmul.f32 %v1488, %v1488
    %v1493 = vmul.f32 %v1489, %v1489
    %v1494 = vmul.f32 %v1490, %v1490
    %v1495 = vmul.f32 %v1491, %v1491
    %v1496 = vsel %vm268, %v1492, 0.0
    %1497 = vadd.xlane.f32.xlu0 %v1496
    %v1498 = vpop.xlane.xlu0 %1497
    %v1499 = vsel %vm268, %v1493, 0.0
    %1500 = vadd.xlane.f32.xlu0 %v1499
    %v1501 = vpop.xlane.xlu0 %1500
    %v1502 = vsel %vm268, %v1494, 0.0
    %1503 = vadd.xlane.f32.xlu0 %v1502
    %v1504 = vpop.xlane.xlu0 %1503
    %v1505 = vsel %vm268, %v1495, 0.0
    %1506 = vadd.xlane.f32.xlu0 %v1505
    %v1507 = vpop.xlane.xlu0 %1506
    %v1508 = vmul.f32 %v1498, %v179
    %v1509 = vmul.f32 %v1501, %v179
    %v1510 = vmul.f32 %v1504, %v179
    %v1511 = vmul.f32 %v1507, %v179
    %v1512 = vadd.f32 %v1508, 1e-05
    %v1513 = vadd.f32 %v1509, 1e-05
    %v1514 = vadd.f32 %v1510, 1e-05
    %v1515 = vadd.f32 %v1511, 1e-05
    %v1516 = vrsqrt.pop %v1512
    %v1517 = vrsqrt.pop %v1513
    %v1518 = vrsqrt.pop %v1514
    %v1519 = vrsqrt.pop %v1515
    %v1520 = vmul.f32 %v1488, %v1516
    %v1521 = vmul.f32 %v1489, %v1517
    %v1522 = vmul.f32 %v1490, %v1518
    %v1523 = vmul.f32 %v1491, %v1519
    %v1524 = vlaneseq
    %v1525 = vshrl.u32 %v1524, 7
    %v1526 = vsub.s32 0, %v1525
    %v1527 = vrot.slane %v1436, %v1526
    %v1528 = vmul.f32 %v1520, %v1527
    %v1529 = vmul.f32 %v1521, %v1527
    %v1530 = vmul.f32 %v1522, %v1527
    %v1531 = vmul.f32 %v1523, %v1527
    %v1532 = vlaneseq
    %v1533 = vshrl.u32 %v1532, 7
    %v1534 = vsub.s32 0, %v1533
    %v1535 = vrot.slane %v1437, %v1534
    %v1536 = vadd.f32 %v1528, %v1535
    %v1537 = vadd.f32 %v1529, %v1535
    %v1538 = vadd.f32 %v1530, %v1535
    %v1539 = vadd.f32 %v1531, %v1535
    %v1540 = vlaneseq
    %v1541 = vshrl.u32 %v1540, 7
    %v1542 = vsub.s32 0, %v1541
    %v1543 = vrot.slane %v1442, %v1542
    %v1545 = vsel %vm268, %v1536, 0
    %v1548 = vsel %vm268, %v1537, 0
    %v1551 = vsel %vm268, %v1538, 0
    %v1554 = vsel %vm268, %v1539, 0
    %1556 = vmatprep.subr.mxu0 0.0
    %1557 = vmatpush1.msra.mxu0 %v1438
    %1558 = vmatprep.subr.mxu0 0.0
    %1559 = vmatpush1.msra.mxu0 %v1439
    %1560 = vmatprep.subr.mxu0 0.0
    %1561 = vmatpush1.msra.mxu0 %v1440
    %1562 = vmatprep.subr.mxu0 0.0
    %1563 = vmatpush1.msra.mxu0 %v1441
    %1564 = vmatprep.subr.mxu0 0.0
    %1565 = vmatpush1.msra.mxu0 0.0
    %1566 = vmatprep.subr.mxu0 0.0
    %1567 = vmatpush1.msra.mxu0 0.0
    %1568 = vmatprep.subr.mxu0 0.0
    %1569 = vmatpush1.msra.mxu0 0.0
    %1570 = vmatprep.subr.mxu0 0.0
    %1571 = vmatpush1.msra.mxu0 0.0
    %1572 = vmatprep.subr.mxu0 0.0
    %1573 = vmatpush1.msra.mxu0 0.0
    %1574 = vmatprep.subr.mxu0 0.0
    %1575 = vmatpush1.msra.mxu0 0.0
    %1576 = vmatprep.subr.mxu0 0.0
    %1577 = vmatpush1.msra.mxu0 0.0
    %1578 = vmatprep.subr.mxu0 0.0
    %1579 = vmatpush1.msra.mxu0 0.0
    %1580 = vmatprep.subr.mxu0 0.0
    %1581 = vmatpush1.msra.mxu0 0.0
    %1582 = vmatprep.subr.mxu0 0.0
    %1583 = vmatpush1.msra.mxu0 0.0
    %1584 = vmatprep.subr.mxu0 0.0
    %1585 = vmatpush1.msra.mxu0 0.0
    %1586 = vmatprep.subr.mxu0 0.0
    %1587 = vmatpush1.msra.mxu0 0.0
    %1588 = vmatprep.subr.mxu0 0.0
    %1589 = vmatpush1.msra.mxu0 0.0
    %1590 = vmatprep.subr.mxu0 0.0
    %1591 = vmatpush1.msra.mxu0 0.0
    %1592 = vmatprep.subr.mxu0 0.0
    %1593 = vmatpush1.msra.mxu0 0.0
    %1594 = vmatprep.subr.mxu0 0.0
    %1595 = vmatpush1.msra.mxu0 0.0
    %1596 = vmatprep.subr.mxu0 0.0
    %1597 = vmatpush1.msra.mxu0 0.0
    %1598 = vmatprep.subr.mxu0 0.0
    %1599 = vmatpush1.msra.mxu0 0.0
    %1600 = vmatprep.subr.mxu0 0.0
    %1601 = vmatpush1.msra.mxu0 0.0
    %1602 = vmatprep.subr.mxu0 0.0
    %1603 = vmatpush1.msra.mxu0 0.0
    %1604 = vmatprep.subr.mxu0 0.0
    %1605 = vmatpush1.msra.mxu0 0.0
    %1606 = vmatprep.subr.mxu0 0.0
    %1607 = vmatpush1.msra.mxu0 0.0
    %1608 = vmatprep.subr.mxu0 0.0
    %1609 = vmatpush1.msra.mxu0 0.0
    %1610 = vmatprep.subr.mxu0 0.0
    %1611 = vmatpush1.msra.mxu0 0.0
    %1612 = vmatprep.subr.mxu0 0.0
    %1613 = vmatpush1.msra.mxu0 0.0
    %1614 = vmatprep.subr.mxu0 0.0
    %1615 = vmatpush1.msra.mxu0 0.0
    %1616 = vmatprep.subr.mxu0 0.0
    %1617 = vmatpush1.msra.mxu0 0.0
    %1618 = vmatprep.subr.mxu0 0.0
    %1619 = vmatpush1.msra.mxu0 0.0
    %1620 = vmatprep.mubr.f32.mxu0 0.0
    %1621 = vmatmul.mubr.f32.gmra.mrb[0].mxu0 %v1545
    %v1622 = vpop.f32.mrb[0].mxu0
    %v1623 = vadd.f32 %v1543, %v1622
    %v1624 = vpop.f32.mrb[0].mxu0
    %1625 = vmatprep.mubr.f32.mxu0 0.0
    %1626 = vmatmul.mubr.f32.gmra.mrb[0].mxu0 %v1548
    %v1627 = vpop.f32.mrb[0].mxu0
    %v1628 = vadd.f32 %v1543, %v1627
    %v1629 = vpop.f32.mrb[0].mxu0
    %1630 = vmatprep.mubr.f32.mxu0 0.0
    %1631 = vmatmul.mubr.f32.gmra.mrb[0].mxu0 %v1551
    %v1632 = vpop.f32.mrb[0].mxu0
    %v1633 = vadd.f32 %v1543, %v1632
    %v1634 = vpop.f32.mrb[0].mxu0
    %1635 = vmatprep.mubr.f32.mxu0 0.0
    %1636 = vmatmul.mubr.f32.gmra.mrb[0].mxu0 %v1554
    %v1637 = vpop.f32.mrb[0].mxu0
    %v1638 = vadd.f32 %v1543, %v1637
    %v1639 = vpop.f32.mrb[0].mxu0
    %1640 = vdwg.mxu0
    %v1641 = vmul.f32 %v1623, %v455
    %v1642 = vmul.f32 %v1628, %v457
    %v1643 = vmul.f32 %v1633, %v459
    %v1644 = vmul.f32 %v1638, %v461
    %v1645 = vmul.f32 %v1623, %v463
    %v1646 = vmul.f32 %v1628, %v465
    %v1647 = vmul.f32 %v1633, %v467
    %v1648 = vmul.f32 %v1638, %v469
    %v1649 = vmul.f32 %v1623, %v471
    %v1650 = vmul.f32 %v1628, %v473
    %v1651 = vmul.f32 %v1633, %v475
    %v1652 = vmul.f32 %v1638, %v477
    %v1653 = vmul.f32 %v1623, %v479
    %v1654 = vmul.f32 %v1628, %v481
    %v1655 = vmul.f32 %v1633, %v483
    %v1656 = vmul.f32 %v1638, %v485
    %v1657 = vmul.f32 %v1623, %v519
    %v1658 = vmul.f32 %v1628, %v521
    %v1659 = vmul.f32 %v1633, %v523
    %v1660 = vmul.f32 %v1638, %v525
    %v1661 = vmul.f32 %v1623, %v527
    %v1662 = vmul.f32 %v1628, %v529
    %v1663 = vmul.f32 %v1633, %v531
    %v1664 = vmul.f32 %v1638, %v533
    %v1665 = vmul.f32 %v1623, %v535
    %v1666 = vmul.f32 %v1628, %v537
    %v1667 = vmul.f32 %v1633, %v539
    %v1668 = vmul.f32 %v1638, %v541
    %v1669 = vmul.f32 %v1623, %v543
    %v1670 = vmul.f32 %v1628, %v545
    %v1671 = vmul.f32 %v1633, %v547
    %v1672 = vmul.f32 %v1638, %v549
    %1689 = vrot.lane.b32.xlu0 %v1641, 96
    %v1690 = vpop.permute.xlu0 %1689
    %1691 = vrot.lane.b32.xlu0 %v1642, 96
    %v1692 = vpop.permute.xlu0 %1691
    %1693 = vrot.lane.b32.xlu0 %v1643, 96
    %v1694 = vpop.permute.xlu0 %1693
    %1695 = vrot.lane.b32.xlu0 %v1644, 96
    %v1696 = vpop.permute.xlu0 %1695
    %1697 = vrot.lane.b32.xlu0 %v1645, 96
    %v1698 = vpop.permute.xlu0 %1697
    %1699 = vrot.lane.b32.xlu0 %v1646, 96
    %v1700 = vpop.permute.xlu0 %1699
    %1701 = vrot.lane.b32.xlu0 %v1647, 96
    %v1702 = vpop.permute.xlu0 %1701
    %1703 = vrot.lane.b32.xlu0 %v1648, 96
    %v1704 = vpop.permute.xlu0 %1703
    %1705 = vrot.lane.b32.xlu0 %v1649, 96
    %v1706 = vpop.permute.xlu0 %1705
    %1707 = vrot.lane.b32.xlu0 %v1650, 96
    %v1708 = vpop.permute.xlu0 %1707
    %1709 = vrot.lane.b32.xlu0 %v1651, 96
    %v1710 = vpop.permute.xlu0 %1709
    %1711 = vrot.lane.b32.xlu0 %v1652, 96
    %v1712 = vpop.permute.xlu0 %1711
    %1713 = vrot.lane.b32.xlu0 %v1653, 96
    %v1714 = vpop.permute.xlu0 %1713
    %1715 = vrot.lane.b32.xlu0 %v1654, 96
    %v1716 = vpop.permute.xlu0 %1715
    %1717 = vrot.lane.b32.xlu0 %v1655, 96
    %v1718 = vpop.permute.xlu0 %1717
    %1719 = vrot.lane.b32.xlu0 %v1656, 96
    %v1720 = vpop.permute.xlu0 %1719
    %v1722 = vsel %vm268, %v1623, 0
    %v1725 = vsel %vm268, %v1628, 0
    %v1728 = vsel %vm268, %v1633, 0
    %v1731 = vsel %vm268, %v1638, 0
    %v1733 = vsel %vm268, %v1690, 0
    %v1735 = vsel %vm268, %v1692, 0
    %v1737 = vsel %vm268, %v1694, 0
    %v1739 = vsel %vm268, %v1696, 0
    %v1741 = vsel %vm268, %v1698, 0
    %v1743 = vsel %vm268, %v1700, 0
    %v1745 = vsel %vm268, %v1702, 0
    %v1747 = vsel %vm268, %v1704, 0
    %v1749 = vsel %vm268, %v1706, 0
    %v1751 = vsel %vm268, %v1708, 0
    %v1753 = vsel %vm268, %v1710, 0
    %v1755 = vsel %vm268, %v1712, 0
    %v1757 = vsel %vm268, %v1714, 0
    %v1759 = vsel %vm268, %v1716, 0
    %v1761 = vsel %vm268, %v1718, 0
    %v1763 = vsel %vm268, %v1720, 0
    %1765 = vmatprep.subr.mxu0 0.0
    %1766 = vmatpush1.xpose.msra.mxu0 %v1733
    %1767 = vmatprep.subr.mxu0 0.0
    %1768 = vmatpush1.xpose.msra.mxu0 %v1735
    %1769 = vmatprep.subr.mxu0 0.0
    %1770 = vmatpush1.xpose.msra.mxu0 %v1737
    %1771 = vmatprep.subr.mxu0 0.0
    %1772 = vmatpush1.xpose.msra.mxu0 %v1739
    %1773 = vmatprep.subr.mxu0 0.0
    %1774 = vmatpush1.xpose.msra.mxu0 %v1741
    %1775 = vmatprep.subr.mxu0 0.0
    %1776 = vmatpush1.xpose.msra.mxu0 %v1743
    %1777 = vmatprep.subr.mxu0 0.0
    %1778 = vmatpush1.xpose.msra.mxu0 %v1745
    %1779 = vmatprep.subr.mxu0 0.0
    %1780 = vmatpush1.xpose.msra.mxu0 %v1747
    %1781 = vmatprep.subr.mxu0 0.0
    %1782 = vmatpush1.xpose.msra.mxu0 %v1749
    %1783 = vmatprep.subr.mxu0 0.0
    %1784 = vmatpush1.xpose.msra.mxu0 %v1751
    %1785 = vmatprep.subr.mxu0 0.0
    %1786 = vmatpush1.xpose.msra.mxu0 %v1753
    %1787 = vmatprep.subr.mxu0 0.0
    %1788 = vmatpush1.xpose.msra.mxu0 %v1755
    %1789 = vmatprep.subr.mxu0 0.0
    %1790 = vmatpush1.xpose.msra.mxu0 %v1757
    %1791 = vmatprep.subr.mxu0 0.0
    %1792 = vmatpush1.xpose.msra.mxu0 %v1759
    %1793 = vmatprep.subr.mxu0 0.0
    %1794 = vmatpush1.xpose.msra.mxu0 %v1761
    %1795 = vmatprep.subr.mxu0 0.0
    %1796 = vmatpush1.xpose.msra.mxu0 %v1763
    %1797 = vmatprep.subr.mxu0 0.0
    %1798 = vmatpush1.xpose.msra.mxu0 0.0
    %1799 = vmatprep.subr.mxu0 0.0
    %1800 = vmatpush1.xpose.msra.mxu0 0.0
    %1801 = vmatprep.subr.mxu0 0.0
    %1802 = vmatpush1.xpose.msra.mxu0 0.0
    %1803 = vmatprep.subr.mxu0 0.0
    %1804 = vmatpush1.xpose.msra.mxu0 0.0
    %1805 = vmatprep.subr.mxu0 0.0
    %1806 = vmatpush1.xpose.msra.mxu0 0.0
    %1807 = vmatprep.subr.mxu0 0.0
    %1808 = vmatpush1.xpose.msra.mxu0 0.0
    %1809 = vmatprep.subr.mxu0 0.0
    %1810 = vmatpush1.xpose.msra.mxu0 0.0
    %1811 = vmatprep.subr.mxu0 0.0
    %1812 = vmatpush1.xpose.msra.mxu0 0.0
    %1813 = vmatprep.subr.mxu0 0.0
    %1814 = vmatpush1.xpose.msra.mxu0 0.0
    %1815 = vmatprep.subr.mxu0 0.0
    %1816 = vmatpush1.xpose.msra.mxu0 0.0
    %1817 = vmatprep.subr.mxu0 0.0
    %1818 = vmatpush1.xpose.msra.mxu0 0.0
    %1819 = vmatprep.subr.mxu0 0.0
    %1820 = vmatpush1.xpose.msra.mxu0 0.0
    %1821 = vmatprep.subr.mxu0 0.0
    %1822 = vmatpush1.xpose.msra.mxu0 0.0
    %1823 = vmatprep.subr.mxu0 0.0
    %1824 = vmatpush1.xpose.msra.mxu0 0.0
    %1825 = vmatprep.subr.mxu0 0.0
    %1826 = vmatpush1.xpose.msra.mxu0 0.0
    %1827 = vmatprep.subr.mxu0 0.0
    %1828 = vmatpush1.xpose.msra.mxu0 0.0
    %1829 = vmatprep.mubr.f32.mxu0 0.0
    %1830 = vmatmul.mubr.f32.gmra.mrb[0].mxu0 %v1722
    %v1831 = vpop.f32.mrb[0].mxu0
    %v1832 = vadd.f32 %v57, %v1831
    %v1833 = vpop.f32.mrb[0].mxu0
    %1834 = vmatprep.mubr.f32.mxu0 0.0
    %1835 = vmatmul.mubr.f32.gmra.mrb[0].mxu0 %v1725
    %v1836 = vpop.f32.mrb[0].mxu0
    %v1837 = vadd.f32 %v58, %v1836
    %v1838 = vpop.f32.mrb[0].mxu0
    %1839 = vmatprep.mubr.f32.mxu0 0.0
    %1840 = vmatmul.mubr.f32.gmra.mrb[0].mxu0 %v1728
    %v1841 = vpop.f32.mrb[0].mxu0
    %v1842 = vadd.f32 %v59, %v1841
    %v1843 = vpop.f32.mrb[0].mxu0
    %1844 = vmatprep.mubr.f32.mxu0 0.0
    %1845 = vmatmul.mubr.f32.gmra.mrb[0].mxu0 %v1731
    %v1846 = vpop.f32.mrb[0].mxu0
    %v1847 = vadd.f32 %v60, %v1846
    %v1848 = vpop.f32.mrb[0].mxu0
    %1849 = vdwg.mxu0
    %1850 = vmax.xlane.f32.xlu0 %v1832
    %v1851 = vpop.xlane.xlu0 %1850
    %1852 = vmax.xlane.f32.xlu0 %v1837
    %v1853 = vpop.xlane.xlu0 %1852
    %1854 = vmax.xlane.f32.xlu0 %v1842
    %v1855 = vpop.xlane.xlu0 %1854
    %1856 = vmax.xlane.f32.xlu0 %v1847
    %v1857 = vpop.xlane.xlu0 %1856
    %v1858 = vsub.f32 %v1832, %v1851
    %v1859 = vsub.f32 %v1837, %v1853
    %v1860 = vsub.f32 %v1842, %v1855
    %v1861 = vsub.f32 %v1847, %v1857
    %v1862 = vmul.f32 %v1858, 1.442695
    %v1863 = vpow.pop %v1862
    %v1864 = vmul.f32 %v1859, 1.442695
    %v1865 = vpow.pop %v1864
    %v1866 = vmul.f32 %v1860, 1.442695
    %v1867 = vpow.pop %v1866
    %v1868 = vmul.f32 %v1861, 1.442695
    %v1869 = vpow.pop %v1868
    %1870 = vmatprep.subr.mxu0 0.0
    %1871 = vmatpush1.msra.mxu0 %v77
    %1872 = vmatprep.subr.mxu0 0.0
    %1873 = vmatpush1.msra.mxu0 %v78
    %1874 = vmatprep.subr.mxu0 0.0
    %1875 = vmatpush1.msra.mxu0 %v79
    %1876 = vmatprep.subr.mxu0 0.0
    %1877 = vmatpush1.msra.mxu0 %v80
    %1878 = vmatprep.subr.mxu0 0.0
    %1879 = vmatpush1.msra.mxu0 %v81
    %1880 = vmatprep.subr.mxu0 0.0
    %1881 = vmatpush1.msra.mxu0 %v82
    %1882 = vmatprep.subr.mxu0 0.0
    %1883 = vmatpush1.msra.mxu0 %v83
    %1884 = vmatprep.subr.mxu0 0.0
    %1885 = vmatpush1.msra.mxu0 %v84
    %1886 = vmatprep.subr.mxu0 0.0
    %1887 = vmatpush1.msra.mxu0 %v85
    %1888 = vmatprep.subr.mxu0 0.0
    %1889 = vmatpush1.msra.mxu0 %v86
    %1890 = vmatprep.subr.mxu0 0.0
    %1891 = vmatpush1.msra.mxu0 %v87
    %1892 = vmatprep.subr.mxu0 0.0
    %1893 = vmatpush1.msra.mxu0 %v88
    %1894 = vmatprep.subr.mxu0 0.0
    %1895 = vmatpush1.msra.mxu0 %v89
    %1896 = vmatprep.subr.mxu0 0.0
    %1897 = vmatpush1.msra.mxu0 %v90
    %1898 = vmatprep.subr.mxu0 0.0
    %1899 = vmatpush1.msra.mxu0 %v91
    %1900 = vmatprep.subr.mxu0 0.0
    %1901 = vmatpush1.msra.mxu0 %v92
    %1902 = vmatprep.subr.mxu0 0.0
    %1903 = vmatpush1.msra.mxu0 0.0
    %1904 = vmatprep.subr.mxu0 0.0
    %1905 = vmatpush1.msra.mxu0 0.0
    %1906 = vmatprep.subr.mxu0 0.0
    %1907 = vmatpush1.msra.mxu0 0.0
    %1908 = vmatprep.subr.mxu0 0.0
    %1909 = vmatpush1.msra.mxu0 0.0
    %1910 = vmatprep.subr.mxu0 0.0
    %1911 = vmatpush1.msra.mxu0 0.0
    %1912 = vmatprep.subr.mxu0 0.0
    %1913 = vmatpush1.msra.mxu0 0.0
    %1914 = vmatprep.subr.mxu0 0.0
    %1915 = vmatpush1.msra.mxu0 0.0
    %1916 = vmatprep.subr.mxu0 0.0
    %1917 = vmatpush1.msra.mxu0 0.0
    %1918 = vmatprep.subr.mxu0 0.0
    %1919 = vmatpush1.msra.mxu0 0.0
    %1920 = vmatprep.subr.mxu0 0.0
    %1921 = vmatpush1.msra.mxu0 0.0
    %1922 = vmatprep.subr.mxu0 0.0
    %1923 = vmatpush1.msra.mxu0 0.0
    %1924 = vmatprep.subr.mxu0 0.0
    %1925 = vmatpush1.msra.mxu0 0.0
    %1926 = vmatprep.subr.mxu0 0.0
    %1927 = vmatpush1.msra.mxu0 0.0
    %1928 = vmatprep.subr.mxu0 0.0
    %1929 = vmatpush1.msra.mxu0 0.0
    %1930 = vmatprep.subr.mxu0 0.0
    %1931 = vmatpush1.msra.mxu0 0.0
    %1932 = vmatprep.subr.mxu0 0.0
    %1933 = vmatpush1.msra.mxu0 0.0
    %1934 = vmatprep.mubr.f32.mxu0 0.0
    %1935 = vmatmul.mubr.f32.gmra.mrb[0].mxu0 %v1863
    %v1936 = vpop.f32.mrb[0].mxu0
    %v1937 = vadd.f32 0.0, %v1936
    %v1938 = vpop.f32.mrb[0].mxu0
    %1939 = vmatprep.mubr.f32.mxu0 0.0
    %1940 = vmatmul.mubr.f32.gmra.mrb[0].mxu0 %v1865
    %v1941 = vpop.f32.mrb[0].mxu0
    %v1942 = vadd.f32 0.0, %v1941
    %v1943 = vpop.f32.mrb[0].mxu0
    %1944 = vmatprep.mubr.f32.mxu0 0.0
    %1945 = vmatmul.mubr.f32.gmra.mrb[0].mxu0 %v1867
    %v1946 = vpop.f32.mrb[0].mxu0
    %v1947 = vadd.f32 0.0, %v1946
    %v1948 = vpop.f32.mrb[0].mxu0
    %1949 = vmatprep.mubr.f32.mxu0 0.0
    %1950 = vmatmul.mubr.f32.gmra.mrb[0].mxu0 %v1869
    %v1951 = vpop.f32.mrb[0].mxu0
    %v1952 = vadd.f32 0.0, %v1951
    %v1953 = vpop.f32.mrb[0].mxu0
    %1954 = vdwg.mxu0
    %vm1955 = vcmp.gt.f32.partialorder %v1937, 0.0
    %vm1956 = vcmp.gt.f32.partialorder %v1942, 0.0
    %vm1957 = vcmp.gt.f32.partialorder %v1947, 0.0
    %vm1958 = vcmp.gt.f32.partialorder %v1952, 0.0
    %v1959 = vrcp.pop %v1937
    %v1960 = vmul.f32 %v1863, %v1959
    %v1961 = vrcp.pop %v1942
    %v1962 = vmul.f32 %v1865, %v1961
    %v1963 = vrcp.pop %v1947
    %v1964 = vmul.f32 %v1867, %v1963
    %v1965 = vrcp.pop %v1952
    %v1966 = vmul.f32 %v1869, %v1965
    %v1967 = vsel %vm1955, %v1960, 0.0
    %v1968 = vsel %vm1956, %v1962, 0.0
    %v1969 = vsel %vm1957, %v1964, 0.0
    %v1970 = vsel %vm1958, %v1966, 0.0
    %1987 = vrot.lane.b32.xlu0 %v1657, 64
    %v1988 = vpop.permute.xlu0 %1987
    %1989 = vrot.lane.b32.xlu0 %v1658, 64
    %v1990 = vpop.permute.xlu0 %1989
    %1991 = vrot.lane.b32.xlu0 %v1659, 64
    %v1992 = vpop.permute.xlu0 %1991
    %1993 = vrot.lane.b32.xlu0 %v1660, 64
    %v1994 = vpop.permute.xlu0 %1993
    %1995 = vrot.lane.b32.xlu0 %v1661, 64
    %v1996 = vpop.permute.xlu0 %1995
    %1997 = vrot.lane.b32.xlu0 %v1662, 64
    %v1998 = vpop.permute.xlu0 %1997
    %1999 = vrot.lane.b32.xlu0 %v1663, 64
    %v2000 = vpop.permute.xlu0 %1999
    %2001 = vrot.lane.b32.xlu0 %v1664, 64
    %v2002 = vpop.permute.xlu0 %2001
    %2003 = vrot.lane.b32.xlu0 %v1665, 64
    %v2004 = vpop.permute.xlu0 %2003
    %2005 = vrot.lane.b32.xlu0 %v1666, 64
    %v2006 = vpop.permute.xlu0 %2005
    %2007 = vrot.lane.b32.xlu0 %v1667, 64
    %v2008 = vpop.permute.xlu0 %2007
    %2009 = vrot.lane.b32.xlu0 %v1668, 64
    %v2010 = vpop.permute.xlu0 %2009
    %2011 = vrot.lane.b32.xlu0 %v1669, 64
    %v2012 = vpop.permute.xlu0 %2011
    %2013 = vrot.lane.b32.xlu0 %v1670, 64
    %v2014 = vpop.permute.xlu0 %2013
    %2015 = vrot.lane.b32.xlu0 %v1671, 64
    %v2016 = vpop.permute.xlu0 %2015
    %2017 = vrot.lane.b32.xlu0 %v1672, 64
    %v2018 = vpop.permute.xlu0 %2017
    %2035 = vmatprep.subr.mxu0 0.0
    %2036 = vmatpush1.msra.mxu0 %v1988
    %2037 = vmatprep.subr.mxu0 0.0
    %2038 = vmatpush1.msra.mxu0 %v1990
    %2039 = vmatprep.subr.mxu0 0.0
    %2040 = vmatpush1.msra.mxu0 %v1992
    %2041 = vmatprep.subr.mxu0 0.0
    %2042 = vmatpush1.msra.mxu0 %v1994
    %2043 = vmatprep.subr.mxu0 0.0
    %2044 = vmatpush1.msra.mxu0 %v1996
    %2045 = vmatprep.subr.mxu0 0.0
    %2046 = vmatpush1.msra.mxu0 %v1998
    %2047 = vmatprep.subr.mxu0 0.0
    %2048 = vmatpush1.msra.mxu0 %v2000
    %2049 = vmatprep.subr.mxu0 0.0
    %2050 = vmatpush1.msra.mxu0 %v2002
    %2051 = vmatprep.subr.mxu0 0.0
    %2052 = vmatpush1.msra.mxu0 %v2004
    %2053 = vmatprep.subr.mxu0 0.0
    %2054 = vmatpush1.msra.mxu0 %v2006
    %2055 = vmatprep.subr.mxu0 0.0
    %2056 = vmatpush1.msra.mxu0 %v2008
    %2057 = vmatprep.subr.mxu0 0.0
    %2058 = vmatpush1.msra.mxu0 %v2010
    %2059 = vmatprep.subr.mxu0 0.0
    %2060 = vmatpush1.msra.mxu0 %v2012
    %2061 = vmatprep.subr.mxu0 0.0
    %2062 = vmatpush1.msra.mxu0 %v2014
    %2063 = vmatprep.subr.mxu0 0.0
    %2064 = vmatpush1.msra.mxu0 %v2016
    %2065 = vmatprep.subr.mxu0 0.0
    %2066 = vmatpush1.msra.mxu0 %v2018
    %2067 = vmatprep.subr.mxu0 0.0
    %2068 = vmatpush1.msra.mxu0 0.0
    %2069 = vmatprep.subr.mxu0 0.0
    %2070 = vmatpush1.msra.mxu0 0.0
    %2071 = vmatprep.subr.mxu0 0.0
    %2072 = vmatpush1.msra.mxu0 0.0
    %2073 = vmatprep.subr.mxu0 0.0
    %2074 = vmatpush1.msra.mxu0 0.0
    %2075 = vmatprep.subr.mxu0 0.0
    %2076 = vmatpush1.msra.mxu0 0.0
    %2077 = vmatprep.subr.mxu0 0.0
    %2078 = vmatpush1.msra.mxu0 0.0
    %2079 = vmatprep.subr.mxu0 0.0
    %2080 = vmatpush1.msra.mxu0 0.0
    %2081 = vmatprep.subr.mxu0 0.0
    %2082 = vmatpush1.msra.mxu0 0.0
    %2083 = vmatprep.subr.mxu0 0.0
    %2084 = vmatpush1.msra.mxu0 0.0
    %2085 = vmatprep.subr.mxu0 0.0
    %2086 = vmatpush1.msra.mxu0 0.0
    %2087 = vmatprep.subr.mxu0 0.0
    %2088 = vmatpush1.msra.mxu0 0.0
    %2089 = vmatprep.subr.mxu0 0.0
    %2090 = vmatpush1.msra.mxu0 0.0
    %2091 = vmatprep.subr.mxu0 0.0
    %2092 = vmatpush1.msra.mxu0 0.0
    %2093 = vmatprep.subr.mxu0 0.0
    %2094 = vmatpush1.msra.mxu0 0.0
    %2095 = vmatprep.subr.mxu0 0.0
    %2096 = vmatpush1.msra.mxu0 0.0
    %2097 = vmatprep.subr.mxu0 0.0
    %2098 = vmatpush1.msra.mxu0 0.0
    %2099 = vmatprep.mubr.f32.mxu0 0.0
    %2100 = vmatmul.mubr.f32.gmra.mrb[0].mxu0 %v1967
    %v2101 = vpop.f32.mrb[0].mxu0
    %v2102 = vadd.f32 0.0, %v2101
    %v2103 = vpop.f32.mrb[0].mxu0
    %2104 = vmatprep.mubr.f32.mxu0 0.0
    %2105 = vmatmul.mubr.f32.gmra.mrb[0].mxu0 %v1968
    %v2106 = vpop.f32.mrb[0].mxu0
    %v2107 = vadd.f32 0.0, %v2106
    %v2108 = vpop.f32.mrb[0].mxu0
    %2109 = vmatprep.mubr.f32.mxu0 0.0
    %2110 = vmatmul.mubr.f32.gmra.mrb[0].mxu0 %v1969
    %v2111 = vpop.f32.mrb[0].mxu0
    %v2112 = vadd.f32 0.0, %v2111
    %v2113 = vpop.f32.mrb[0].mxu0
    %2114 = vmatprep.mubr.f32.mxu0 0.0
    %2115 = vmatmul.mubr.f32.gmra.mrb[0].mxu0 %v1970
    %v2116 = vpop.f32.mrb[0].mxu0
    %v2117 = vadd.f32 0.0, %v2116
    %v2118 = vpop.f32.mrb[0].mxu0
    %2119 = vdwg.mxu0
    %v2121 = vsel %vm268, %v2102, 0
    %v2124 = vsel %vm268, %v2107, 0
    %v2127 = vsel %vm268, %v2112, 0
    %v2130 = vsel %vm268, %v2117, 0
    %2132 = vmatprep.subr.mxu0 0.0
    %2133 = vmatpush1.msra.mxu0 %v1443
    %2134 = vmatprep.subr.mxu0 0.0
    %2135 = vmatpush1.msra.mxu0 %v1444
    %2136 = vmatprep.subr.mxu0 0.0
    %2137 = vmatpush1.msra.mxu0 %v1445
    %2138 = vmatprep.subr.mxu0 0.0
    %2139 = vmatpush1.msra.mxu0 %v1446
    %2140 = vmatprep.subr.mxu0 0.0
    %2141 = vmatpush1.msra.mxu0 0.0
    %2142 = vmatprep.subr.mxu0 0.0
    %2143 = vmatpush1.msra.mxu0 0.0
    %2144 = vmatprep.subr.mxu0 0.0
    %2145 = vmatpush1.msra.mxu0 0.0
    %2146 = vmatprep.subr.mxu0 0.0
    %2147 = vmatpush1.msra.mxu0 0.0
    %2148 = vmatprep.subr.mxu0 0.0
    %2149 = vmatpush1.msra.mxu0 0.0
    %2150 = vmatprep.subr.mxu0 0.0
    %2151 = vmatpush1.msra.mxu0 0.0
    %2152 = vmatprep.subr.mxu0 0.0
    %2153 = vmatpush1.msra.mxu0 0.0
    %2154 = vmatprep.subr.mxu0 0.0
    %2155 = vmatpush1.msra.mxu0 0.0
    %2156 = vmatprep.subr.mxu0 0.0
    %2157 = vmatpush1.msra.mxu0 0.0
    %2158 = vmatprep.subr.mxu0 0.0
    %2159 = vmatpush1.msra.mxu0 0.0
    %2160 = vmatprep.subr.mxu0 0.0
    %2161 = vmatpush1.msra.mxu0 0.0
    %2162 = vmatprep.subr.mxu0 0.0
    %2163 = vmatpush1.msra.mxu0 0.0
    %2164 = vmatprep.subr.mxu0 0.0
    %2165 = vmatpush1.msra.mxu0 0.0
    %2166 = vmatprep.subr.mxu0 0.0
    %2167 = vmatpush1.msra.mxu0 0.0
    %2168 = vmatprep.subr.mxu0 0.0
    %2169 = vmatpush1.msra.mxu0 0.0
    %2170 = vmatprep.subr.mxu0 0.0
    %2171 = vmatpush1.msra.mxu0 0.0
    %2172 = vmatprep.subr.mxu0 0.0
    %2173 = vmatpush1.msra.mxu0 0.0
    %2174 = vmatprep.subr.mxu0 0.0
    %2175 = vmatpush1.msra.mxu0 0.0
    %2176 = vmatprep.subr.mxu0 0.0
    %2177 = vmatpush1.msra.mxu0 0.0
    %2178 = vmatprep.subr.mxu0 0.0
    %2179 = vmatpush1.msra.mxu0 0.0
    %2180 = vmatprep.subr.mxu0 0.0
    %2181 = vmatpush1.msra.mxu0 0.0
    %2182 = vmatprep.subr.mxu0 0.0
    %2183 = vmatpush1.msra.mxu0 0.0
    %2184 = vmatprep.subr.mxu0 0.0
    %2185 = vmatpush1.msra.mxu0 0.0
    %2186 = vmatprep.subr.mxu0 0.0
    %2187 = vmatpush1.msra.mxu0 0.0
    %2188 = vmatprep.subr.mxu0 0.0
    %2189 = vmatpush1.msra.mxu0 0.0
    %2190 = vmatprep.subr.mxu0 0.0
    %2191 = vmatpush1.msra.mxu0 0.0
    %2192 = vmatprep.subr.mxu0 0.0
    %2193 = vmatpush1.msra.mxu0 0.0
    %2194 = vmatprep.subr.mxu0 0.0
    %2195 = vmatpush1.msra.mxu0 0.0
    %2196 = vmatprep.mubr.f32.mxu0 0.0
    %2197 = vmatmul.mubr.f32.gmra.mrb[0].mxu0 %v2121
    %v2198 = vpop.f32.mrb[0].mxu0
    %v2199 = vadd.f32 0.0, %v2198
    %v2200 = vpop.f32.mrb[0].mxu0
    %2201 = vmatprep.mubr.f32.mxu0 0.0
    %2202 = vmatmul.mubr.f32.gmra.mrb[0].mxu0 %v2124
    %v2203 = vpop.f32.mrb[0].mxu0
    %v2204 = vadd.f32 0.0, %v2203
    %v2205 = vpop.f32.mrb[0].mxu0
    %2206 = vmatprep.mubr.f32.mxu0 0.0
    %2207 = vmatmul.mubr.f32.gmra.mrb[0].mxu0 %v2127
    %v2208 = vpop.f32.mrb[0].mxu0
    %v2209 = vadd.f32 0.0, %v2208
    %v2210 = vpop.f32.mrb[0].mxu0
    %2211 = vmatprep.mubr.f32.mxu0 0.0
    %2212 = vmatmul.mubr.f32.gmra.mrb[0].mxu0 %v2130
    %v2213 = vpop.f32.mrb[0].mxu0
    %v2214 = vadd.f32 0.0, %v2213
    %v2215 = vpop.f32.mrb[0].mxu0
    %2216 = vdwg.mxu0
    %v2217 = vadd.f32 %v1432, %v2199
    %v2218 = vadd.f32 %v1433, %v2204
    %v2219 = vadd.f32 %v1434, %v2209
    %v2220 = vadd.f32 %v1435, %v2214
    %v2221 = vlaneseq
    %v2222 = vshrl.u32 %v2221, 7
    %v2223 = vsub.s32 0, %v2222
    %v2224 = vrot.slane %v1447, %v2223
    %v2225 = vadd.f32 %v2217, %v2224
    %v2226 = vadd.f32 %v2218, %v2224
    %v2227 = vadd.f32 %v2219, %v2224
    %v2228 = vadd.f32 %v2220, %v2224
    %v2229 = vld [vmem:[#allocation2 + $0x200] sm:$0x3]
    %v2230 = vld [vmem:[#allocation2 + $0x208] sm:$0xff]
    %v2231 = vld [vmem:[#allocation2 + $0x210] sm:$0xff]
    %v2232 = vld [vmem:[#allocation2 + $0x218] sm:$0xff]
    %v2233 = vld [vmem:[#allocation2 + $0x220] sm:$0xff]
    %v2234 = vld [vmem:[#allocation2 + $0x228] sm:$0xff]
    %v2235 = vld [vmem:[#allocation2 + $0x230] sm:$0xff]
    %v2236 = vld [vmem:[#allocation2 + $0x238] sm:$0xff]
    %v2237 = vld [vmem:[#allocation2 + $0x240] sm:$0xff]
    %v2238 = vld [vmem:[#allocation2 + $0x248] sm:$0xff]
    %v2239 = vld [vmem:[#allocation2 + $0x250] sm:$0xff]
    %v2240 = vld [vmem:[#allocation2 + $0x258] sm:$0xff]
    %v2241 = vld [vmem:[#allocation2 + $0x260] sm:$0xff]
    %v2242 = vld [vmem:[#allocation2 + $0x268] sm:$0xff]
    %v2243 = vld [vmem:[#allocation2 + $0x270] sm:$0xff]
    %v2244 = vld [vmem:[#allocation2 + $0x278] sm:$0xff]
    %v2245 = vld [vmem:[#allocation2 + $0x280] sm:$0xff]
    %v2246 = vld [vmem:[#allocation2 + $0x288] sm:$0x3]
    %v2247 = vld [vmem:[#allocation2 + $0x290] sm:$0x3]
    %v2248 = vld [vmem:[#allocation2 + $0x298] sm:$0x1]
    %v2250 = vsel %vm268, %v2229, 0
    %2252 = vmatprep.subr.mxu0 0.0
    %2253 = vmatpush1.msra.mxu0 %v1967
    %2254 = vmatprep.subr.mxu0 0.0
    %2255 = vmatpush1.msra.mxu0 %v1968
    %2256 = vmatprep.subr.mxu0 0.0
    %2257 = vmatpush1.msra.mxu0 %v1969
    %2258 = vmatprep.subr.mxu0 0.0
    %2259 = vmatpush1.msra.mxu0 %v1970
    %2260 = vmatprep.subr.mxu0 0.0
    %2261 = vmatpush1.msra.mxu0 0.0
    %2262 = vmatprep.subr.mxu0 0.0
    %2263 = vmatpush1.msra.mxu0 0.0
    %2264 = vmatprep.subr.mxu0 0.0
    %2265 = vmatpush1.msra.mxu0 0.0
    %2266 = vmatprep.subr.mxu0 0.0
    %2267 = vmatpush1.msra.mxu0 0.0
    %2268 = vmatprep.subr.mxu0 0.0
    %2269 = vmatpush1.msra.mxu0 0.0
    %2270 = vmatprep.subr.mxu0 0.0
    %2271 = vmatpush1.msra.mxu0 0.0
    %2272 = vmatprep.subr.mxu0 0.0
    %2273 = vmatpush1.msra.mxu0 0.0
    %2274 = vmatprep.subr.mxu0 0.0
    %2275 = vmatpush1.msra.mxu0 0.0
    %2276 = vmatprep.subr.mxu0 0.0
    %2277 = vmatpush1.msra.mxu0 0.0
    %2278 = vmatprep.subr.mxu0 0.0
    %2279 = vmatpush1.msra.mxu0 0.0
    %2280 = vmatprep.subr.mxu0 0.0
    %2281 = vmatpush1.msra.mxu0 0.0
    %2282 = vmatprep.subr.mxu0 0.0
    %2283 = vmatpush1.msra.mxu0 0.0
    %2284 = vmatprep.subr.mxu0 0.0
    %2285 = vmatpush1.msra.mxu0 0.0
    %2286 = vmatprep.subr.mxu0 0.0
    %2287 = vmatpush1.msra.mxu0 0.0
    %2288 = vmatprep.subr.mxu0 0.0
    %2289 = vmatpush1.msra.mxu0 0.0
    %2290 = vmatprep.subr.mxu0 0.0
    %2291 = vmatpush1.msra.mxu0 0.0
    %2292 = vmatprep.subr.mxu0 0.0
    %2293 = vmatpush1.msra.mxu0 0.0
    %2294 = vmatprep.subr.mxu0 0.0
    %2295 = vmatpush1.msra.mxu0 0.0
    %2296 = vmatprep.subr.mxu0 0.0
    %2297 = vmatpush1.msra.mxu0 0.0
    %2298 = vmatprep.subr.mxu0 0.0
    %2299 = vmatpush1.msra.mxu0 0.0
    %2300 = vmatprep.subr.mxu0 0.0
    %2301 = vmatpush1.msra.mxu0 0.0
    %2302 = vmatprep.subr.mxu0 0.0
    %2303 = vmatpush1.msra.mxu0 0.0
    %2304 = vmatprep.subr.mxu0 0.0
    %2305 = vmatpush1.msra.mxu0 0.0
    %2306 = vmatprep.subr.mxu0 0.0
    %2307 = vmatpush1.msra.mxu0 0.0
    %2308 = vmatprep.subr.mxu0 0.0
    %2309 = vmatpush1.msra.mxu0 0.0
    %2310 = vmatprep.subr.mxu0 0.0
    %2311 = vmatpush1.msra.mxu0 0.0
    %2312 = vmatprep.subr.mxu0 0.0
    %2313 = vmatpush1.msra.mxu0 0.0
    %2314 = vmatprep.subr.mxu0 0.0
    %2315 = vmatpush1.msra.mxu0 0.0
    %2316 = vmatprep.mubr.f32.mxu0 0.0
    %2317 = vmatmul.mubr.f32.gmra.mrb[0].mxu0 %v2250
    %v2318 = vpop.f32.mrb[0].mxu0
    %v2319 = vadd.f32 0.0, %v2318
    %v2320 = vpop.f32.mrb[0].mxu0
    %2321 = vdwg.mxu0
    %2322 = vmatprep.subr.mxu0 0.0
    %2323 = vmatpush1.msra.mxu0 %v2230
    %2324 = vmatprep.subr.mxu0 0.0
    %2325 = vmatpush1.msra.mxu0 %v2231
    %2326 = vmatprep.subr.mxu0 0.0
    %2327 = vmatpush1.msra.mxu0 %v2232
    %2328 = vmatprep.subr.mxu0 0.0
    %2329 = vmatpush1.msra.mxu0 %v2233
    %2330 = vmatprep.subr.mxu0 0.0
    %2331 = vmatpush1.msra.mxu0 %v2234
    %2332 = vmatprep.subr.mxu0 0.0
    %2333 = vmatpush1.msra.mxu0 %v2235
    %2334 = vmatprep.subr.mxu0 0.0
    %2335 = vmatpush1.msra.mxu0 %v2236
    %2336 = vmatprep.subr.mxu0 0.0
    %2337 = vmatpush1.msra.mxu0 %v2237
    %2338 = vmatprep.subr.mxu0 0.0
    %2339 = vmatpush1.msra.mxu0 %v2238
    %2340 = vmatprep.subr.mxu0 0.0
    %2341 = vmatpush1.msra.mxu0 %v2239
    %2342 = vmatprep.subr.mxu0 0.0
    %2343 = vmatpush1.msra.mxu0 %v2240
    %2344 = vmatprep.subr.mxu0 0.0
    %2345 = vmatpush1.msra.mxu0 %v2241
    %2346 = vmatprep.subr.mxu0 0.0
    %2347 = vmatpush1.msra.mxu0 %v2242
    %2348 = vmatprep.subr.mxu0 0.0
    %2349 = vmatpush1.msra.mxu0 %v2243
    %2350 = vmatprep.subr.mxu0 0.0
    %2351 = vmatpush1.msra.mxu0 %v2244
    %2352 = vmatprep.subr.mxu0 0.0
    %2353 = vmatpush1.msra.mxu0 %v2245
    %2354 = vmatprep.subr.mxu0 0.0
    %2355 = vmatpush1.msra.mxu0 0.0
    %2356 = vmatprep.subr.mxu0 0.0
    %2357 = vmatpush1.msra.mxu0 0.0
    %2358 = vmatprep.subr.mxu0 0.0
    %2359 = vmatpush1.msra.mxu0 0.0
    %2360 = vmatprep.subr.mxu0 0.0
    %2361 = vmatpush1.msra.mxu0 0.0
    %2362 = vmatprep.subr.mxu0 0.0
    %2363 = vmatpush1.msra.mxu0 0.0
    %2364 = vmatprep.subr.mxu0 0.0
    %2365 = vmatpush1.msra.mxu0 0.0
    %2366 = vmatprep.subr.mxu0 0.0
    %2367 = vmatpush1.msra.mxu0 0.0
    %2368 = vmatprep.subr.mxu0 0.0
    %2369 = vmatpush1.msra.mxu0 0.0
    %2370 = vmatprep.subr.mxu0 0.0
    %2371 = vmatpush1.msra.mxu0 0.0
    %2372 = vmatprep.subr.mxu0 0.0
    %2373 = vmatpush1.msra.mxu0 0.0
    %2374 = vmatprep.subr.mxu0 0.0
    %2375 = vmatpush1.msra.mxu0 0.0
    %2376 = vmatprep.subr.mxu0 0.0
    %2377 = vmatpush1.msra.mxu0 0.0
    %2378 = vmatprep.subr.mxu0 0.0
    %2379 = vmatpush1.msra.mxu0 0.0
    %2380 = vmatprep.subr.mxu0 0.0
    %2381 = vmatpush1.msra.mxu0 0.0
    %2382 = vmatprep.subr.mxu0 0.0
    %2383 = vmatpush1.msra.mxu0 0.0
    %2384 = vmatprep.subr.mxu0 0.0
    %2385 = vmatpush1.msra.mxu0 0.0
    %2386 = vmatprep.mubr.f32.mxu0 0.0
    %2387 = vmatmul.mubr.f32.gmra.mrb[0].mxu0 %v2319
    %v2388 = vpop.f32.mrb[0].mxu0
    %v2389 = vadd.f32 %v2246, %v2388
    %v2390 = vpop.f32.mrb[0].mxu0
    %2391 = vdwg.mxu0
    %vm2392 = vcmask 254976
    %v2393 = vsel %vm2392, %v2389, -inf
    %2394 = vmax.xlane.f32.xlu0 %v2393
    %v2395 = vpop.xlane.xlu0 %2394
    %vm2396 = vcmp.ge.f32.partialorder %v2389, %v2395
    %v2397 = vsel %vm2396, %v2247, 32.0
    %v2398 = vsel %vm2392, %v2397, inf
    %2399 = vmin.xlane.f32.xlu0 %v2398
    %v2400 = vpop.xlane.xlu0 %2399
    %vm2401 = vcmp.eq.f32.partialorder %v2247, %v2400
    %v2402 = vsel %vm2401, 1, 0
    %v2403 = vcvt.s32.f32 %v2402
    %v2404 = vadd.f32 %v2403, 0.0
    %vm2405 = vcmp.gt.f32.partialorder %v2403, 0.0
    %v2406 = vsel %vm2405, -inf, %v2389
    %v2407 = vsel %vm2392, %v2406, -inf
    %2408 = vmax.xlane.f32.xlu0 %v2407
    %v2409 = vpop.xlane.xlu0 %2408
    %vm2410 = vcmp.ge.f32.partialorder %v2406, %v2409
    %v2411 = vsel %vm2410, %v2247, 32.0
    %v2412 = vsel %vm2392, %v2411, inf
    %2413 = vmin.xlane.f32.xlu0 %v2412
    %v2414 = vpop.xlane.xlu0 %2413
    %vm2415 = vcmp.eq.f32.partialorder %v2247, %v2414
    %v2416 = vsel %vm2415, 1, 0
    %v2417 = vcvt.s32.f32 %v2416
    %v2418 = vadd.f32 %v2404, %v2417
    %v2419 = vsel %vm2392, %v2418, 0.0
    %v2420 = vrot.slane %v2419, 4
    %v2421 = vadd.f32 %v2419, %v2420
    %v2422 = vrot.slane %v2421, 2
    %v2423 = vadd.f32 %v2421, %v2422
    %v2424 = vrot.slane %v2423, 1
    %v2425 = vadd.f32 %v2423, %v2424
    %v2426 = vsub.f32 1.0, %v2425
    %v2427 = vmul.f32 %v2248, %v2426
    %v2428 = vmul.f32 %v2427, -1e+09
    %2430 = vrot.lane.b32.xlu0 %v2428, 32
    %v2431 = vpop.permute.xlu0 %2430
    %2433 = vrot.lane.b32.xlu0 %v2428, 64
    %v2434 = vpop.permute.xlu0 %2433
    %2436 = vrot.lane.b32.xlu0 %v2428, 96
    %v2437 = vpop.permute.xlu0 %2436
    %v2439 = vsel %vm268, %v2428, %v2431
    %v2440 = vsel %vm95, %v2439, %v2434
    %vm2441 = vcmask 785408
    %v2442 = vsel %vm2441, %v2440, %v2437
    %v2443 = vlaneseq
    %v2444 = vshrl.u32 %v2443, 7
    %v2445 = vsub.s32 0, %v2444
    %v2446 = vrot.slane %v2442, %v2445
    %v2447 = vadd.f32 %v57, %v2446
    %v2448 = vadd.f32 %v58, %v2446
    %v2449 = vadd.f32 %v59, %v2446
    %v2450 = vadd.f32 %v60, %v2446
    %v2451 = vsel %vm268, %v2225, 0.0
    %2452 = vadd.xlane.f32.xlu0 %v2451
    %v2453 = vpop.xlane.xlu0 %2452
    %v2454 = vsel %vm268, %v2226, 0.0
    %2455 = vadd.xlane.f32.xlu0 %v2454
    %v2456 = vpop.xlane.xlu0 %2455
    %v2457 = vsel %vm268, %v2227, 0.0
    %2458 = vadd.xlane.f32.xlu0 %v2457
    %v2459 = vpop.xlane.xlu0 %2458
    %v2460 = vsel %vm268, %v2228, 0.0
    %2461 = vadd.xlane.f32.xlu0 %v2460
    %v2462 = vpop.xlane.xlu0 %2461
    %v2463 = vmul.f32 %v2453, %v179
    %v2464 = vmul.f32 %v2456, %v179
    %v2465 = vmul.f32 %v2459, %v179
    %v2466 = vmul.f32 %v2462, %v179
    %v2467 = vsub.f32 %v2225, %v2463
    %v2468 = vsub.f32 %v2226, %v2464
    %v2469 = vsub.f32 %v2227, %v2465
    %v2470 = vsub.f32 %v2228, %v2466
    %v2471 = vmul.f32 %v2467, %v2467
    %v2472 = vmul.f32 %v2468, %v2468
    %v2473 = vmul.f32 %v2469, %v2469
    %v2474 = vmul.f32 %v2470, %v2470
    %v2475 = vsel %vm268, %v2471, 0.0
    %2476 = vadd.xlane.f32.xlu0 %v2475
    %v2477 = vpop.xlane.xlu0 %2476
    %v2478 = vsel %vm268, %v2472, 0.0
    %2479 = vadd.xlane.f32.xlu0 %v2478
    %v2480 = vpop.xlane.xlu0 %2479
    %v2481 = vsel %vm268, %v2473, 0.0
    %2482 = vadd.xlane.f32.xlu0 %v2481
    %v2483 = vpop.xlane.xlu0 %2482
    %v2484 = vsel %vm268, %v2474, 0.0
    %2485 = vadd.xlane.f32.xlu0 %v2484
    %v2486 = vpop.xlane.xlu0 %2485
    %v2487 = vmul.f32 %v2477, %v179
    %v2488 = vmul.f32 %v2480, %v179
    %v2489 = vmul.f32 %v2483, %v179
    %v2490 = vmul.f32 %v2486, %v179
    %v2491 = vadd.f32 %v2487, 1e-05
    %v2492 = vadd.f32 %v2488, 1e-05
    %v2493 = vadd.f32 %v2489, 1e-05
    %v2494 = vadd.f32 %v2490, 1e-05
    %v2495 = vrsqrt.pop %v2491
    %v2496 = vrsqrt.pop %v2492
    %v2497 = vrsqrt.pop %v2493
    %v2498 = vrsqrt.pop %v2494
    %v2499 = vmul.f32 %v2467, %v2495
    %v2500 = vmul.f32 %v2468, %v2496
    %v2501 = vmul.f32 %v2469, %v2497
    %v2502 = vmul.f32 %v2470, %v2498
    %v2503 = vlaneseq
    %v2504 = vshrl.u32 %v2503, 7
    %v2505 = vsub.s32 0, %v2504
    %v2506 = vrot.slane %v1448, %v2505
    %v2507 = vmul.f32 %v2499, %v2506
    %v2508 = vmul.f32 %v2500, %v2506
    %v2509 = vmul.f32 %v2501, %v2506
    %v2510 = vmul.f32 %v2502, %v2506
    %v2511 = vlaneseq
    %v2512 = vshrl.u32 %v2511, 7
    %v2513 = vsub.s32 0, %v2512
    %v2514 = vrot.slane %v1449, %v2513
    %v2515 = vadd.f32 %v2507, %v2514
    %v2516 = vadd.f32 %v2508, %v2514
    %v2517 = vadd.f32 %v2509, %v2514
    %v2518 = vadd.f32 %v2510, %v2514
    %v2519 = vlaneseq
    %v2520 = vshrl.u32 %v2519, 7
    %v2521 = vsub.s32 0, %v2520
    %v2522 = vrot.slane %v1454, %v2521
    %v2524 = vsel %vm268, %v2515, 0
    %v2527 = vsel %vm268, %v2516, 0
    %v2530 = vsel %vm268, %v2517, 0
    %v2533 = vsel %vm268, %v2518, 0
    %2535 = vmatprep.subr.mxu0 0.0
    %2536 = vmatpush1.msra.mxu0 %v1450
    %2537 = vmatprep.subr.mxu0 0.0
    %2538 = vmatpush1.msra.mxu0 %v1451
    %2539 = vmatprep.subr.mxu0 0.0
    %2540 = vmatpush1.msra.mxu0 %v1452
    %2541 = vmatprep.subr.mxu0 0.0
    %2542 = vmatpush1.msra.mxu0 %v1453
    %2543 = vmatprep.subr.mxu0 0.0
    %2544 = vmatpush1.msra.mxu0 0.0
    %2545 = vmatprep.subr.mxu0 0.0
    %2546 = vmatpush1.msra.mxu0 0.0
    %2547 = vmatprep.subr.mxu0 0.0
    %2548 = vmatpush1.msra.mxu0 0.0
    %2549 = vmatprep.subr.mxu0 0.0
    %2550 = vmatpush1.msra.mxu0 0.0
    %2551 = vmatprep.subr.mxu0 0.0
    %2552 = vmatpush1.msra.mxu0 0.0
    %2553 = vmatprep.subr.mxu0 0.0
    %2554 = vmatpush1.msra.mxu0 0.0
    %2555 = vmatprep.subr.mxu0 0.0
    %2556 = vmatpush1.msra.mxu0 0.0
    %2557 = vmatprep.subr.mxu0 0.0
    %2558 = vmatpush1.msra.mxu0 0.0
    %2559 = vmatprep.subr.mxu0 0.0
    %2560 = vmatpush1.msra.mxu0 0.0
    %2561 = vmatprep.subr.mxu0 0.0
    %2562 = vmatpush1.msra.mxu0 0.0
    %2563 = vmatprep.subr.mxu0 0.0
    %2564 = vmatpush1.msra.mxu0 0.0
    %2565 = vmatprep.subr.mxu0 0.0
    %2566 = vmatpush1.msra.mxu0 0.0
    %2567 = vmatprep.subr.mxu0 0.0
    %2568 = vmatpush1.msra.mxu0 0.0
    %2569 = vmatprep.subr.mxu0 0.0
    %2570 = vmatpush1.msra.mxu0 0.0
    %2571 = vmatprep.subr.mxu0 0.0
    %2572 = vmatpush1.msra.mxu0 0.0
    %2573 = vmatprep.subr.mxu0 0.0
    %2574 = vmatpush1.msra.mxu0 0.0
    %2575 = vmatprep.subr.mxu0 0.0
    %2576 = vmatpush1.msra.mxu0 0.0
    %2577 = vmatprep.subr.mxu0 0.0
    %2578 = vmatpush1.msra.mxu0 0.0
    %2579 = vmatprep.subr.mxu0 0.0
    %2580 = vmatpush1.msra.mxu0 0.0
    %2581 = vmatprep.subr.mxu0 0.0
    %2582 = vmatpush1.msra.mxu0 0.0
    %2583 = vmatprep.subr.mxu0 0.0
    %2584 = vmatpush1.msra.mxu0 0.0
    %2585 = vmatprep.subr.mxu0 0.0
    %2586 = vmatpush1.msra.mxu0 0.0
    %2587 = vmatprep.subr.mxu0 0.0
    %2588 = vmatpush1.msra.mxu0 0.0
    %2589 = vmatprep.subr.mxu0 0.0
    %2590 = vmatpush1.msra.mxu0 0.0
    %2591 = vmatprep.subr.mxu0 0.0
    %2592 = vmatpush1.msra.mxu0 0.0
    %2593 = vmatprep.subr.mxu0 0.0
    %2594 = vmatpush1.msra.mxu0 0.0
    %2595 = vmatprep.subr.mxu0 0.0
    %2596 = vmatpush1.msra.mxu0 0.0
    %2597 = vmatprep.subr.mxu0 0.0
    %2598 = vmatpush1.msra.mxu0 0.0
    %2599 = vmatprep.mubr.f32.mxu0 0.0
    %2600 = vmatmul.mubr.f32.gmra.mrb[0].mxu0 %v2524
    %v2601 = vpop.f32.mrb[0].mxu0
    %v2602 = vadd.f32 %v2522, %v2601
    %v2603 = vpop.f32.mrb[0].mxu0
    %2604 = vmatprep.mubr.f32.mxu0 0.0
    %2605 = vmatmul.mubr.f32.gmra.mrb[0].mxu0 %v2527
    %v2606 = vpop.f32.mrb[0].mxu0
    %v2607 = vadd.f32 %v2522, %v2606
    %v2608 = vpop.f32.mrb[0].mxu0
    %2609 = vmatprep.mubr.f32.mxu0 0.0
    %2610 = vmatmul.mubr.f32.gmra.mrb[0].mxu0 %v2530
    %v2611 = vpop.f32.mrb[0].mxu0
    %v2612 = vadd.f32 %v2522, %v2611
    %v2613 = vpop.f32.mrb[0].mxu0
    %2614 = vmatprep.mubr.f32.mxu0 0.0
    %2615 = vmatmul.mubr.f32.gmra.mrb[0].mxu0 %v2533
    %v2616 = vpop.f32.mrb[0].mxu0
    %v2617 = vadd.f32 %v2522, %v2616
    %v2618 = vpop.f32.mrb[0].mxu0
    %2619 = vdwg.mxu0
    %v2620 = vmul.f32 %v2602, 1.702
    %v2621 = vmul.f32 %v2607, 1.702
    %v2622 = vmul.f32 %v2612, 1.702
    %v2623 = vmul.f32 %v2617, 1.702
    %v2624 = vxor.u32 %v2620, 2147483648
    %v2625 = vxor.u32 %v2621, 2147483648
    %v2626 = vxor.u32 %v2622, 2147483648
    %v2627 = vxor.u32 %v2623, 2147483648
    %v2628 = vmul.f32 %v2624, 1.442695
    %v2629 = vpow.pop %v2628
    %v2630 = vmul.f32 %v2625, 1.442695
    %v2631 = vpow.pop %v2630
    %v2632 = vmul.f32 %v2626, 1.442695
    %v2633 = vpow.pop %v2632
    %v2634 = vmul.f32 %v2627, 1.442695
    %v2635 = vpow.pop %v2634
    %v2636 = vadd.f32 %v2629, 1.0
    %v2637 = vadd.f32 %v2631, 1.0
    %v2638 = vadd.f32 %v2633, 1.0
    %v2639 = vadd.f32 %v2635, 1.0
    %v2640 = vrcp.pop %v2636
    %v2641 = vmul.f32 1.0, %v2640
    %v2642 = vrcp.pop %v2637
    %v2643 = vmul.f32 1.0, %v2642
    %v2644 = vrcp.pop %v2638
    %v2645 = vmul.f32 1.0, %v2644
    %v2646 = vrcp.pop %v2639
    %v2647 = vmul.f32 1.0, %v2646
    %v2648 = vmul.f32 %v2602, %v2641
    %v2649 = vmul.f32 %v2607, %v2643
    %v2650 = vmul.f32 %v2612, %v2645
    %v2651 = vmul.f32 %v2617, %v2647
    %2652 = vmatprep.subr.mxu0 0.0
    %2653 = vmatpush1.msra.mxu0 %v1455
    %2654 = vmatprep.subr.mxu0 0.0
    %2655 = vmatpush1.msra.mxu0 %v1456
    %2656 = vmatprep.subr.mxu0 0.0
    %2657 = vmatpush1.msra.mxu0 %v1457
    %2658 = vmatprep.subr.mxu0 0.0
    %2659 = vmatpush1.msra.mxu0 %v1458
    %2660 = vmatprep.subr.mxu0 0.0
    %2661 = vmatpush1.msra.mxu0 %v1459
    %2662 = vmatprep.subr.mxu0 0.0
    %2663 = vmatpush1.msra.mxu0 %v1460
    %2664 = vmatprep.subr.mxu0 0.0
    %2665 = vmatpush1.msra.mxu0 %v1461
    %2666 = vmatprep.subr.mxu0 0.0
    %2667 = vmatpush1.msra.mxu0 %v1462
    %2668 = vmatprep.subr.mxu0 0.0
    %2669 = vmatpush1.msra.mxu0 %v1463
    %2670 = vmatprep.subr.mxu0 0.0
    %2671 = vmatpush1.msra.mxu0 %v1464
    %2672 = vmatprep.subr.mxu0 0.0
    %2673 = vmatpush1.msra.mxu0 %v1465
    %2674 = vmatprep.subr.mxu0 0.0
    %2675 = vmatpush1.msra.mxu0 %v1466
    %2676 = vmatprep.subr.mxu0 0.0
    %2677 = vmatpush1.msra.mxu0 %v1467
    %2678 = vmatprep.subr.mxu0 0.0
    %2679 = vmatpush1.msra.mxu0 %v1468
    %2680 = vmatprep.subr.mxu0 0.0
    %2681 = vmatpush1.msra.mxu0 %v1469
    %2682 = vmatprep.subr.mxu0 0.0
    %2683 = vmatpush1.msra.mxu0 %v1470
    %2684 = vmatprep.subr.mxu0 0.0
    %2685 = vmatpush1.msra.mxu0 0.0
    %2686 = vmatprep.subr.mxu0 0.0
    %2687 = vmatpush1.msra.mxu0 0.0
    %2688 = vmatprep.subr.mxu0 0.0
    %2689 = vmatpush1.msra.mxu0 0.0
    %2690 = vmatprep.subr.mxu0 0.0
    %2691 = vmatpush1.msra.mxu0 0.0
    %2692 = vmatprep.subr.mxu0 0.0
    %2693 = vmatpush1.msra.mxu0 0.0
    %2694 = vmatprep.subr.mxu0 0.0
    %2695 = vmatpush1.msra.mxu0 0.0
    %2696 = vmatprep.subr.mxu0 0.0
    %2697 = vmatpush1.msra.mxu0 0.0
    %2698 = vmatprep.subr.mxu0 0.0
    %2699 = vmatpush1.msra.mxu0 0.0
    %2700 = vmatprep.subr.mxu0 0.0
    %2701 = vmatpush1.msra.mxu0 0.0
    %2702 = vmatprep.subr.mxu0 0.0
    %2703 = vmatpush1.msra.mxu0 0.0
    %2704 = vmatprep.subr.mxu0 0.0
    %2705 = vmatpush1.msra.mxu0 0.0
    %2706 = vmatprep.subr.mxu0 0.0
    %2707 = vmatpush1.msra.mxu0 0.0
    %2708 = vmatprep.subr.mxu0 0.0
    %2709 = vmatpush1.msra.mxu0 0.0
    %2710 = vmatprep.subr.mxu0 0.0
    %2711 = vmatpush1.msra.mxu0 0.0
    %2712 = vmatprep.subr.mxu0 0.0
    %2713 = vmatpush1.msra.mxu0 0.0
    %2714 = vmatprep.subr.mxu0 0.0
    %2715 = vmatpush1.msra.mxu0 0.0
    %2716 = vmatprep.mubr.f32.mxu0 0.0
    %2717 = vmatmul.mubr.f32.gmra.mrb[0].mxu0 %v2648
    %v2718 = vpop.f32.mrb[0].mxu0
    %v2719 = vadd.f32 0.0, %v2718
    %v2720 = vpop.f32.mrb[0].mxu0
    %2721 = vmatprep.mubr.f32.mxu0 0.0
    %2722 = vmatmul.mubr.f32.gmra.mrb[0].mxu0 %v2649
    %v2723 = vpop.f32.mrb[0].mxu0
    %v2724 = vadd.f32 0.0, %v2723
    %v2725 = vpop.f32.mrb[0].mxu0
    %2726 = vmatprep.mubr.f32.mxu0 0.0
    %2727 = vmatmul.mubr.f32.gmra.mrb[0].mxu0 %v2650
    %v2728 = vpop.f32.mrb[0].mxu0
    %v2729 = vadd.f32 0.0, %v2728
    %v2730 = vpop.f32.mrb[0].mxu0
    %2731 = vmatprep.mubr.f32.mxu0 0.0
    %2732 = vmatmul.mubr.f32.gmra.mrb[0].mxu0 %v2651
    %v2733 = vpop.f32.mrb[0].mxu0
    %v2734 = vadd.f32 0.0, %v2733
    %v2735 = vpop.f32.mrb[0].mxu0
    %2736 = vdwg.mxu0
    %v2737 = vadd.f32 %v2225, %v2719
    %v2738 = vadd.f32 %v2226, %v2724
    %v2739 = vadd.f32 %v2227, %v2729
    %v2740 = vadd.f32 %v2228, %v2734
    %v2741 = vlaneseq
    %v2742 = vshrl.u32 %v2741, 7
    %v2743 = vsub.s32 0, %v2742
    %v2744 = vrot.slane %v1471, %v2743
    %v2745 = vadd.f32 %v2737, %v2744
    %v2746 = vadd.f32 %v2738, %v2744
    %v2747 = vadd.f32 %v2739, %v2744
    %v2748 = vadd.f32 %v2740, %v2744
    %v2749 = vld [vmem:[#allocation2 + $0x4e0] sm:$0x1]
    %v2750 = vld [vmem:[#allocation2 + $0x4e8] sm:$0x1]
    %v2751 = vld [vmem:[#allocation2 + $0x4f0] sm:$0xff]
    %v2752 = vld [vmem:[#allocation2 + $0x4f8] sm:$0xff]
    %v2753 = vld [vmem:[#allocation2 + $0x500] sm:$0xff]
    %v2754 = vld [vmem:[#allocation2 + $0x508] sm:$0xff]
    %v2755 = vld [vmem:[#allocation2 + $0x510] sm:$0x1]
    %v2756 = vld [vmem:[#allocation2 + $0x518] sm:$0xff]
    %v2757 = vld [vmem:[#allocation2 + $0x520] sm:$0xff]
    %v2758 = vld [vmem:[#allocation2 + $0x528] sm:$0xff]
    %v2759 = vld [vmem:[#allocation2 + $0x530] sm:$0xff]
    %v2760 = vld [vmem:[#allocation2 + $0x538] sm:$0x1]
    %v2761 = vld [vmem:[#allocation2 + $0x540] sm:$0x1]
    %v2762 = vld [vmem:[#allocation2 + $0x548] sm:$0x1]
    %v2763 = vld [vmem:[#allocation2 + $0x550] sm:$0xff]
    %v2764 = vld [vmem:[#allocation2 + $0x558] sm:$0xff]
    %v2765 = vld [vmem:[#allocation2 + $0x560] sm:$0xff]
    %v2766 = vld [vmem:[#allocation2 + $0x568] sm:$0xff]
    %v2767 = vld [vmem:[#allocation2 + $0x570] sm:$0x1]
    %v2768 = vld [vmem:[#allocation2 + $0x578] sm:$0xff]
    %v2769 = vld [vmem:[#allocation2 + $0x580] sm:$0xff]
    %v2770 = vld [vmem:[#allocation2 + $0x588] sm:$0xff]
    %v2771 = vld [vmem:[#allocation2 + $0x590] sm:$0xff]
    %v2772 = vld [vmem:[#allocation2 + $0x598] sm:$0xff]
    %v2773 = vld [vmem:[#allocation2 + $0x5a0] sm:$0xff]
    %v2774 = vld [vmem:[#allocation2 + $0x5a8] sm:$0xff]
    %v2775 = vld [vmem:[#allocation2 + $0x5b0] sm:$0xff]
    %v2776 = vld [vmem:[#allocation2 + $0x5b8] sm:$0xff]
    %v2777 = vld [vmem:[#allocation2 + $0x5c0] sm:$0xff]
    %v2778 = vld [vmem:[#allocation2 + $0x5c8] sm:$0xff]
    %v2779 = vld [vmem:[#allocation2 + $0x5d0] sm:$0xff]
    %v2780 = vld [vmem:[#allocation2 + $0x5d8] sm:$0xff]
    %v2781 = vld [vmem:[#allocation2 + $0x5e0] sm:$0xff]
    %v2782 = vld [vmem:[#allocation2 + $0x5e8] sm:$0xff]
    %v2783 = vld [vmem:[#allocation2 + $0x5f0] sm:$0xff]
    %v2784 = vld [vmem:[#allocation2 + $0x5f8] sm:$0x1]
    %v2785 = vsel %vm268, %v2745, 0.0
    %2786 = vadd.xlane.f32.xlu0 %v2785
    %v2787 = vpop.xlane.xlu0 %2786
    %v2788 = vsel %vm268, %v2746, 0.0
    %2789 = vadd.xlane.f32.xlu0 %v2788
    %v2790 = vpop.xlane.xlu0 %2789
    %v2791 = vsel %vm268, %v2747, 0.0
    %2792 = vadd.xlane.f32.xlu0 %v2791
    %v2793 = vpop.xlane.xlu0 %2792
    %v2794 = vsel %vm268, %v2748, 0.0
    %2795 = vadd.xlane.f32.xlu0 %v2794
    %v2796 = vpop.xlane.xlu0 %2795
    %v2797 = vmul.f32 %v2787, %v179
    %v2798 = vmul.f32 %v2790, %v179
    %v2799 = vmul.f32 %v2793, %v179
    %v2800 = vmul.f32 %v2796, %v179
    %v2801 = vsub.f32 %v2745, %v2797
    %v2802 = vsub.f32 %v2746, %v2798
    %v2803 = vsub.f32 %v2747, %v2799
    %v2804 = vsub.f32 %v2748, %v2800
    %v2805 = vmul.f32 %v2801, %v2801
    %v2806 = vmul.f32 %v2802, %v2802
    %v2807 = vmul.f32 %v2803, %v2803
    %v2808 = vmul.f32 %v2804, %v2804
    %v2809 = vsel %vm268, %v2805, 0.0
    %2810 = vadd.xlane.f32.xlu0 %v2809
    %v2811 = vpop.xlane.xlu0 %2810
    %v2812 = vsel %vm268, %v2806, 0.0
    %2813 = vadd.xlane.f32.xlu0 %v2812
    %v2814 = vpop.xlane.xlu0 %2813
    %v2815 = vsel %vm268, %v2807, 0.0
    %2816 = vadd.xlane.f32.xlu0 %v2815
    %v2817 = vpop.xlane.xlu0 %2816
    %v2818 = vsel %vm268, %v2808, 0.0
    %2819 = vadd.xlane.f32.xlu0 %v2818
    %v2820 = vpop.xlane.xlu0 %2819
    %v2821 = vmul.f32 %v2811, %v179
    %v2822 = vmul.f32 %v2814, %v179
    %v2823 = vmul.f32 %v2817, %v179
    %v2824 = vmul.f32 %v2820, %v179
    %v2825 = vadd.f32 %v2821, 1e-05
    %v2826 = vadd.f32 %v2822, 1e-05
    %v2827 = vadd.f32 %v2823, 1e-05
    %v2828 = vadd.f32 %v2824, 1e-05
    %v2829 = vrsqrt.pop %v2825
    %v2830 = vrsqrt.pop %v2826
    %v2831 = vrsqrt.pop %v2827
    %v2832 = vrsqrt.pop %v2828
    %v2833 = vmul.f32 %v2801, %v2829
    %v2834 = vmul.f32 %v2802, %v2830
    %v2835 = vmul.f32 %v2803, %v2831
    %v2836 = vmul.f32 %v2804, %v2832
    %v2837 = vlaneseq
    %v2838 = vshrl.u32 %v2837, 7
    %v2839 = vsub.s32 0, %v2838
    %v2840 = vrot.slane %v2749, %v2839
    %v2841 = vmul.f32 %v2833, %v2840
    %v2842 = vmul.f32 %v2834, %v2840
    %v2843 = vmul.f32 %v2835, %v2840
    %v2844 = vmul.f32 %v2836, %v2840
    %v2845 = vlaneseq
    %v2846 = vshrl.u32 %v2845, 7
    %v2847 = vsub.s32 0, %v2846
    %v2848 = vrot.slane %v2750, %v2847
    %v2849 = vadd.f32 %v2841, %v2848
    %v2850 = vadd.f32 %v2842, %v2848
    %v2851 = vadd.f32 %v2843, %v2848
    %v2852 = vadd.f32 %v2844, %v2848
    %v2853 = vlaneseq
    %v2854 = vshrl.u32 %v2853, 7
    %v2855 = vsub.s32 0, %v2854
    %v2856 = vrot.slane %v2755, %v2855
    %v2858 = vsel %vm268, %v2849, 0
    %v2861 = vsel %vm268, %v2850, 0
    %v2864 = vsel %vm268, %v2851, 0
    %v2867 = vsel %vm268, %v2852, 0
    %2869 = vmatprep.subr.mxu0 0.0
    %2870 = vmatpush1.msra.mxu0 %v2751
    %2871 = vmatprep.subr.mxu0 0.0
    %2872 = vmatpush1.msra.mxu0 %v2752
    %2873 = vmatprep.subr.mxu0 0.0
    %2874 = vmatpush1.msra.mxu0 %v2753
    %2875 = vmatprep.subr.mxu0 0.0
    %2876 = vmatpush1.msra.mxu0 %v2754
    %2877 = vmatprep.subr.mxu0 0.0
    %2878 = vmatpush1.msra.mxu0 0.0
    %2879 = vmatprep.subr.mxu0 0.0
    %2880 = vmatpush1.msra.mxu0 0.0
    %2881 = vmatprep.subr.mxu0 0.0
    %2882 = vmatpush1.msra.mxu0 0.0
    %2883 = vmatprep.subr.mxu0 0.0
    %2884 = vmatpush1.msra.mxu0 0.0
    %2885 = vmatprep.subr.mxu0 0.0
    %2886 = vmatpush1.msra.mxu0 0.0
    %2887 = vmatprep.subr.mxu0 0.0
    %2888 = vmatpush1.msra.mxu0 0.0
    %2889 = vmatprep.subr.mxu0 0.0
    %2890 = vmatpush1.msra.mxu0 0.0
    %2891 = vmatprep.subr.mxu0 0.0
    %2892 = vmatpush1.msra.mxu0 0.0
    %2893 = vmatprep.subr.mxu0 0.0
    %2894 = vmatpush1.msra.mxu0 0.0
    %2895 = vmatprep.subr.mxu0 0.0
    %2896 = vmatpush1.msra.mxu0 0.0
    %2897 = vmatprep.subr.mxu0 0.0
    %2898 = vmatpush1.msra.mxu0 0.0
    %2899 = vmatprep.subr.mxu0 0.0
    %2900 = vmatpush1.msra.mxu0 0.0
    %2901 = vmatprep.subr.mxu0 0.0
    %2902 = vmatpush1.msra.mxu0 0.0
    %2903 = vmatprep.subr.mxu0 0.0
    %2904 = vmatpush1.msra.mxu0 0.0
    %2905 = vmatprep.subr.mxu0 0.0
    %2906 = vmatpush1.msra.mxu0 0.0
    %2907 = vmatprep.subr.mxu0 0.0
    %2908 = vmatpush1.msra.mxu0 0.0
    %2909 = vmatprep.subr.mxu0 0.0
    %2910 = vmatpush1.msra.mxu0 0.0
    %2911 = vmatprep.subr.mxu0 0.0
    %2912 = vmatpush1.msra.mxu0 0.0
    %2913 = vmatprep.subr.mxu0 0.0
    %2914 = vmatpush1.msra.mxu0 0.0
    %2915 = vmatprep.subr.mxu0 0.0
    %2916 = vmatpush1.msra.mxu0 0.0
    %2917 = vmatprep.subr.mxu0 0.0
    %2918 = vmatpush1.msra.mxu0 0.0
    %2919 = vmatprep.subr.mxu0 0.0
    %2920 = vmatpush1.msra.mxu0 0.0
    %2921 = vmatprep.subr.mxu0 0.0
    %2922 = vmatpush1.msra.mxu0 0.0
    %2923 = vmatprep.subr.mxu0 0.0
    %2924 = vmatpush1.msra.mxu0 0.0
    %2925 = vmatprep.subr.mxu0 0.0
    %2926 = vmatpush1.msra.mxu0 0.0
    %2927 = vmatprep.subr.mxu0 0.0
    %2928 = vmatpush1.msra.mxu0 0.0
    %2929 = vmatprep.subr.mxu0 0.0
    %2930 = vmatpush1.msra.mxu0 0.0
    %2931 = vmatprep.subr.mxu0 0.0
    %2932 = vmatpush1.msra.mxu0 0.0
    %2933 = vmatprep.mubr.f32.mxu0 0.0
    %2934 = vmatmul.mubr.f32.gmra.mrb[0].mxu0 %v2858
    %v2935 = vpop.f32.mrb[0].mxu0
    %v2936 = vadd.f32 %v2856, %v2935
    %v2937 = vpop.f32.mrb[0].mxu0
    %2938 = vmatprep.mubr.f32.mxu0 0.0
    %2939 = vmatmul.mubr.f32.gmra.mrb[0].mxu0 %v2861
    %v2940 = vpop.f32.mrb[0].mxu0
    %v2941 = vadd.f32 %v2856, %v2940
    %v2942 = vpop.f32.mrb[0].mxu0
    %2943 = vmatprep.mubr.f32.mxu0 0.0
    %2944 = vmatmul.mubr.f32.gmra.mrb[0].mxu0 %v2864
    %v2945 = vpop.f32.mrb[0].mxu0
    %v2946 = vadd.f32 %v2856, %v2945
    %v2947 = vpop.f32.mrb[0].mxu0
    %2948 = vmatprep.mubr.f32.mxu0 0.0
    %2949 = vmatmul.mubr.f32.gmra.mrb[0].mxu0 %v2867
    %v2950 = vpop.f32.mrb[0].mxu0
    %v2951 = vadd.f32 %v2856, %v2950
    %v2952 = vpop.f32.mrb[0].mxu0
    %2953 = vdwg.mxu0
    %v2954 = vmul.f32 %v2936, %v455
    %v2955 = vmul.f32 %v2941, %v457
    %v2956 = vmul.f32 %v2946, %v459
    %v2957 = vmul.f32 %v2951, %v461
    %v2958 = vmul.f32 %v2936, %v463
    %v2959 = vmul.f32 %v2941, %v465
    %v2960 = vmul.f32 %v2946, %v467
    %v2961 = vmul.f32 %v2951, %v469
    %v2962 = vmul.f32 %v2936, %v471
    %v2963 = vmul.f32 %v2941, %v473
    %v2964 = vmul.f32 %v2946, %v475
    %v2965 = vmul.f32 %v2951, %v477
    %v2966 = vmul.f32 %v2936, %v479
    %v2967 = vmul.f32 %v2941, %v481
    %v2968 = vmul.f32 %v2946, %v483
    %v2969 = vmul.f32 %v2951, %v485
    %v2970 = vmul.f32 %v2936, %v519
    %v2971 = vmul.f32 %v2941, %v521
    %v2972 = vmul.f32 %v2946, %v523
    %v2973 = vmul.f32 %v2951, %v525
    %v2974 = vmul.f32 %v2936, %v527
    %v2975 = vmul.f32 %v2941, %v529
    %v2976 = vmul.f32 %v2946, %v531
    %v2977 = vmul.f32 %v2951, %v533
    %v2978 = vmul.f32 %v2936, %v535
    %v2979 = vmul.f32 %v2941, %v537
    %v2980 = vmul.f32 %v2946, %v539
    %v2981 = vmul.f32 %v2951, %v541
    %v2982 = vmul.f32 %v2936, %v543
    %v2983 = vmul.f32 %v2941, %v545
    %v2984 = vmul.f32 %v2946, %v547
    %v2985 = vmul.f32 %v2951, %v549
    %3002 = vrot.lane.b32.xlu0 %v2954, 96
    %v3003 = vpop.permute.xlu0 %3002
    %3004 = vrot.lane.b32.xlu0 %v2955, 96
    %v3005 = vpop.permute.xlu0 %3004
    %3006 = vrot.lane.b32.xlu0 %v2956, 96
    %v3007 = vpop.permute.xlu0 %3006
    %3008 = vrot.lane.b32.xlu0 %v2957, 96
    %v3009 = vpop.permute.xlu0 %3008
    %3010 = vrot.lane.b32.xlu0 %v2958, 96
    %v3011 = vpop.permute.xlu0 %3010
    %3012 = vrot.lane.b32.xlu0 %v2959, 96
    %v3013 = vpop.permute.xlu0 %3012
    %3014 = vrot.lane.b32.xlu0 %v2960, 96
    %v3015 = vpop.permute.xlu0 %3014
    %3016 = vrot.lane.b32.xlu0 %v2961, 96
    %v3017 = vpop.permute.xlu0 %3016
    %3018 = vrot.lane.b32.xlu0 %v2962, 96
    %v3019 = vpop.permute.xlu0 %3018
    %3020 = vrot.lane.b32.xlu0 %v2963, 96
    %v3021 = vpop.permute.xlu0 %3020
    %3022 = vrot.lane.b32.xlu0 %v2964, 96
    %v3023 = vpop.permute.xlu0 %3022
    %3024 = vrot.lane.b32.xlu0 %v2965, 96
    %v3025 = vpop.permute.xlu0 %3024
    %3026 = vrot.lane.b32.xlu0 %v2966, 96
    %v3027 = vpop.permute.xlu0 %3026
    %3028 = vrot.lane.b32.xlu0 %v2967, 96
    %v3029 = vpop.permute.xlu0 %3028
    %3030 = vrot.lane.b32.xlu0 %v2968, 96
    %v3031 = vpop.permute.xlu0 %3030
    %3032 = vrot.lane.b32.xlu0 %v2969, 96
    %v3033 = vpop.permute.xlu0 %3032
    %v3035 = vsel %vm268, %v2936, 0
    %v3038 = vsel %vm268, %v2941, 0
    %v3041 = vsel %vm268, %v2946, 0
    %v3044 = vsel %vm268, %v2951, 0
    %v3046 = vsel %vm268, %v3003, 0
    %v3048 = vsel %vm268, %v3005, 0
    %v3050 = vsel %vm268, %v3007, 0
    %v3052 = vsel %vm268, %v3009, 0
    %v3054 = vsel %vm268, %v3011, 0
    %v3056 = vsel %vm268, %v3013, 0
    %v3058 = vsel %vm268, %v3015, 0
    %v3060 = vsel %vm268, %v3017, 0
    %v3062 = vsel %vm268, %v3019, 0
    %v3064 = vsel %vm268, %v3021, 0
    %v3066 = vsel %vm268, %v3023, 0
    %v3068 = vsel %vm268, %v3025, 0
    %v3070 = vsel %vm268, %v3027, 0
    %v3072 = vsel %vm268, %v3029, 0
    %v3074 = vsel %vm268, %v3031, 0
    %v3076 = vsel %vm268, %v3033, 0
    %3078 = vmatprep.subr.mxu0 0.0
    %3079 = vmatpush1.xpose.msra.mxu0 %v3046
    %3080 = vmatprep.subr.mxu0 0.0
    %3081 = vmatpush1.xpose.msra.mxu0 %v3048
    %3082 = vmatprep.subr.mxu0 0.0
    %3083 = vmatpush1.xpose.msra.mxu0 %v3050
    %3084 = vmatprep.subr.mxu0 0.0
    %3085 = vmatpush1.xpose.msra.mxu0 %v3052
    %3086 = vmatprep.subr.mxu0 0.0
    %3087 = vmatpush1.xpose.msra.mxu0 %v3054
    %3088 = vmatprep.subr.mxu0 0.0
    %3089 = vmatpush1.xpose.msra.mxu0 %v3056
    %3090 = vmatprep.subr.mxu0 0.0
    %3091 = vmatpush1.xpose.msra.mxu0 %v3058
    %3092 = vmatprep.subr.mxu0 0.0
    %3093 = vmatpush1.xpose.msra.mxu0 %v3060
    %3094 = vmatprep.subr.mxu0 0.0
    %3095 = vmatpush1.xpose.msra.mxu0 %v3062
    %3096 = vmatprep.subr.mxu0 0.0
    %3097 = vmatpush1.xpose.msra.mxu0 %v3064
    %3098 = vmatprep.subr.mxu0 0.0
    %3099 = vmatpush1.xpose.msra.mxu0 %v3066
    %3100 = vmatprep.subr.mxu0 0.0
    %3101 = vmatpush1.xpose.msra.mxu0 %v3068
    %3102 = vmatprep.subr.mxu0 0.0
    %3103 = vmatpush1.xpose.msra.mxu0 %v3070
    %3104 = vmatprep.subr.mxu0 0.0
    %3105 = vmatpush1.xpose.msra.mxu0 %v3072
    %3106 = vmatprep.subr.mxu0 0.0
    %3107 = vmatpush1.xpose.msra.mxu0 %v3074
    %3108 = vmatprep.subr.mxu0 0.0
    %3109 = vmatpush1.xpose.msra.mxu0 %v3076
    %3110 = vmatprep.subr.mxu0 0.0
    %3111 = vmatpush1.xpose.msra.mxu0 0.0
    %3112 = vmatprep.subr.mxu0 0.0
    %3113 = vmatpush1.xpose.msra.mxu0 0.0
    %3114 = vmatprep.subr.mxu0 0.0
    %3115 = vmatpush1.xpose.msra.mxu0 0.0
    %3116 = vmatprep.subr.mxu0 0.0
    %3117 = vmatpush1.xpose.msra.mxu0 0.0
    %3118 = vmatprep.subr.mxu0 0.0
    %3119 = vmatpush1.xpose.msra.mxu0 0.0
    %3120 = vmatprep.subr.mxu0 0.0
    %3121 = vmatpush1.xpose.msra.mxu0 0.0
    %3122 = vmatprep.subr.mxu0 0.0
    %3123 = vmatpush1.xpose.msra.mxu0 0.0
    %3124 = vmatprep.subr.mxu0 0.0
    %3125 = vmatpush1.xpose.msra.mxu0 0.0
    %3126 = vmatprep.subr.mxu0 0.0
    %3127 = vmatpush1.xpose.msra.mxu0 0.0
    %3128 = vmatprep.subr.mxu0 0.0
    %3129 = vmatpush1.xpose.msra.mxu0 0.0
    %3130 = vmatprep.subr.mxu0 0.0
    %3131 = vmatpush1.xpose.msra.mxu0 0.0
    %3132 = vmatprep.subr.mxu0 0.0
    %3133 = vmatpush1.xpose.msra.mxu0 0.0
    %3134 = vmatprep.subr.mxu0 0.0
    %3135 = vmatpush1.xpose.msra.mxu0 0.0
    %3136 = vmatprep.subr.mxu0 0.0
    %3137 = vmatpush1.xpose.msra.mxu0 0.0
    %3138 = vmatprep.subr.mxu0 0.0
    %3139 = vmatpush1.xpose.msra.mxu0 0.0
    %3140 = vmatprep.subr.mxu0 0.0
    %3141 = vmatpush1.xpose.msra.mxu0 0.0
    %3142 = vmatprep.mubr.f32.mxu0 0.0
    %3143 = vmatmul.mubr.f32.gmra.mrb[0].mxu0 %v3035
    %v3144 = vpop.f32.mrb[0].mxu0
    %v3145 = vadd.f32 %v2447, %v3144
    %v3146 = vpop.f32.mrb[0].mxu0
    %3147 = vmatprep.mubr.f32.mxu0 0.0
    %3148 = vmatmul.mubr.f32.gmra.mrb[0].mxu0 %v3038
    %v3149 = vpop.f32.mrb[0].mxu0
    %v3150 = vadd.f32 %v2448, %v3149
    %v3151 = vpop.f32.mrb[0].mxu0
    %3152 = vmatprep.mubr.f32.mxu0 0.0
    %3153 = vmatmul.mubr.f32.gmra.mrb[0].mxu0 %v3041
    %v3154 = vpop.f32.mrb[0].mxu0
    %v3155 = vadd.f32 %v2449, %v3154
    %v3156 = vpop.f32.mrb[0].mxu0
    %3157 = vmatprep.mubr.f32.mxu0 0.0
    %3158 = vmatmul.mubr.f32.gmra.mrb[0].mxu0 %v3044
    %v3159 = vpop.f32.mrb[0].mxu0
    %v3160 = vadd.f32 %v2450, %v3159
    %v3161 = vpop.f32.mrb[0].mxu0
    %3162 = vdwg.mxu0
    %3163 = vmax.xlane.f32.xlu0 %v3145
    %v3164 = vpop.xlane.xlu0 %3163
    %3165 = vmax.xlane.f32.xlu0 %v3150
    %v3166 = vpop.xlane.xlu0 %3165
    %3167 = vmax.xlane.f32.xlu0 %v3155
    %v3168 = vpop.xlane.xlu0 %3167
    %3169 = vmax.xlane.f32.xlu0 %v3160
    %v3170 = vpop.xlane.xlu0 %3169
    %v3171 = vsub.f32 %v3145, %v3164
    %v3172 = vsub.f32 %v3150, %v3166
    %v3173 = vsub.f32 %v3155, %v3168
    %v3174 = vsub.f32 %v3160, %v3170
    %v3175 = vmul.f32 %v3171, 1.442695
    %v3176 = vpow.pop %v3175
    %v3177 = vmul.f32 %v3172, 1.442695
    %v3178 = vpow.pop %v3177
    %v3179 = vmul.f32 %v3173, 1.442695
    %v3180 = vpow.pop %v3179
    %v3181 = vmul.f32 %v3174, 1.442695
    %v3182 = vpow.pop %v3181
    %3183 = vmatprep.subr.mxu0 0.0
    %3184 = vmatpush1.msra.mxu0 %v77
    %3185 = vmatprep.subr.mxu0 0.0
    %3186 = vmatpush1.msra.mxu0 %v78
    %3187 = vmatprep.subr.mxu0 0.0
    %3188 = vmatpush1.msra.mxu0 %v79
    %3189 = vmatprep.subr.mxu0 0.0
    %3190 = vmatpush1.msra.mxu0 %v80
    %3191 = vmatprep.subr.mxu0 0.0
    %3192 = vmatpush1.msra.mxu0 %v81
    %3193 = vmatprep.subr.mxu0 0.0
    %3194 = vmatpush1.msra.mxu0 %v82
    %3195 = vmatprep.subr.mxu0 0.0
    %3196 = vmatpush1.msra.mxu0 %v83
    %3197 = vmatprep.subr.mxu0 0.0
    %3198 = vmatpush1.msra.mxu0 %v84
    %3199 = vmatprep.subr.mxu0 0.0
    %3200 = vmatpush1.msra.mxu0 %v85
    %3201 = vmatprep.subr.mxu0 0.0
    %3202 = vmatpush1.msra.mxu0 %v86
    %3203 = vmatprep.subr.mxu0 0.0
    %3204 = vmatpush1.msra.mxu0 %v87
    %3205 = vmatprep.subr.mxu0 0.0
    %3206 = vmatpush1.msra.mxu0 %v88
    %3207 = vmatprep.subr.mxu0 0.0
    %3208 = vmatpush1.msra.mxu0 %v89
    %3209 = vmatprep.subr.mxu0 0.0
    %3210 = vmatpush1.msra.mxu0 %v90
    %3211 = vmatprep.subr.mxu0 0.0
    %3212 = vmatpush1.msra.mxu0 %v91
    %3213 = vmatprep.subr.mxu0 0.0
    %3214 = vmatpush1.msra.mxu0 %v92
    %3215 = vmatprep.subr.mxu0 0.0
    %3216 = vmatpush1.msra.mxu0 0.0
    %3217 = vmatprep.subr.mxu0 0.0
    %3218 = vmatpush1.msra.mxu0 0.0
    %3219 = vmatprep.subr.mxu0 0.0
    %3220 = vmatpush1.msra.mxu0 0.0
    %3221 = vmatprep.subr.mxu0 0.0
    %3222 = vmatpush1.msra.mxu0 0.0
    %3223 = vmatprep.subr.mxu0 0.0
    %3224 = vmatpush1.msra.mxu0 0.0
    %3225 = vmatprep.subr.mxu0 0.0
    %3226 = vmatpush1.msra.mxu0 0.0
    %3227 = vmatprep.subr.mxu0 0.0
    %3228 = vmatpush1.msra.mxu0 0.0
    %3229 = vmatprep.subr.mxu0 0.0
    %3230 = vmatpush1.msra.mxu0 0.0
    %3231 = vmatprep.subr.mxu0 0.0
    %3232 = vmatpush1.msra.mxu0 0.0
    %3233 = vmatprep.subr.mxu0 0.0
    %3234 = vmatpush1.msra.mxu0 0.0
    %3235 = vmatprep.subr.mxu0 0.0
    %3236 = vmatpush1.msra.mxu0 0.0
    %3237 = vmatprep.subr.mxu0 0.0
    %3238 = vmatpush1.msra.mxu0 0.0
    %3239 = vmatprep.subr.mxu0 0.0
    %3240 = vmatpush1.msra.mxu0 0.0
    %3241 = vmatprep.subr.mxu0 0.0
    %3242 = vmatpush1.msra.mxu0 0.0
    %3243 = vmatprep.subr.mxu0 0.0
    %3244 = vmatpush1.msra.mxu0 0.0
    %3245 = vmatprep.subr.mxu0 0.0
    %3246 = vmatpush1.msra.mxu0 0.0
    %3247 = vmatprep.mubr.f32.mxu0 0.0
    %3248 = vmatmul.mubr.f32.gmra.mrb[0].mxu0 %v3176
    %v3249 = vpop.f32.mrb[0].mxu0
    %v3250 = vadd.f32 0.0, %v3249
    %v3251 = vpop.f32.mrb[0].mxu0
    %3252 = vmatprep.mubr.f32.mxu0 0.0
    %3253 = vmatmul.mubr.f32.gmra.mrb[0].mxu0 %v3178
    %v3254 = vpop.f32.mrb[0].mxu0
    %v3255 = vadd.f32 0.0, %v3254
    %v3256 = vpop.f32.mrb[0].mxu0
    %3257 = vmatprep.mubr.f32.mxu0 0.0
    %3258 = vmatmul.mubr.f32.gmra.mrb[0].mxu0 %v3180
    %v3259 = vpop.f32.mrb[0].mxu0
    %v3260 = vadd.f32 0.0, %v3259
    %v3261 = vpop.f32.mrb[0].mxu0
    %3262 = vmatprep.mubr.f32.mxu0 0.0
    %3263 = vmatmul.mubr.f32.gmra.mrb[0].mxu0 %v3182
    %v3264 = vpop.f32.mrb[0].mxu0
    %v3265 = vadd.f32 0.0, %v3264
    %v3266 = vpop.f32.mrb[0].mxu0
    %3267 = vdwg.mxu0
    %vm3268 = vcmp.gt.f32.partialorder %v3250, 0.0
    %vm3269 = vcmp.gt.f32.partialorder %v3255, 0.0
    %vm3270 = vcmp.gt.f32.partialorder %v3260, 0.0
    %vm3271 = vcmp.gt.f32.partialorder %v3265, 0.0
    %v3272 = vrcp.pop %v3250
    %v3273 = vmul.f32 %v3176, %v3272
    %v3274 = vrcp.pop %v3255
    %v3275 = vmul.f32 %v3178, %v3274
    %v3276 = vrcp.pop %v3260
    %v3277 = vmul.f32 %v3180, %v3276
    %v3278 = vrcp.pop %v3265
    %v3279 = vmul.f32 %v3182, %v3278
    %v3280 = vsel %vm3268, %v3273, 0.0
    %v3281 = vsel %vm3269, %v3275, 0.0
    %v3282 = vsel %vm3270, %v3277, 0.0
    %v3283 = vsel %vm3271, %v3279, 0.0
    %3300 = vrot.lane.b32.xlu0 %v2970, 64
    %v3301 = vpop.permute.xlu0 %3300
    %3302 = vrot.lane.b32.xlu0 %v2971, 64
    %v3303 = vpop.permute.xlu0 %3302
    %3304 = vrot.lane.b32.xlu0 %v2972, 64
    %v3305 = vpop.permute.xlu0 %3304
    %3306 = vrot.lane.b32.xlu0 %v2973, 64
    %v3307 = vpop.permute.xlu0 %3306
    %3308 = vrot.lane.b32.xlu0 %v2974, 64
    %v3309 = vpop.permute.xlu0 %3308
    %3310 = vrot.lane.b32.xlu0 %v2975, 64
    %v3311 = vpop.permute.xlu0 %3310
    %3312 = vrot.lane.b32.xlu0 %v2976, 64
    %v3313 = vpop.permute.xlu0 %3312
    %3314 = vrot.lane.b32.xlu0 %v2977, 64
    %v3315 = vpop.permute.xlu0 %3314
    %3316 = vrot.lane.b32.xlu0 %v2978, 64
    %v3317 = vpop.permute.xlu0 %3316
    %3318 = vrot.lane.b32.xlu0 %v2979, 64
    %v3319 = vpop.permute.xlu0 %3318
    %3320 = vrot.lane.b32.xlu0 %v2980, 64
    %v3321 = vpop.permute.xlu0 %3320
    %3322 = vrot.lane.b32.xlu0 %v2981, 64
    %v3323 = vpop.permute.xlu0 %3322
    %3324 = vrot.lane.b32.xlu0 %v2982, 64
    %v3325 = vpop.permute.xlu0 %3324
    %3326 = vrot.lane.b32.xlu0 %v2983, 64
    %v3327 = vpop.permute.xlu0 %3326
    %3328 = vrot.lane.b32.xlu0 %v2984, 64
    %v3329 = vpop.permute.xlu0 %3328
    %3330 = vrot.lane.b32.xlu0 %v2985, 64
    %v3331 = vpop.permute.xlu0 %3330
    %3348 = vmatprep.subr.mxu0 0.0
    %3349 = vmatpush1.msra.mxu0 %v3301
    %3350 = vmatprep.subr.mxu0 0.0
    %3351 = vmatpush1.msra.mxu0 %v3303
    %3352 = vmatprep.subr.mxu0 0.0
    %3353 = vmatpush1.msra.mxu0 %v3305
    %3354 = vmatprep.subr.mxu0 0.0
    %3355 = vmatpush1.msra.mxu0 %v3307
    %3356 = vmatprep.subr.mxu0 0.0
    %3357 = vmatpush1.msra.mxu0 %v3309
    %3358 = vmatprep.subr.mxu0 0.0
    %3359 = vmatpush1.msra.mxu0 %v3311
    %3360 = vmatprep.subr.mxu0 0.0
    %3361 = vmatpush1.msra.mxu0 %v3313
    %3362 = vmatprep.subr.mxu0 0.0
    %3363 = vmatpush1.msra.mxu0 %v3315
    %3364 = vmatprep.subr.mxu0 0.0
    %3365 = vmatpush1.msra.mxu0 %v3317
    %3366 = vmatprep.subr.mxu0 0.0
    %3367 = vmatpush1.msra.mxu0 %v3319
    %3368 = vmatprep.subr.mxu0 0.0
    %3369 = vmatpush1.msra.mxu0 %v3321
    %3370 = vmatprep.subr.mxu0 0.0
    %3371 = vmatpush1.msra.mxu0 %v3323
    %3372 = vmatprep.subr.mxu0 0.0
    %3373 = vmatpush1.msra.mxu0 %v3325
    %3374 = vmatprep.subr.mxu0 0.0
    %3375 = vmatpush1.msra.mxu0 %v3327
    %3376 = vmatprep.subr.mxu0 0.0
    %3377 = vmatpush1.msra.mxu0 %v3329
    %3378 = vmatprep.subr.mxu0 0.0
    %3379 = vmatpush1.msra.mxu0 %v3331
    %3380 = vmatprep.subr.mxu0 0.0
    %3381 = vmatpush1.msra.mxu0 0.0
    %3382 = vmatprep.subr.mxu0 0.0
    %3383 = vmatpush1.msra.mxu0 0.0
    %3384 = vmatprep.subr.mxu0 0.0
    %3385 = vmatpush1.msra.mxu0 0.0
    %3386 = vmatprep.subr.mxu0 0.0
    %3387 = vmatpush1.msra.mxu0 0.0
    %3388 = vmatprep.subr.mxu0 0.0
    %3389 = vmatpush1.msra.mxu0 0.0
    %3390 = vmatprep.subr.mxu0 0.0
    %3391 = vmatpush1.msra.mxu0 0.0
    %3392 = vmatprep.subr.mxu0 0.0
    %3393 = vmatpush1.msra.mxu0 0.0
    %3394 = vmatprep.subr.mxu0 0.0
    %3395 = vmatpush1.msra.mxu0 0.0
    %3396 = vmatprep.subr.mxu0 0.0
    %3397 = vmatpush1.msra.mxu0 0.0
    %3398 = vmatprep.subr.mxu0 0.0
    %3399 = vmatpush1.msra.mxu0 0.0
    %3400 = vmatprep.subr.mxu0 0.0
    %3401 = vmatpush1.msra.mxu0 0.0
    %3402 = vmatprep.subr.mxu0 0.0
    %3403 = vmatpush1.msra.mxu0 0.0
    %3404 = vmatprep.subr.mxu0 0.0
    %3405 = vmatpush1.msra.mxu0 0.0
    %3406 = vmatprep.subr.mxu0 0.0
    %3407 = vmatpush1.msra.mxu0 0.0
    %3408 = vmatprep.subr.mxu0 0.0
    %3409 = vmatpush1.msra.mxu0 0.0
    %3410 = vmatprep.subr.mxu0 0.0
    %3411 = vmatpush1.msra.mxu0 0.0
    %3412 = vmatprep.mubr.f32.mxu0 0.0
    %3413 = vmatmul.mubr.f32.gmra.mrb[0].mxu0 %v3280
    %v3414 = vpop.f32.mrb[0].mxu0
    %v3415 = vadd.f32 0.0, %v3414
    %v3416 = vpop.f32.mrb[0].mxu0
    %3417 = vmatprep.mubr.f32.mxu0 0.0
    %3418 = vmatmul.mubr.f32.gmra.mrb[0].mxu0 %v3281
    %v3419 = vpop.f32.mrb[0].mxu0
    %v3420 = vadd.f32 0.0, %v3419
    %v3421 = vpop.f32.mrb[0].mxu0
    %3422 = vmatprep.mubr.f32.mxu0 0.0
    %3423 = vmatmul.mubr.f32.gmra.mrb[0].mxu0 %v3282
    %v3424 = vpop.f32.mrb[0].mxu0
    %v3425 = vadd.f32 0.0, %v3424
    %v3426 = vpop.f32.mrb[0].mxu0
    %3427 = vmatprep.mubr.f32.mxu0 0.0
    %3428 = vmatmul.mubr.f32.gmra.mrb[0].mxu0 %v3283
    %v3429 = vpop.f32.mrb[0].mxu0
    %v3430 = vadd.f32 0.0, %v3429
    %v3431 = vpop.f32.mrb[0].mxu0
    %3432 = vdwg.mxu0
    %v3434 = vsel %vm268, %v3415, 0
    %v3437 = vsel %vm268, %v3420, 0
    %v3440 = vsel %vm268, %v3425, 0
    %v3443 = vsel %vm268, %v3430, 0
    %3445 = vmatprep.subr.mxu0 0.0
    %3446 = vmatpush1.msra.mxu0 %v2756
    %3447 = vmatprep.subr.mxu0 0.0
    %3448 = vmatpush1.msra.mxu0 %v2757
    %3449 = vmatprep.subr.mxu0 0.0
    %3450 = vmatpush1.msra.mxu0 %v2758
    %3451 = vmatprep.subr.mxu0 0.0
    %3452 = vmatpush1.msra.mxu0 %v2759
    %3453 = vmatprep.subr.mxu0 0.0
    %3454 = vmatpush1.msra.mxu0 0.0
    %3455 = vmatprep.subr.mxu0 0.0
    %3456 = vmatpush1.msra.mxu0 0.0
    %3457 = vmatprep.subr.mxu0 0.0
    %3458 = vmatpush1.msra.mxu0 0.0
    %3459 = vmatprep.subr.mxu0 0.0
    %3460 = vmatpush1.msra.mxu0 0.0
    %3461 = vmatprep.subr.mxu0 0.0
    %3462 = vmatpush1.msra.mxu0 0.0
    %3463 = vmatprep.subr.mxu0 0.0
    %3464 = vmatpush1.msra.mxu0 0.0
    %3465 = vmatprep.subr.mxu0 0.0
    %3466 = vmatpush1.msra.mxu0 0.0
    %3467 = vmatprep.subr.mxu0 0.0
    %3468 = vmatpush1.msra.mxu0 0.0
    %3469 = vmatprep.subr.mxu0 0.0
    %3470 = vmatpush1.msra.mxu0 0.0
    %3471 = vmatprep.subr.mxu0 0.0
    %3472 = vmatpush1.msra.mxu0 0.0
    %3473 = vmatprep.subr.mxu0 0.0
    %3474 = vmatpush1.msra.mxu0 0.0
    %3475 = vmatprep.subr.mxu0 0.0
    %3476 = vmatpush1.msra.mxu0 0.0
    %3477 = vmatprep.subr.mxu0 0.0
    %3478 = vmatpush1.msra.mxu0 0.0
    %3479 = vmatprep.subr.mxu0 0.0
    %3480 = vmatpush1.msra.mxu0 0.0
    %3481 = vmatprep.subr.mxu0 0.0
    %3482 = vmatpush1.msra.mxu0 0.0
    %3483 = vmatprep.subr.mxu0 0.0
    %3484 = vmatpush1.msra.mxu0 0.0
    %3485 = vmatprep.subr.mxu0 0.0
    %3486 = vmatpush1.msra.mxu0 0.0
    %3487 = vmatprep.subr.mxu0 0.0
    %3488 = vmatpush1.msra.mxu0 0.0
    %3489 = vmatprep.subr.mxu0 0.0
    %3490 = vmatpush1.msra.mxu0 0.0
    %3491 = vmatprep.subr.mxu0 0.0
    %3492 = vmatpush1.msra.mxu0 0.0
    %3493 = vmatprep.subr.mxu0 0.0
    %3494 = vmatpush1.msra.mxu0 0.0
    %3495 = vmatprep.subr.mxu0 0.0
    %3496 = vmatpush1.msra.mxu0 0.0
    %3497 = vmatprep.subr.mxu0 0.0
    %3498 = vmatpush1.msra.mxu0 0.0
    %3499 = vmatprep.subr.mxu0 0.0
    %3500 = vmatpush1.msra.mxu0 0.0
    %3501 = vmatprep.subr.mxu0 0.0
    %3502 = vmatpush1.msra.mxu0 0.0
    %3503 = vmatprep.subr.mxu0 0.0
    %3504 = vmatpush1.msra.mxu0 0.0
    %3505 = vmatprep.subr.mxu0 0.0
    %3506 = vmatpush1.msra.mxu0 0.0
    %3507 = vmatprep.subr.mxu0 0.0
    %3508 = vmatpush1.msra.mxu0 0.0
    %3509 = vmatprep.mubr.f32.mxu0 0.0
    %3510 = vmatmul.mubr.f32.gmra.mrb[0].mxu0 %v3434
    %v3511 = vpop.f32.mrb[0].mxu0
    %v3512 = vadd.f32 0.0, %v3511
    %v3513 = vpop.f32.mrb[0].mxu0
    %3514 = vmatprep.mubr.f32.mxu0 0.0
    %3515 = vmatmul.mubr.f32.gmra.mrb[0].mxu0 %v3437
    %v3516 = vpop.f32.mrb[0].mxu0
    %v3517 = vadd.f32 0.0, %v3516
    %v3518 = vpop.f32.mrb[0].mxu0
    %3519 = vmatprep.mubr.f32.mxu0 0.0
    %3520 = vmatmul.mubr.f32.gmra.mrb[0].mxu0 %v3440
    %v3521 = vpop.f32.mrb[0].mxu0
    %v3522 = vadd.f32 0.0, %v3521
    %v3523 = vpop.f32.mrb[0].mxu0
    %3524 = vmatprep.mubr.f32.mxu0 0.0
    %3525 = vmatmul.mubr.f32.gmra.mrb[0].mxu0 %v3443
    %v3526 = vpop.f32.mrb[0].mxu0
    %v3527 = vadd.f32 0.0, %v3526
    %v3528 = vpop.f32.mrb[0].mxu0
    %3529 = vdwg.mxu0
    %v3530 = vadd.f32 %v2745, %v3512
    %v3531 = vadd.f32 %v2746, %v3517
    %v3532 = vadd.f32 %v2747, %v3522
    %v3533 = vadd.f32 %v2748, %v3527
    %v3534 = vlaneseq
    %v3535 = vshrl.u32 %v3534, 7
    %v3536 = vsub.s32 0, %v3535
    %v3537 = vrot.slane %v2760, %v3536
    %v3538 = vadd.f32 %v3530, %v3537
    %v3539 = vadd.f32 %v3531, %v3537
    %v3540 = vadd.f32 %v3532, %v3537
    %v3541 = vadd.f32 %v3533, %v3537
    %v3542 = vsel %vm268, %v3538, 0.0
    %3543 = vadd.xlane.f32.xlu0 %v3542
    %v3544 = vpop.xlane.xlu0 %3543
    %v3545 = vsel %vm268, %v3539, 0.0
    %3546 = vadd.xlane.f32.xlu0 %v3545
    %v3547 = vpop.xlane.xlu0 %3546
    %v3548 = vsel %vm268, %v3540, 0.0
    %3549 = vadd.xlane.f32.xlu0 %v3548
    %v3550 = vpop.xlane.xlu0 %3549
    %v3551 = vsel %vm268, %v3541, 0.0
    %3552 = vadd.xlane.f32.xlu0 %v3551
    %v3553 = vpop.xlane.xlu0 %3552
    %v3554 = vmul.f32 %v3544, %v179
    %v3555 = vmul.f32 %v3547, %v179
    %v3556 = vmul.f32 %v3550, %v179
    %v3557 = vmul.f32 %v3553, %v179
    %v3558 = vsub.f32 %v3538, %v3554
    %v3559 = vsub.f32 %v3539, %v3555
    %v3560 = vsub.f32 %v3540, %v3556
    %v3561 = vsub.f32 %v3541, %v3557
    %v3562 = vmul.f32 %v3558, %v3558
    %v3563 = vmul.f32 %v3559, %v3559
    %v3564 = vmul.f32 %v3560, %v3560
    %v3565 = vmul.f32 %v3561, %v3561
    %v3566 = vsel %vm268, %v3562, 0.0
    %3567 = vadd.xlane.f32.xlu0 %v3566
    %v3568 = vpop.xlane.xlu0 %3567
    %v3569 = vsel %vm268, %v3563, 0.0
    %3570 = vadd.xlane.f32.xlu0 %v3569
    %v3571 = vpop.xlane.xlu0 %3570
    %v3572 = vsel %vm268, %v3564, 0.0
    %3573 = vadd.xlane.f32.xlu0 %v3572
    %v3574 = vpop.xlane.xlu0 %3573
    %v3575 = vsel %vm268, %v3565, 0.0
    %3576 = vadd.xlane.f32.xlu0 %v3575
    %v3577 = vpop.xlane.xlu0 %3576
    %v3578 = vmul.f32 %v3568, %v179
    %v3579 = vmul.f32 %v3571, %v179
    %v3580 = vmul.f32 %v3574, %v179
    %v3581 = vmul.f32 %v3577, %v179
    %v3582 = vadd.f32 %v3578, 1e-05
    %v3583 = vadd.f32 %v3579, 1e-05
    %v3584 = vadd.f32 %v3580, 1e-05
    %v3585 = vadd.f32 %v3581, 1e-05
    %v3586 = vrsqrt.pop %v3582
    %v3587 = vrsqrt.pop %v3583
    %v3588 = vrsqrt.pop %v3584
    %v3589 = vrsqrt.pop %v3585
    %v3590 = vmul.f32 %v3558, %v3586
    %v3591 = vmul.f32 %v3559, %v3587
    %v3592 = vmul.f32 %v3560, %v3588
    %v3593 = vmul.f32 %v3561, %v3589
    %v3594 = vlaneseq
    %v3595 = vshrl.u32 %v3594, 7
    %v3596 = vsub.s32 0, %v3595
    %v3597 = vrot.slane %v2761, %v3596
    %v3598 = vmul.f32 %v3590, %v3597
    %v3599 = vmul.f32 %v3591, %v3597
    %v3600 = vmul.f32 %v3592, %v3597
    %v3601 = vmul.f32 %v3593, %v3597
    %v3602 = vlaneseq
    %v3603 = vshrl.u32 %v3602, 7
    %v3604 = vsub.s32 0, %v3603
    %v3605 = vrot.slane %v2762, %v3604
    %v3606 = vadd.f32 %v3598, %v3605
    %v3607 = vadd.f32 %v3599, %v3605
    %v3608 = vadd.f32 %v3600, %v3605
    %v3609 = vadd.f32 %v3601, %v3605
    %v3610 = vlaneseq
    %v3611 = vshrl.u32 %v3610, 7
    %v3612 = vsub.s32 0, %v3611
    %v3613 = vrot.slane %v2767, %v3612
    %v3615 = vsel %vm268, %v3606, 0
    %v3618 = vsel %vm268, %v3607, 0
    %v3621 = vsel %vm268, %v3608, 0
    %v3624 = vsel %vm268, %v3609, 0
    %3626 = vmatprep.subr.mxu0 0.0
    %3627 = vmatpush1.msra.mxu0 %v2763
    %3628 = vmatprep.subr.mxu0 0.0
    %3629 = vmatpush1.msra.mxu0 %v2764
    %3630 = vmatprep.subr.mxu0 0.0
    %3631 = vmatpush1.msra.mxu0 %v2765
    %3632 = vmatprep.subr.mxu0 0.0
    %3633 = vmatpush1.msra.mxu0 %v2766
    %3634 = vmatprep.subr.mxu0 0.0
    %3635 = vmatpush1.msra.mxu0 0.0
    %3636 = vmatprep.subr.mxu0 0.0
    %3637 = vmatpush1.msra.mxu0 0.0
    %3638 = vmatprep.subr.mxu0 0.0
    %3639 = vmatpush1.msra.mxu0 0.0
    %3640 = vmatprep.subr.mxu0 0.0
    %3641 = vmatpush1.msra.mxu0 0.0
    %3642 = vmatprep.subr.mxu0 0.0
    %3643 = vmatpush1.msra.mxu0 0.0
    %3644 = vmatprep.subr.mxu0 0.0
    %3645 = vmatpush1.msra.mxu0 0.0
    %3646 = vmatprep.subr.mxu0 0.0
    %3647 = vmatpush1.msra.mxu0 0.0
    %3648 = vmatprep.subr.mxu0 0.0
    %3649 = vmatpush1.msra.mxu0 0.0
    %3650 = vmatprep.subr.mxu0 0.0
    %3651 = vmatpush1.msra.mxu0 0.0
    %3652 = vmatprep.subr.mxu0 0.0
    %3653 = vmatpush1.msra.mxu0 0.0
    %3654 = vmatprep.subr.mxu0 0.0
    %3655 = vmatpush1.msra.mxu0 0.0
    %3656 = vmatprep.subr.mxu0 0.0
    %3657 = vmatpush1.msra.mxu0 0.0
    %3658 = vmatprep.subr.mxu0 0.0
    %3659 = vmatpush1.msra.mxu0 0.0
    %3660 = vmatprep.subr.mxu0 0.0
    %3661 = vmatpush1.msra.mxu0 0.0
    %3662 = vmatprep.subr.mxu0 0.0
    %3663 = vmatpush1.msra.mxu0 0.0
    %3664 = vmatprep.subr.mxu0 0.0
    %3665 = vmatpush1.msra.mxu0 0.0
    %3666 = vmatprep.subr.mxu0 0.0
    %3667 = vmatpush1.msra.mxu0 0.0
    %3668 = vmatprep.subr.mxu0 0.0
    %3669 = vmatpush1.msra.mxu0 0.0
    %3670 = vmatprep.subr.mxu0 0.0
    %3671 = vmatpush1.msra.mxu0 0.0
    %3672 = vmatprep.subr.mxu0 0.0
    %3673 = vmatpush1.msra.mxu0 0.0
    %3674 = vmatprep.subr.mxu0 0.0
    %3675 = vmatpush1.msra.mxu0 0.0
    %3676 = vmatprep.subr.mxu0 0.0
    %3677 = vmatpush1.msra.mxu0 0.0
    %3678 = vmatprep.subr.mxu0 0.0
    %3679 = vmatpush1.msra.mxu0 0.0
    %3680 = vmatprep.subr.mxu0 0.0
    %3681 = vmatpush1.msra.mxu0 0.0
    %3682 = vmatprep.subr.mxu0 0.0
    %3683 = vmatpush1.msra.mxu0 0.0
    %3684 = vmatprep.subr.mxu0 0.0
    %3685 = vmatpush1.msra.mxu0 0.0
    %3686 = vmatprep.subr.mxu0 0.0
    %3687 = vmatpush1.msra.mxu0 0.0
    %3688 = vmatprep.subr.mxu0 0.0
    %3689 = vmatpush1.msra.mxu0 0.0
    %3690 = vmatprep.mubr.f32.mxu0 0.0
    %3691 = vmatmul.mubr.f32.gmra.mrb[0].mxu0 %v3615
    %v3692 = vpop.f32.mrb[0].mxu0
    %v3693 = vadd.f32 %v3613, %v3692
    %v3694 = vpop.f32.mrb[0].mxu0
    %3695 = vmatprep.mubr.f32.mxu0 0.0
    %3696 = vmatmul.mubr.f32.gmra.mrb[0].mxu0 %v3618
    %v3697 = vpop.f32.mrb[0].mxu0
    %v3698 = vadd.f32 %v3613, %v3697
    %v3699 = vpop.f32.mrb[0].mxu0
    %3700 = vmatprep.mubr.f32.mxu0 0.0
    %3701 = vmatmul.mubr.f32.gmra.mrb[0].mxu0 %v3621
    %v3702 = vpop.f32.mrb[0].mxu0
    %v3703 = vadd.f32 %v3613, %v3702
    %v3704 = vpop.f32.mrb[0].mxu0
    %3705 = vmatprep.mubr.f32.mxu0 0.0
    %3706 = vmatmul.mubr.f32.gmra.mrb[0].mxu0 %v3624
    %v3707 = vpop.f32.mrb[0].mxu0
    %v3708 = vadd.f32 %v3613, %v3707
    %v3709 = vpop.f32.mrb[0].mxu0
    %3710 = vdwg.mxu0
    %v3711 = vmul.f32 %v3693, 1.702
    %v3712 = vmul.f32 %v3698, 1.702
    %v3713 = vmul.f32 %v3703, 1.702
    %v3714 = vmul.f32 %v3708, 1.702
    %v3715 = vxor.u32 %v3711, 2147483648
    %v3716 = vxor.u32 %v3712, 2147483648
    %v3717 = vxor.u32 %v3713, 2147483648
    %v3718 = vxor.u32 %v3714, 2147483648
    %v3719 = vmul.f32 %v3715, 1.442695
    %v3720 = vpow.pop %v3719
    %v3721 = vmul.f32 %v3716, 1.442695
    %v3722 = vpow.pop %v3721
    %v3723 = vmul.f32 %v3717, 1.442695
    %v3724 = vpow.pop %v3723
    %v3725 = vmul.f32 %v3718, 1.442695
    %v3726 = vpow.pop %v3725
    %v3727 = vadd.f32 %v3720, 1.0
    %v3728 = vadd.f32 %v3722, 1.0
    %v3729 = vadd.f32 %v3724, 1.0
    %v3730 = vadd.f32 %v3726, 1.0
    %v3731 = vrcp.pop %v3727
    %v3732 = vmul.f32 1.0, %v3731
    %v3733 = vrcp.pop %v3728
    %v3734 = vmul.f32 1.0, %v3733
    %v3735 = vrcp.pop %v3729
    %v3736 = vmul.f32 1.0, %v3735
    %v3737 = vrcp.pop %v3730
    %v3738 = vmul.f32 1.0, %v3737
    %v3739 = vmul.f32 %v3693, %v3732
    %v3740 = vmul.f32 %v3698, %v3734
    %v3741 = vmul.f32 %v3703, %v3736
    %v3742 = vmul.f32 %v3708, %v3738
    %3743 = vmatprep.subr.mxu0 0.0
    %3744 = vmatpush1.msra.mxu0 %v2768
    %3745 = vmatprep.subr.mxu0 0.0
    %3746 = vmatpush1.msra.mxu0 %v2769
    %3747 = vmatprep.subr.mxu0 0.0
    %3748 = vmatpush1.msra.mxu0 %v2770
    %3749 = vmatprep.subr.mxu0 0.0
    %3750 = vmatpush1.msra.mxu0 %v2771
    %3751 = vmatprep.subr.mxu0 0.0
    %3752 = vmatpush1.msra.mxu0 %v2772
    %3753 = vmatprep.subr.mxu0 0.0
    %3754 = vmatpush1.msra.mxu0 %v2773
    %3755 = vmatprep.subr.mxu0 0.0
    %3756 = vmatpush1.msra.mxu0 %v2774
    %3757 = vmatprep.subr.mxu0 0.0
    %3758 = vmatpush1.msra.mxu0 %v2775
    %3759 = vmatprep.subr.mxu0 0.0
    %3760 = vmatpush1.msra.mxu0 %v2776
    %3761 = vmatprep.subr.mxu0 0.0
    %3762 = vmatpush1.msra.mxu0 %v2777
    %3763 = vmatprep.subr.mxu0 0.0
    %3764 = vmatpush1.msra.mxu0 %v2778
    %3765 = vmatprep.subr.mxu0 0.0
    %3766 = vmatpush1.msra.mxu0 %v2779
    %3767 = vmatprep.subr.mxu0 0.0
    %3768 = vmatpush1.msra.mxu0 %v2780
    %3769 = vmatprep.subr.mxu0 0.0
    %3770 = vmatpush1.msra.mxu0 %v2781
    %3771 = vmatprep.subr.mxu0 0.0
    %3772 = vmatpush1.msra.mxu0 %v2782
    %3773 = vmatprep.subr.mxu0 0.0
    %3774 = vmatpush1.msra.mxu0 %v2783
    %3775 = vmatprep.subr.mxu0 0.0
    %3776 = vmatpush1.msra.mxu0 0.0
    %3777 = vmatprep.subr.mxu0 0.0
    %3778 = vmatpush1.msra.mxu0 0.0
    %3779 = vmatprep.subr.mxu0 0.0
    %3780 = vmatpush1.msra.mxu0 0.0
    %3781 = vmatprep.subr.mxu0 0.0
    %3782 = vmatpush1.msra.mxu0 0.0
    %3783 = vmatprep.subr.mxu0 0.0
    %3784 = vmatpush1.msra.mxu0 0.0
    %3785 = vmatprep.subr.mxu0 0.0
    %3786 = vmatpush1.msra.mxu0 0.0
    %3787 = vmatprep.subr.mxu0 0.0
    %3788 = vmatpush1.msra.mxu0 0.0
    %3789 = vmatprep.subr.mxu0 0.0
    %3790 = vmatpush1.msra.mxu0 0.0
    %3791 = vmatprep.subr.mxu0 0.0
    %3792 = vmatpush1.msra.mxu0 0.0
    %3793 = vmatprep.subr.mxu0 0.0
    %3794 = vmatpush1.msra.mxu0 0.0
    %3795 = vmatprep.subr.mxu0 0.0
    %3796 = vmatpush1.msra.mxu0 0.0
    %3797 = vmatprep.subr.mxu0 0.0
    %3798 = vmatpush1.msra.mxu0 0.0
    %3799 = vmatprep.subr.mxu0 0.0
    %3800 = vmatpush1.msra.mxu0 0.0
    %3801 = vmatprep.subr.mxu0 0.0
    %3802 = vmatpush1.msra.mxu0 0.0
    %3803 = vmatprep.subr.mxu0 0.0
    %3804 = vmatpush1.msra.mxu0 0.0
    %3805 = vmatprep.subr.mxu0 0.0
    %3806 = vmatpush1.msra.mxu0 0.0
    %3807 = vmatprep.mubr.f32.mxu0 0.0
    %3808 = vmatmul.mubr.f32.gmra.mrb[0].mxu0 %v3739
    %v3809 = vpop.f32.mrb[0].mxu0
    %v3810 = vadd.f32 0.0, %v3809
    %v3811 = vpop.f32.mrb[0].mxu0
    %3812 = vmatprep.mubr.f32.mxu0 0.0
    %3813 = vmatmul.mubr.f32.gmra.mrb[0].mxu0 %v3740
    %v3814 = vpop.f32.mrb[0].mxu0
    %v3815 = vpop.f32.mrb[0].mxu0
    %3816 = vmatprep.mubr.f32.mxu0 0.0
    %3817 = vmatmul.mubr.f32.gmra.mrb[0].mxu0 %v3741
    %v3818 = vpop.f32.mrb[0].mxu0
    %v3819 = vadd.f32 0.0, %v3818
    %v3820 = vpop.f32.mrb[0].mxu0
    %3821 = vmatprep.mubr.f32.mxu0 0.0
    %3822 = vmatmul.mubr.f32.gmra.mrb[0].mxu0 %v3742
    %v3823 = vpop.f32.mrb[0].mxu0
    %v3824 = vpop.f32.mrb[0].mxu0
    %3825 = vdwg.mxu0
    %v3826 = vadd.f32 %v3538, %v3810
    %v3827 = vadd.f32 %v3540, %v3819
    %v3828 = vlaneseq
    %v3829 = vshrl.u32 %v3828, 7
    %v3830 = vsub.s32 0, %v3829
    %v3831 = vrot.slane %v2784, %v3830
    %v3832 = vadd.f32 %v3826, %v3831
    %v3833 = vadd.f32 %v3827, %v3831
    %v3835 = vrot.slane %v3833, 7
    %v3837 = vsel %vm172, %v3832, %v3835
    %3838 = vst.msk [vmem:[#allocation5] sm:$0x3] %vm2392, %v3837
    // Predicated region
    $region18: #{encoder_forward.1} parent=1 // pred_check
      _
    $region19: #{encoder_forward.1} parent=1 // pred_check_branch
      %3840 = sbr.rel (0) target = $region21
    $region20: #{encoder_forward.1} parent=1 // pred_region
      %s3842 = ssub.s32 32, 32
      %3843 = vsyncadd [#allocation4], %s3842
      %s3845 = sshll.u32 [#allocation5], 4
      %s3846 = int_to_ptr.vmem [resolvable:$true] %s3845
      %3848 = dma.vmem_to_hbm [thread:$0]  %s3846, 32, %s3, [#allocation4]
    $region21: #{encoder_forward.1} parent=1 // pred_fallthru
      _
    // Predicated region
    $region22: #{encoder_forward.1} parent=1 // pred_check
      _
    $region23: #{encoder_forward.1} parent=1 // pred_check_branch
      %3850 = sbr.rel (0) target = $region25
    $region24: #{encoder_forward.1} parent=1 // pred_region
      %3851 = dma.done [#allocation4], 32
    $region25: #{encoder_forward.1} parent=1 // pred_fallthru
      _
    %3852 = vsyncpa [#allocation3], 1
    %3853 = vsyncpa [#allocation4], 1

</llo_original>
